<compile_context>
chip_gen: v6e
topology: v6e:2x2x1
jax: 0.10.0
libtpu: 0.0.40
codegen_flags: <defaults>
</compile_context>

<pallas_src>
import functools
import math

import jax
import jax.numpy as jnp
from jax import lax
from jax.experimental import pallas as pl
from jax.experimental.pallas import tpu as pltpu

LN_EPS = 1e-5                          # nn.LayerNorm default eps
_VMEM_LIMIT = 48 * 1024 * 1024         # < v7x 64 MiB physical, > 32 MiB default scoped


def _round_up(a, b):
    return (a + b - 1) // b * b


def _pick_tm(m, tm_max=256):
    # Biggest row tile up to tm_max (multiple of 256 for v6e/v7x MXU), but never
    # larger than the 16-aligned row count so tiny test shapes aren't padded to 256.
    return min(tm_max, _round_up(m, 16))


def _pad_rows(x2d, mp):
    m = x2d.shape[0]
    if mp == m:
        return x2d
    return jnp.pad(x2d, ((0, mp - m), (0, 0)))


# ---------------------------------------------------------------------------
# Kernels
# ---------------------------------------------------------------------------
def _ln_linear_kernel(x_ref, g_ref, b_ref, w_ref, bias_ref, o_ref, *, eps):
    # LayerNorm(x) @ W + bias for one row tile. LN in f32 (VPU); matmul operands
    # in bf16 on the MXU with f32 accumulation.
    x = x_ref[...].astype(jnp.float32)
    mu = jnp.mean(x, axis=-1, keepdims=True)
    xc = x - mu
    var = jnp.mean(xc * xc, axis=-1, keepdims=True)
    xn = xc * lax.rsqrt(var + eps) * g_ref[...] + b_ref[...]
    y = jnp.dot(xn.astype(jnp.bfloat16), w_ref[...],
                preferred_element_type=jnp.float32) + bias_ref[...]
    o_ref[...] = y.astype(o_ref.dtype)


def _linear_residual_kernel(x_ref, w_ref, bias_ref, r_ref, o_ref):
    # residual + x @ W + bias (attention output projection fused with the
    # `video + fused` residual add). Dropout (drop2) is inference-mode identity.
    y = jnp.dot(x_ref[...].astype(jnp.bfloat16), w_ref[...],
                preferred_element_type=jnp.float32)
    o_ref[...] = (r_ref[...].astype(jnp.float32) + y + bias_ref[...]).astype(o_ref.dtype)


def _attn_kernel(q_ref, k_ref, v_ref, m_ref, o_ref, *, scale):
    # One (batch*head) slice of softmax(q k^T * scale + mask) v.
    # head_dim = num_hidden/8 is small, so the attention core stays in f32; the
    # heavy, bandwidth-bound matmuls of the block (projections / FFN) are the bf16 ones.
    q = q_ref[0].astype(jnp.float32)          # (Sq, hd)
    k = k_ref[0].astype(jnp.float32)          # (Sk, hd)
    v = v_ref[0].astype(jnp.float32)          # (Sk, hd)
    s = lax.dot_general(q, k, (((1,), (1,)), ((), ())),
                        preferred_element_type=jnp.float32)          # (Sq, Sk)
    s = s * scale + m_ref[0]
    s = s - jnp.max(s, axis=-1, keepdims=True)
    p = jnp.exp(s)
    p = p / jnp.sum(p, axis=-1, keepdims=True)
    # dropout (drop1) is inference-mode identity
    o = jnp.dot(p, v, preferred_element_type=jnp.float32)            # (Sq, hd)
    o_ref[0] = o.astype(o_ref.dtype)


def _ln_ffn_residual_kernel(x_ref, g_ref, b_ref, w1_ref, b1_ref, w2_ref, b2_ref,
                            o_ref, xn_ref, acc_ref, *, eps, approximate_gelu):
    # out = x + fc2(GELU(fc1(LayerNorm(x)))), tiled over rows (grid axis 0,
    # "parallel") and over the FFN hidden dim H (grid axis 1, "arbitrary"
    # reduction with a VMEM accumulator). Dropout = inference-mode identity.
    k = pl.program_id(1)

    @pl.when(k == 0)
    def _():
        x = x_ref[...].astype(jnp.float32)
        mu = jnp.mean(x, axis=-1, keepdims=True)
        xc = x - mu
        var = jnp.mean(xc * xc, axis=-1, keepdims=True)
        xn = xc * lax.rsqrt(var + eps) * g_ref[...] + b_ref[...]
        xn_ref[...] = xn.astype(xn_ref.dtype)       # bf16: feeds the MXU directly
        acc_ref[...] = jnp.zeros_like(acc_ref)

    # fc1 chunk -> GELU -> accumulate chunk @ W2 chunk. Chunking over H keeps the
    # (tm, H) intermediate out of VMEM-spill territory (matters most on v7x).
    h = jnp.dot(xn_ref[...], w1_ref[...],
                preferred_element_type=jnp.float32) + b1_ref[...]
    if approximate_gelu:
        # tanh-approx GELU: tanh runs on the EUP slot (free when MXU/VALU bound)
        c = math.sqrt(2.0 / math.pi)
        h = 0.5 * h * (1.0 + jnp.tanh(c * (h + 0.044715 * h * h * h)))
    else:
        # exact erf GELU (nn.GELU() default), computed in f32 on the VPU
        h = 0.5 * h * (1.0 + lax.erf(h * (1.0 / math.sqrt(2.0))))
    acc_ref[...] += jnp.dot(h.astype(jnp.bfloat16), w2_ref[...],
                            preferred_element_type=jnp.float32)

    @pl.when(k == pl.num_programs(1) - 1)
    def _():
        y = x_ref[...].astype(jnp.float32) + acc_ref[...] + b2_ref[...]
        o_ref[...] = y.astype(o_ref.dtype)


# ---------------------------------------------------------------------------
# pallas_call wrappers
# ---------------------------------------------------------------------------
def ln_linear(x, gamma, beta, w, bias, *, eps=LN_EPS, tm_max=256):
    """y = LayerNorm(x) @ W + bias.  x: (B, S, D), W: (D, Dout)."""
    B, S, D = x.shape
    Dout = w.shape[1]
    M = B * S
    tm = _pick_tm(M, tm_max)
    Mp = _round_up(M, tm)
    x2d = _pad_rows(x.reshape(M, D), Mp)

    out = pl.pallas_call(
        functools.partial(_ln_linear_kernel, eps=eps),
        out_shape=jax.ShapeDtypeStruct((Mp, Dout), jnp.float32),
        grid_spec=pltpu.PrefetchScalarGridSpec(
            num_scalar_prefetch=0,
            grid=(Mp // tm,),
            in_specs=[
                pl.BlockSpec((tm, D), lambda i: (i, 0)),      # x row tile
                pl.BlockSpec((1, D), lambda i: (0, 0)),       # LN gamma
                pl.BlockSpec((1, D), lambda i: (0, 0)),       # LN beta
                pl.BlockSpec((D, Dout), lambda i: (0, 0)),    # W (resident, bf16)
                pl.BlockSpec((1, Dout), lambda i: (0, 0)),    # bias
            ],
            out_specs=pl.BlockSpec((tm, Dout), lambda i: (i, 0)),
        ),
        compiler_params=pltpu.CompilerParams(
            dimension_semantics=("parallel",),
            vmem_limit_bytes=_VMEM_LIMIT,
        ),
    )(x2d, gamma.reshape(1, D), beta.reshape(1, D),
      w.astype(jnp.bfloat16), bias.reshape(1, Dout))
    return out[:M].reshape(B, S, Dout)


def linear_residual(x, w, bias, residual, *, tm_max=256):
    """residual + x @ W + bias.  x, residual: (B, S, D)."""
    B, S, D = x.shape
    Dout = w.shape[1]
    M = B * S
    tm = _pick_tm(M, tm_max)
    Mp = _round_up(M, tm)
    x2d = _pad_rows(x.reshape(M, D), Mp)
    r2d = _pad_rows(residual.reshape(M, Dout), Mp)

    out = pl.pallas_call(
        _linear_residual_kernel,
        out_shape=jax.ShapeDtypeStruct((Mp, Dout), jnp.float32),
        grid_spec=pltpu.PrefetchScalarGridSpec(
            num_scalar_prefetch=0,
            grid=(Mp // tm,),
            in_specs=[
                pl.BlockSpec((tm, D), lambda i: (i, 0)),      # x row tile
                pl.BlockSpec((D, Dout), lambda i: (0, 0)),    # W (resident, bf16)
                pl.BlockSpec((1, Dout), lambda i: (0, 0)),    # bias
                pl.BlockSpec((tm, Dout), lambda i: (i, 0)),   # residual row tile
            ],
            out_specs=pl.BlockSpec((tm, Dout), lambda i: (i, 0)),
        ),
        compiler_params=pltpu.CompilerParams(
            dimension_semantics=("parallel",),
            vmem_limit_bytes=_VMEM_LIMIT,
        ),
    )(x2d, w.astype(jnp.bfloat16), bias.reshape(1, Dout), r2d)
    return out[:M].reshape(B, S, Dout)


def multi_head_attention_core(qh, kh, vh, attn_bias):
    """Per-(batch*head) softmax attention.  qh: (BH, Sq, hd), kh/vh: (BH, Sk, hd)."""
    BH, Sq, hd = qh.shape
    Sk = kh.shape[1]
    scale = 1.0 / math.sqrt(hd)
    return pl.pallas_call(
        functools.partial(_attn_kernel, scale=scale),
        out_shape=jax.ShapeDtypeStruct((BH, Sq, hd), jnp.float32),
        grid_spec=pltpu.PrefetchScalarGridSpec(
            num_scalar_prefetch=0,
            grid=(BH,),
            in_specs=[
                pl.BlockSpec((1, Sq, hd), lambda b: (b, 0, 0)),
                pl.BlockSpec((1, Sk, hd), lambda b: (b, 0, 0)),
                pl.BlockSpec((1, Sk, hd), lambda b: (b, 0, 0)),
                pl.BlockSpec((1, Sq, Sk), lambda b: (b, 0, 0)),   # additive mask
            ],
            out_specs=pl.BlockSpec((1, Sq, hd), lambda b: (b, 0, 0)),
        ),
        compiler_params=pltpu.CompilerParams(
            dimension_semantics=("parallel",),
        ),
    )(qh, kh, vh, attn_bias)


def ln_ffn_residual(x, gamma, beta, w1, b1, w2, b2, *, eps=LN_EPS,
                    tm_max=256, th_max=512, approximate_gelu=False):
    """x + fc2(GELU(fc1(LayerNorm(x)))) with dropout in eval mode (identity)."""
    B, S, D = x.shape
    H = w1.shape[1]
    M = B * S
    tm = _pick_tm(M, tm_max)
    Mp = _round_up(M, tm)
    th = th_max if H % th_max == 0 else H          # hidden-dim (reduction) tile
    x2d = _pad_rows(x.reshape(M, D), Mp)

    out = pl.pallas_call(
        functools.partial(_ln_ffn_residual_kernel, eps=eps,
                          approximate_gelu=approximate_gelu),
        out_shape=jax.ShapeDtypeStruct((Mp, D), jnp.float32),
        grid_spec=pltpu.PrefetchScalarGridSpec(
            num_scalar_prefetch=0,
            grid=(Mp // tm, H // th),
            in_specs=[
                pl.BlockSpec((tm, D), lambda i, k: (i, 0)),    # x row tile (resident over k)
                pl.BlockSpec((1, D), lambda i, k: (0, 0)),     # LN gamma
                pl.BlockSpec((1, D), lambda i, k: (0, 0)),     # LN beta
                pl.BlockSpec((D, th), lambda i, k: (0, k)),    # W1 H-chunk (bf16)
                pl.BlockSpec((1, th), lambda i, k: (0, k)),    # b1 H-chunk
                pl.BlockSpec((th, D), lambda i, k: (k, 0)),    # W2 H-chunk (bf16)
                pl.BlockSpec((1, D), lambda i, k: (0, 0)),     # b2
            ],
            out_specs=pl.BlockSpec((tm, D), lambda i, k: (i, 0)),
            scratch_shapes=[
                pltpu.VMEM((tm, D), jnp.bfloat16),   # LayerNorm'd activations
                pltpu.VMEM((tm, D), jnp.float32),    # fc2 accumulator
            ],
        ),
        compiler_params=pltpu.CompilerParams(
            dimension_semantics=("parallel", "arbitrary"),
            vmem_limit_bytes=_VMEM_LIMIT,
        ),
    )(x2d, gamma.reshape(1, D), beta.reshape(1, D),
      w1.astype(jnp.bfloat16), b1.reshape(1, H),
      w2.astype(jnp.bfloat16), b2.reshape(1, D))
    return out[:M].reshape(B, S, D)


# ---------------------------------------------------------------------------
# Full CrossAttentionBlock forward
# ---------------------------------------------------------------------------
def cross_attention_block(video, text, params, mask=None, *, heads=8):
    """Pallas forward of CrossAttentionBlock (eval mode: dropout = identity)."""
    B, Sq, D = video.shape
    Sk = text.shape[1]
    assert D % heads == 0
    hd = D // heads

    # --- cross attention: q = norm_q(video), k/v = norm_kv(text) ---
    gq, bq_ln = params["norm_q"]
    gkv, bkv_ln = params["norm_kv"]
    q = ln_linear(video, gq, bq_ln, params["wq"], params["bq"])
    k = ln_linear(text, gkv, bkv_ln, params["wk"], params["bk"])
    v = ln_linear(text, gkv, bkv_ln, params["wv"], params["bv"])

    # head split (layout plumbing outside the kernels)
    qh = q.reshape(B, Sq, heads, hd).transpose(0, 2, 1, 3).reshape(B * heads, Sq, hd)
    kh = k.reshape(B, Sk, heads, hd).transpose(0, 2, 1, 3).reshape(B * heads, Sk, hd)
    vh = v.reshape(B, Sk, heads, hd).transpose(0, 2, 1, 3).reshape(B * heads, Sk, hd)

    if mask is None:
        attn_bias = jnp.zeros((B * heads, Sq, Sk), jnp.float32)
    else:
        attn_bias = jnp.where(mask > 0, 0.0, -jnp.inf).astype(jnp.float32)
        attn_bias = jnp.repeat(attn_bias, heads, axis=0)       # == repeat_interleave

    oh = multi_head_attention_core(qh, kh, vh, attn_bias)
    o = oh.reshape(B, heads, Sq, hd).transpose(0, 2, 1, 3).reshape(B, Sq, D)

    # output projection fused with the `video + fused` residual
    video_out = linear_residual(o, params["wm"], params["bm"], video)

    # --- FFN branches: x + FFN(LayerNorm(x)), fused per branch ---
    gv, bv_ln = params["norm_out_video"]
    video_out = ln_ffn_residual(video_out, gv, bv_ln, *params["ffn_video"])
    gt, bt_ln = params["norm_out_text"]
    text_out = ln_ffn_residual(text, gt, bt_ln, *params["ffn_text"])
    return video_out, text_out


# ---------------------------------------------------------------------------
# Parameters + pure-JAX reference (same precision policy as the kernels)
# ---------------------------------------------------------------------------
def init_params(key, num_hidden, *, ratio=4):
    D, H = num_hidden, num_hidden * ratio
    ks = jax.random.split(key, 16)

    def xavier_normal(k, fan_in, fan_out):       # weights stored (in, out) == torch W.T
        std = math.sqrt(2.0 / (fan_in + fan_out))
        return std * jax.random.normal(k, (fan_in, fan_out), jnp.float32)

    def linear_default(kw, kb, fan_in, fan_out):  # nn.Linear default uniform init
        bound = 1.0 / math.sqrt(fan_in)
        w = jax.random.uniform(kw, (fan_in, fan_out), jnp.float32, -bound, bound)
        b = jax.random.uniform(kb, (fan_out,), jnp.float32, -bound, bound)
        return w, b

    def ln_params():
        return (jnp.ones((D,), jnp.float32), jnp.zeros((D,), jnp.float32))

    w1v, b1v = linear_default(ks[8], ks[9], D, H)
    w2v, b2v = linear_default(ks[10], ks[11], H, D)
    w1t, b1t = linear_default(ks[12], ks[13], D, H)
    w2t, b2t = linear_default(ks[14], ks[15], H, D)

    return {
        "norm_q": ln_params(), "norm_kv": ln_params(),
        "norm_out_video": ln_params(), "norm_out_text": ln_params(),
        "wq": xavier_normal(ks[0], D, D), "bq": jnp.zeros((D,), jnp.float32),
        "wk": xavier_normal(ks[1], D, D), "bk": jnp.zeros((D,), jnp.float32),
        "wv": xavier_normal(ks[2], D, D), "bv": jnp.zeros((D,), jnp.float32),
        "wm": xavier_normal(ks[3], D, D), "bm": jnp.zeros((D,), jnp.float32),
        "ffn_video": (w1v, b1v, w2v, b2v),
        "ffn_text": (w1t, b1t, w2t, b2t),
    }


def reference_block(video, text, params, mask=None, *, heads=8, eps=LN_EPS):
    """Pure-JAX reference mirroring the kernels' precision (bf16 matmul operands,
    f32 accumulate / elementwise)."""
    def ln(x, gb):
        g, b = gb
        mu = x.mean(-1, keepdims=True)
        xc = x - mu
        var = (xc * xc).mean(-1, keepdims=True)
        return xc * lax.rsqrt(var + eps) * g + b

    def mm(a, w):
        return jnp.dot(a.astype(jnp.bfloat16), w.astype(jnp.bfloat16),
                       preferred_element_type=jnp.float32)

    B, Sq, D = video.shape
    Sk = text.shape[1]
    hd = D // heads

    q = mm(ln(video, params["norm_q"]), params["wq"]) + params["bq"]
    k = mm(ln(text, params["norm_kv"]), params["wk"]) + params["bk"]
    v = mm(ln(text, params["norm_kv"]), params["wv"]) + params["bv"]

    qh = q.reshape(B, Sq, heads, hd).transpose(0, 2, 1, 3)
    kh = k.reshape(B, Sk, heads, hd).transpose(0, 2, 1, 3)
    vh = v.reshape(B, Sk, heads, hd).transpose(0, 2, 1, 3)

    s = jnp.einsum("bhqd,bhkd->bhqk", qh, kh) / math.sqrt(hd)
    if mask is not None:
        s = s + jnp.where(mask > 0, 0.0, -jnp.inf)[:, None]
    p = jax.nn.softmax(s, axis=-1)
    o = jnp.einsum("bhqk,bhkd->bhqd", p, vh)
    o = o.transpose(0, 2, 1, 3).reshape(B, Sq, D)
    video_out = video + mm(o, params["wm"]) + params["bm"]

    def ffn(x, ln_p, fp):
        w1, b1, w2, b2 = fp
        h = mm(ln(x, ln_p), w1) + b1
        h = 0.5 * h * (1.0 + lax.erf(h * (1.0 / math.sqrt(2.0))))   # exact GELU
        return mm(h, w2) + b2

    video_out = video_out + ffn(video_out, params["norm_out_video"], params["ffn_video"])
    text_out = text + ffn(text, params["norm_out_text"], params["ffn_text"])
    return video_out, text_out


if __name__ == "__main__":
    key = jax.random.PRNGKey(0)
    k_video, k_text, k_params = jax.random.split(key, 3)

    # Small shapes consistent with the module. num_hidden=128: divisible by the 8
    # attention heads and lane-dense (multiple of 128) per the TPU layout advice.
    B, Sq, Sk, D = 2, 8, 16, 128

    video = jax.random.normal(k_video, (B, Sq, D), jnp.float32)
    text = jax.random.normal(k_text, (B, Sk, D), jnp.float32)
    params = init_params(k_params, D)

    fwd = jax.jit(cross_attention_block)
    video_out, text_out = fwd(video, text, params)
    video_out, text_out = jax.block_until_ready((video_out, text_out))

    ref_v, ref_t = reference_block(video, text, params)
    assert video_out.shape == (B, Sq, D) and text_out.shape == (B, Sk, D)
    assert jnp.allclose(video_out, ref_v, atol=1e-2, rtol=1e-2), (
        float(jnp.max(jnp.abs(video_out - ref_v))))
    assert jnp.allclose(text_out, ref_t, atol=1e-2, rtol=1e-2), (
        float(jnp.max(jnp.abs(text_out - ref_t))))

    print("KERNEL_OK")
</pallas_src>

<mosaic_0001>
module attributes {stable_mosaic.version = 11 : i64} {
  func.func @_ln_linear_kernel(%arg0: i32, %arg1: memref<32x128xf32, #tpu.memory_space<vmem>>, %arg2: memref<1x128xf32, #tpu.memory_space<vmem>>, %arg3: memref<1x128xf32, #tpu.memory_space<vmem>>, %arg4: memref<128x128xbf16, #tpu.memory_space<vmem>>, %arg5: memref<1x128xf32, #tpu.memory_space<vmem>>, %arg6: memref<32x128xf32, #tpu.memory_space<vmem>>) attributes {dimension_semantics = [#tpu.dimension_semantics<parallel>], iteration_bounds = array<i64: 1>, scalar_prefetch = 0 : i64, scratch_operands = 0 : i64, tpu.core_type = #tpu.core_type<tc>, window_params = [{transform_indices = @transform_0, window_bounds = array<i64: 32, 128>}, {pipeline_mode = #tpu.pipeline_mode<synchronous>, transform_indices = @transform_1, window_bounds = array<i64: 1, 128>}, {pipeline_mode = #tpu.pipeline_mode<synchronous>, transform_indices = @transform_2, window_bounds = array<i64: 1, 128>}, {pipeline_mode = #tpu.pipeline_mode<synchronous>, transform_indices = @transform_3, window_bounds = array<i64: 128, 128>}, {pipeline_mode = #tpu.pipeline_mode<synchronous>, transform_indices = @transform_4, window_bounds = array<i64: 1, 128>}, {transform_indices = @transform_5, window_bounds = array<i64: 32, 128>}]} {
    %c0 = arith.constant 0 : index
    %c0_0 = arith.constant 0 : index
    %0 = vector.load %arg1[%c0, %c0_0] : memref<32x128xf32, #tpu.memory_space<vmem>>, vector<32x128xf32>
    %cst = arith.constant dense<0.000000e+00> : vector<32xf32>
    %1 = vector.multi_reduction <add>, %0, %cst [1] : vector<32x128xf32> to vector<32xf32>
    %2 = vector.shape_cast %1 : vector<32xf32> to vector<32x1xf32>
    %cst_1 = arith.constant 1.280000e+02 : f32
    %3 = vector.broadcast %cst_1 : f32 to vector<32x1xf32>
    %4 = arith.divf %2, %3 : vector<32x1xf32>
    %5 = vector.broadcast %4 : vector<32x1xf32> to vector<32x128xf32>
    %6 = arith.subf %0, %5 : vector<32x128xf32>
    %7 = arith.mulf %6, %6 : vector<32x128xf32>
    %cst_2 = arith.constant dense<0.000000e+00> : vector<32xf32>
    %8 = vector.multi_reduction <add>, %7, %cst_2 [1] : vector<32x128xf32> to vector<32xf32>
    %9 = vector.shape_cast %8 : vector<32xf32> to vector<32x1xf32>
    %cst_3 = arith.constant 1.280000e+02 : f32
    %10 = vector.broadcast %cst_3 : f32 to vector<32x1xf32>
    %11 = arith.divf %9, %10 : vector<32x1xf32>
    %cst_4 = arith.constant 9.99999974E-6 : f32
    %12 = vector.broadcast %cst_4 : f32 to vector<32x1xf32>
    %13 = arith.addf %11, %12 : vector<32x1xf32>
    %14 = math.rsqrt %13 : vector<32x1xf32>
    %15 = vector.broadcast %14 : vector<32x1xf32> to vector<32x128xf32>
    %16 = arith.mulf %6, %15 : vector<32x128xf32>
    %c0_5 = arith.constant 0 : index
    %c0_6 = arith.constant 0 : index
    %17 = vector.load %arg2[%c0_5, %c0_6] : memref<1x128xf32, #tpu.memory_space<vmem>>, vector<1x128xf32>
    %18 = vector.broadcast %17 : vector<1x128xf32> to vector<32x128xf32>
    %19 = arith.mulf %16, %18 : vector<32x128xf32>
    %c0_7 = arith.constant 0 : index
    %c0_8 = arith.constant 0 : index
    %20 = vector.load %arg3[%c0_7, %c0_8] : memref<1x128xf32, #tpu.memory_space<vmem>>, vector<1x128xf32>
    %21 = vector.broadcast %20 : vector<1x128xf32> to vector<32x128xf32>
    %22 = arith.addf %19, %21 : vector<32x128xf32>
    %23 = arith.truncf %22 : vector<32x128xf32> to vector<32x128xbf16>
    %c0_9 = arith.constant 0 : index
    %c0_10 = arith.constant 0 : index
    %24 = vector.load %arg4[%c0_9, %c0_10] : memref<128x128xbf16, #tpu.memory_space<vmem>>, vector<128x128xbf16>
    %cst_11 = arith.constant dense<0.000000e+00> : vector<32x128xf32>
    %25 = tpu.matmul %23, %24, %cst_11 {dimension_numbers = #tpu.dot_dimension_numbers<[1], [0], [0], [1], [0, 0, 1, 1], [], []>} : vector<32x128xbf16>, vector<128x128xbf16>, vector<32x128xf32> -> vector<32x128xf32>
    %c0_12 = arith.constant 0 : index
    %c0_13 = arith.constant 0 : index
    %26 = vector.load %arg5[%c0_12, %c0_13] : memref<1x128xf32, #tpu.memory_space<vmem>>, vector<1x128xf32>
    %27 = vector.broadcast %26 : vector<1x128xf32> to vector<32x128xf32>
    %28 = arith.addf %25, %27 : vector<32x128xf32>
    %c0_14 = arith.constant 0 : index
    %c0_15 = arith.constant 0 : index
    %29 = vector.load %arg6[%c0_14, %c0_15] : memref<32x128xf32, #tpu.memory_space<vmem>>, vector<32x128xf32>
    tpu.vector_store %arg6[%c0_14, %c0_15], %28 {strides = array<i32>} : memref<32x128xf32, #tpu.memory_space<vmem>>, vector<32x128xf32>,
    return
  }
  func.func @transform_0(%arg0: i32) -> (i32, i32) {
    %c0_i32 = arith.constant 0 : i32
    %c0_i32_0 = arith.constant 0 : i32
    return %arg0, %c0_i32 : i32, i32
  }
  func.func @transform_1(%arg0: i32) -> (i32, i32) {
    %c0_i32 = arith.constant 0 : i32
    %c0_i32_0 = arith.constant 0 : i32
    %c0_i32_1 = arith.constant 0 : i32
    return %c0_i32, %c0_i32_0 : i32, i32
  }
  func.func @transform_2(%arg0: i32) -> (i32, i32) {
    %c0_i32 = arith.constant 0 : i32
    %c0_i32_0 = arith.constant 0 : i32
    %c0_i32_1 = arith.constant 0 : i32
    return %c0_i32, %c0_i32_0 : i32, i32
  }
  func.func @transform_3(%arg0: i32) -> (i32, i32) {
    %c0_i32 = arith.constant 0 : i32
    %c0_i32_0 = arith.constant 0 : i32
    %c0_i32_1 = arith.constant 0 : i32
    return %c0_i32, %c0_i32_0 : i32, i32
  }
  func.func @transform_4(%arg0: i32) -> (i32, i32) {
    %c0_i32 = arith.constant 0 : i32
    %c0_i32_0 = arith.constant 0 : i32
    %c0_i32_1 = arith.constant 0 : i32
    return %c0_i32, %c0_i32_0 : i32, i32
  }
  func.func @transform_5(%arg0: i32) -> (i32, i32) {
    %c0_i32 = arith.constant 0 : i32
    %c0_i32_0 = arith.constant 0 : i32
    return %arg0, %c0_i32 : i32, i32
  }
}

module attributes {stable_mosaic.version = 11 : i64} {
  func.func @_ln_linear_kernel(%arg0: i32, %arg1: memref<16x128xf32, #tpu.memory_space<vmem>>, %arg2: memref<1x128xf32, #tpu.memory_space<vmem>>, %arg3: memref<1x128xf32, #tpu.memory_space<vmem>>, %arg4: memref<128x128xbf16, #tpu.memory_space<vmem>>, %arg5: memref<1x128xf32, #tpu.memory_space<vmem>>, %arg6: memref<16x128xf32, #tpu.memory_space<vmem>>) attributes {dimension_semantics = [#tpu.dimension_semantics<parallel>], iteration_bounds = array<i64: 1>, scalar_prefetch = 0 : i64, scratch_operands = 0 : i64, tpu.core_type = #tpu.core_type<tc>, window_params = [{transform_indices = @transform_0, window_bounds = array<i64: 16, 128>}, {pipeline_mode = #tpu.pipeline_mode<synchronous>, transform_indices = @transform_1, window_bounds = array<i64: 1, 128>}, {pipeline_mode = #tpu.pipeline_mode<synchronous>, transform_indices = @transform_2, window_bounds = array<i64: 1, 128>}, {pipeline_mode = #tpu.pipeline_mode<synchronous>, transform_indices = @transform_3, window_bounds = array<i64: 128, 128>}, {pipeline_mode = #tpu.pipeline_mode<synchronous>, transform_indices = @transform_4, window_bounds = array<i64: 1, 128>}, {transform_indices = @transform_5, window_bounds = array<i64: 16, 128>}]} {
    %c0 = arith.constant 0 : index
    %c0_0 = arith.constant 0 : index
    %0 = vector.load %arg1[%c0, %c0_0] : memref<16x128xf32, #tpu.memory_space<vmem>>, vector<16x128xf32>
    %cst = arith.constant dense<0.000000e+00> : vector<16xf32>
    %1 = vector.multi_reduction <add>, %0, %cst [1] : vector<16x128xf32> to vector<16xf32>
    %2 = vector.shape_cast %1 : vector<16xf32> to vector<16x1xf32>
    %cst_1 = arith.constant 1.280000e+02 : f32
    %3 = vector.broadcast %cst_1 : f32 to vector<16x1xf32>
    %4 = arith.divf %2, %3 : vector<16x1xf32>
    %5 = vector.broadcast %4 : vector<16x1xf32> to vector<16x128xf32>
    %6 = arith.subf %0, %5 : vector<16x128xf32>
    %7 = arith.mulf %6, %6 : vector<16x128xf32>
    %cst_2 = arith.constant dense<0.000000e+00> : vector<16xf32>
    %8 = vector.multi_reduction <add>, %7, %cst_2 [1] : vector<16x128xf32> to vector<16xf32>
    %9 = vector.shape_cast %8 : vector<16xf32> to vector<16x1xf32>
    %cst_3 = arith.constant 1.280000e+02 : f32
    %10 = vector.broadcast %cst_3 : f32 to vector<16x1xf32>
    %11 = arith.divf %9, %10 : vector<16x1xf32>
    %cst_4 = arith.constant 9.99999974E-6 : f32
    %12 = vector.broadcast %cst_4 : f32 to vector<16x1xf32>
    %13 = arith.addf %11, %12 : vector<16x1xf32>
    %14 = math.rsqrt %13 : vector<16x1xf32>
    %15 = vector.broadcast %14 : vector<16x1xf32> to vector<16x128xf32>
    %16 = arith.mulf %6, %15 : vector<16x128xf32>
    %c0_5 = arith.constant 0 : index
    %c0_6 = arith.constant 0 : index
    %17 = vector.load %arg2[%c0_5, %c0_6] : memref<1x128xf32, #tpu.memory_space<vmem>>, vector<1x128xf32>
    %18 = vector.broadcast %17 : vector<1x128xf32> to vector<16x128xf32>
    %19 = arith.mulf %16, %18 : vector<16x128xf32>
    %c0_7 = arith.constant 0 : index
    %c0_8 = arith.constant 0 : index
    %20 = vector.load %arg3[%c0_7, %c0_8] : memref<1x128xf32, #tpu.memory_space<vmem>>, vector<1x128xf32>
    %21 = vector.broadcast %20 : vector<1x128xf32> to vector<16x128xf32>
    %22 = arith.addf %19, %21 : vector<16x128xf32>
    %23 = arith.truncf %22 : vector<16x128xf32> to vector<16x128xbf16>
    %c0_9 = arith.constant 0 : index
    %c0_10 = arith.constant 0 : index
    %24 = vector.load %arg4[%c0_9, %c0_10] : memref<128x128xbf16, #tpu.memory_space<vmem>>, vector<128x128xbf16>
    %cst_11 = arith.constant dense<0.000000e+00> : vector<16x128xf32>
    %25 = tpu.matmul %23, %24, %cst_11 {dimension_numbers = #tpu.dot_dimension_numbers<[1], [0], [0], [1], [0, 0, 1, 1], [], []>} : vector<16x128xbf16>, vector<128x128xbf16>, vector<16x128xf32> -> vector<16x128xf32>
    %c0_12 = arith.constant 0 : index
    %c0_13 = arith.constant 0 : index
    %26 = vector.load %arg5[%c0_12, %c0_13] : memref<1x128xf32, #tpu.memory_space<vmem>>, vector<1x128xf32>
    %27 = vector.broadcast %26 : vector<1x128xf32> to vector<16x128xf32>
    %28 = arith.addf %25, %27 : vector<16x128xf32>
    %c0_14 = arith.constant 0 : index
    %c0_15 = arith.constant 0 : index
    %29 = vector.load %arg6[%c0_14, %c0_15] : memref<16x128xf32, #tpu.memory_space<vmem>>, vector<16x128xf32>
    tpu.vector_store %arg6[%c0_14, %c0_15], %28 {strides = array<i32>} : memref<16x128xf32, #tpu.memory_space<vmem>>, vector<16x128xf32>,
    return
  }
  func.func @transform_0(%arg0: i32) -> (i32, i32) {
    %c0_i32 = arith.constant 0 : i32
    %c0_i32_0 = arith.constant 0 : i32
    return %arg0, %c0_i32 : i32, i32
  }
  func.func @transform_1(%arg0: i32) -> (i32, i32) {
    %c0_i32 = arith.constant 0 : i32
    %c0_i32_0 = arith.constant 0 : i32
    %c0_i32_1 = arith.constant 0 : i32
    return %c0_i32, %c0_i32_0 : i32, i32
  }
  func.func @transform_2(%arg0: i32) -> (i32, i32) {
    %c0_i32 = arith.constant 0 : i32
    %c0_i32_0 = arith.constant 0 : i32
    %c0_i32_1 = arith.constant 0 : i32
    return %c0_i32, %c0_i32_0 : i32, i32
  }
  func.func @transform_3(%arg0: i32) -> (i32, i32) {
    %c0_i32 = arith.constant 0 : i32
    %c0_i32_0 = arith.constant 0 : i32
    %c0_i32_1 = arith.constant 0 : i32
    return %c0_i32, %c0_i32_0 : i32, i32
  }
  func.func @transform_4(%arg0: i32) -> (i32, i32) {
    %c0_i32 = arith.constant 0 : i32
    %c0_i32_0 = arith.constant 0 : i32
    %c0_i32_1 = arith.constant 0 : i32
    return %c0_i32, %c0_i32_0 : i32, i32
  }
  func.func @transform_5(%arg0: i32) -> (i32, i32) {
    %c0_i32 = arith.constant 0 : i32
    %c0_i32_0 = arith.constant 0 : i32
    return %arg0, %c0_i32 : i32, i32
  }
}

module attributes {stable_mosaic.version = 11 : i64} {
  func.func @_attn_kernel(%arg0: i32, %arg1: memref<1x8x16xf32, #tpu.memory_space<vmem>>, %arg2: memref<1x16x16xf32, #tpu.memory_space<vmem>>, %arg3: memref<1x16x16xf32, #tpu.memory_space<vmem>>, %arg4: memref<1x8x16xf32, #tpu.memory_space<vmem>>, %arg5: memref<1x8x16xf32, #tpu.memory_space<vmem>>) attributes {dimension_semantics = [#tpu.dimension_semantics<parallel>], iteration_bounds = array<i64: 16>, scalar_prefetch = 0 : i64, scratch_operands = 0 : i64, tpu.core_type = #tpu.core_type<tc>, window_params = [{transform_indices = @transform_0, window_bounds = array<i64: 1, 8, 16>}, {transform_indices = @transform_1, window_bounds = array<i64: 1, 16, 16>}, {transform_indices = @transform_2, window_bounds = array<i64: 1, 16, 16>}, {transform_indices = @transform_3, window_bounds = array<i64: 1, 8, 16>}, {transform_indices = @transform_4, window_bounds = array<i64: 1, 8, 16>}]} {
    %c0 = arith.constant 0 : index
    %c0_0 = arith.constant 0 : index
    %c0_1 = arith.constant 0 : index
    %0 = vector.load %arg1[%c0, %c0_0, %c0_1] : memref<1x8x16xf32, #tpu.memory_space<vmem>>, vector<1x8x16xf32>
    %1 = vector.shape_cast %0 : vector<1x8x16xf32> to vector<8x16xf32>
    %c0_2 = arith.constant 0 : index
    %c0_3 = arith.constant 0 : index
    %c0_4 = arith.constant 0 : index
    %2 = vector.load %arg2[%c0_2, %c0_3, %c0_4] : memref<1x16x16xf32, #tpu.memory_space<vmem>>, vector<1x16x16xf32>
    %3 = vector.shape_cast %2 : vector<1x16x16xf32> to vector<16x16xf32>
    %c0_5 = arith.constant 0 : index
    %c0_6 = arith.constant 0 : index
    %c0_7 = arith.constant 0 : index
    %4 = vector.load %arg3[%c0_5, %c0_6, %c0_7] : memref<1x16x16xf32, #tpu.memory_space<vmem>>, vector<1x16x16xf32>
    %5 = vector.shape_cast %4 : vector<1x16x16xf32> to vector<16x16xf32>
    %cst = arith.constant dense<0.000000e+00> : vector<8x16xf32>
    %6 = tpu.matmul %1, %3, %cst {dimension_numbers = #tpu.dot_dimension_numbers<[1], [1], [0], [0], [0, 0, 1, 0], [], []>} : vector<8x16xf32>, vector<16x16xf32>, vector<8x16xf32> -> vector<8x16xf32>
    %cst_8 = arith.constant 2.500000e-01 : f32
    %7 = vector.broadcast %cst_8 : f32 to vector<8x16xf32>
    %8 = arith.mulf %6, %7 : vector<8x16xf32>
    %c0_9 = arith.constant 0 : index
    %c0_10 = arith.constant 0 : index
    %c0_11 = arith.constant 0 : index
    %9 = vector.load %arg4[%c0_9, %c0_10, %c0_11] : memref<1x8x16xf32, #tpu.memory_space<vmem>>, vector<1x8x16xf32>
    %10 = vector.shape_cast %9 : vector<1x8x16xf32> to vector<8x16xf32>
    %11 = arith.addf %8, %10 : vector<8x16xf32>
    %cst_12 = arith.constant dense<0xFF800000> : vector<8xf32>
    %12 = vector.multi_reduction <maximumf>, %11, %cst_12 [1] : vector<8x16xf32> to vector<8xf32>
    %13 = vector.shape_cast %12 : vector<8xf32> to vector<8x1xf32>
    %14 = vector.broadcast %13 : vector<8x1xf32> to vector<8x16xf32>
    %15 = arith.subf %11, %14 : vector<8x16xf32>
    %16 = math.exp %15 : vector<8x16xf32>
    %cst_13 = arith.constant dense<0.000000e+00> : vector<8xf32>
    %17 = vector.multi_reduction <add>, %16, %cst_13 [1] : vector<8x16xf32> to vector<8xf32>
    %18 = vector.shape_cast %17 : vector<8xf32> to vector<8x1xf32>
    %19 = vector.broadcast %18 : vector<8x1xf32> to vector<8x16xf32>
    %20 = arith.divf %16, %19 : vector<8x16xf32>
    %cst_14 = arith.constant dense<0.000000e+00> : vector<8x16xf32>
    %21 = tpu.matmul %20, %5, %cst_14 {dimension_numbers = #tpu.dot_dimension_numbers<[1], [0], [0], [1], [0, 0, 1, 1], [], []>} : vector<8x16xf32>, vector<16x16xf32>, vector<8x16xf32> -> vector<8x16xf32>
    %c0_15 = arith.constant 0 : index
    %c0_16 = arith.constant 0 : index
    %c0_17 = arith.constant 0 : index
    %22 = vector.load %arg5[%c0_15, %c0_16, %c0_17] : memref<1x8x16xf32, #tpu.memory_space<vmem>>, vector<1x8x16xf32>
    %23 = vector.shape_cast %22 : vector<1x8x16xf32> to vector<8x16xf32>
    %24 = vector.shape_cast %21 : vector<8x16xf32> to vector<1x8x16xf32>
    tpu.vector_store %arg5[%c0_15, %c0_16, %c0_17], %24 {strides = array<i32>} : memref<1x8x16xf32, #tpu.memory_space<vmem>>, vector<1x8x16xf32>,
    return
  }
  func.func @transform_0(%arg0: i32) -> (i32, i32, i32) {
    %c0_i32 = arith.constant 0 : i32
    %c0_i32_0 = arith.constant 0 : i32
    %c0_i32_1 = arith.constant 0 : i32
    return %arg0, %c0_i32, %c0_i32_0 : i32, i32, i32
  }
  func.func @transform_1(%arg0: i32) -> (i32, i32, i32) {
    %c0_i32 = arith.constant 0 : i32
    %c0_i32_0 = arith.constant 0 : i32
    %c0_i32_1 = arith.constant 0 : i32
    return %arg0, %c0_i32, %c0_i32_0 : i32, i32, i32
  }
  func.func @transform_2(%arg0: i32) -> (i32, i32, i32) {
    %c0_i32 = arith.constant 0 : i32
    %c0_i32_0 = arith.constant 0 : i32
    %c0_i32_1 = arith.constant 0 : i32
    return %arg0, %c0_i32, %c0_i32_0 : i32, i32, i32
  }
  func.func @transform_3(%arg0: i32) -> (i32, i32, i32) {
    %c0_i32 = arith.constant 0 : i32
    %c0_i32_0 = arith.constant 0 : i32
    %c0_i32_1 = arith.constant 0 : i32
    return %arg0, %c0_i32, %c0_i32_0 : i32, i32, i32
  }
  func.func @transform_4(%arg0: i32) -> (i32, i32, i32) {
    %c0_i32 = arith.constant 0 : i32
    %c0_i32_0 = arith.constant 0 : i32
    %c0_i32_1 = arith.constant 0 : i32
    return %arg0, %c0_i32, %c0_i32_0 : i32, i32, i32
  }
}

module attributes {stable_mosaic.version = 11 : i64} {
  func.func @_linear_residual_kernel(%arg0: i32, %arg1: memref<16x128xf32, #tpu.memory_space<vmem>>, %arg2: memref<128x128xbf16, #tpu.memory_space<vmem>>, %arg3: memref<1x128xf32, #tpu.memory_space<vmem>>, %arg4: memref<16x128xf32, #tpu.memory_space<vmem>>, %arg5: memref<16x128xf32, #tpu.memory_space<vmem>>) attributes {dimension_semantics = [#tpu.dimension_semantics<parallel>], iteration_bounds = array<i64: 1>, scalar_prefetch = 0 : i64, scratch_operands = 0 : i64, tpu.core_type = #tpu.core_type<tc>, window_params = [{transform_indices = @transform_0, window_bounds = array<i64: 16, 128>}, {pipeline_mode = #tpu.pipeline_mode<synchronous>, transform_indices = @transform_1, window_bounds = array<i64: 128, 128>}, {pipeline_mode = #tpu.pipeline_mode<synchronous>, transform_indices = @transform_2, window_bounds = array<i64: 1, 128>}, {transform_indices = @transform_3, window_bounds = array<i64: 16, 128>}, {transform_indices = @transform_4, window_bounds = array<i64: 16, 128>}]} {
    %c0 = arith.constant 0 : index
    %c0_0 = arith.constant 0 : index
    %0 = vector.load %arg1[%c0, %c0_0] : memref<16x128xf32, #tpu.memory_space<vmem>>, vector<16x128xf32>
    %1 = arith.truncf %0 : vector<16x128xf32> to vector<16x128xbf16>
    %c0_1 = arith.constant 0 : index
    %c0_2 = arith.constant 0 : index
    %2 = vector.load %arg2[%c0_1, %c0_2] : memref<128x128xbf16, #tpu.memory_space<vmem>>, vector<128x128xbf16>
    %cst = arith.constant dense<0.000000e+00> : vector<16x128xf32>
    %3 = tpu.matmul %1, %2, %cst {dimension_numbers = #tpu.dot_dimension_numbers<[1], [0], [0], [1], [0, 0, 1, 1], [], []>} : vector<16x128xbf16>, vector<128x128xbf16>, vector<16x128xf32> -> vector<16x128xf32>
    %c0_3 = arith.constant 0 : index
    %c0_4 = arith.constant 0 : index
    %4 = vector.load %arg4[%c0_3, %c0_4] : memref<16x128xf32, #tpu.memory_space<vmem>>, vector<16x128xf32>
    %5 = arith.addf %4, %3 : vector<16x128xf32>
    %c0_5 = arith.constant 0 : index
    %c0_6 = arith.constant 0 : index
    %6 = vector.load %arg3[%c0_5, %c0_6] : memref<1x128xf32, #tpu.memory_space<vmem>>, vector<1x128xf32>
    %7 = vector.broadcast %6 : vector<1x128xf32> to vector<16x128xf32>
    %8 = arith.addf %5, %7 : vector<16x128xf32>
    %c0_7 = arith.constant 0 : index
    %c0_8 = arith.constant 0 : index
    %9 = vector.load %arg5[%c0_7, %c0_8] : memref<16x128xf32, #tpu.memory_space<vmem>>, vector<16x128xf32>
    tpu.vector_store %arg5[%c0_7, %c0_8], %8 {strides = array<i32>} : memref<16x128xf32, #tpu.memory_space<vmem>>, vector<16x128xf32>,
    return
  }
  func.func @transform_0(%arg0: i32) -> (i32, i32) {
    %c0_i32 = arith.constant 0 : i32
    %c0_i32_0 = arith.constant 0 : i32
    return %arg0, %c0_i32 : i32, i32
  }
  func.func @transform_1(%arg0: i32) -> (i32, i32) {
    %c0_i32 = arith.constant 0 : i32
    %c0_i32_0 = arith.constant 0 : i32
    %c0_i32_1 = arith.constant 0 : i32
    return %c0_i32, %c0_i32_0 : i32, i32
  }
  func.func @transform_2(%arg0: i32) -> (i32, i32) {
    %c0_i32 = arith.constant 0 : i32
    %c0_i32_0 = arith.constant 0 : i32
    %c0_i32_1 = arith.constant 0 : i32
    return %c0_i32, %c0_i32_0 : i32, i32
  }
  func.func @transform_3(%arg0: i32) -> (i32, i32) {
    %c0_i32 = arith.constant 0 : i32
    %c0_i32_0 = arith.constant 0 : i32
    return %arg0, %c0_i32 : i32, i32
  }
  func.func @transform_4(%arg0: i32) -> (i32, i32) {
    %c0_i32 = arith.constant 0 : i32
    %c0_i32_0 = arith.constant 0 : i32
    return %arg0, %c0_i32 : i32, i32
  }
}

module attributes {stable_mosaic.version = 11 : i64} {
  func.func @_ln_ffn_residual_kernel(%arg0: i32, %arg1: i32, %arg2: memref<16x128xf32, #tpu.memory_space<vmem>>, %arg3: memref<1x128xf32, #tpu.memory_space<vmem>>, %arg4: memref<1x128xf32, #tpu.memory_space<vmem>>, %arg5: memref<128x512xbf16, #tpu.memory_space<vmem>>, %arg6: memref<1x512xf32, #tpu.memory_space<vmem>>, %arg7: memref<512x128xbf16, #tpu.memory_space<vmem>>, %arg8: memref<1x128xf32, #tpu.memory_space<vmem>>, %arg9: memref<16x128xf32, #tpu.memory_space<vmem>>, %arg10: memref<16x128xbf16, #tpu.memory_space<vmem>>, %arg11: memref<16x128xf32, #tpu.memory_space<vmem>>) attributes {dimension_semantics = [#tpu.dimension_semantics<parallel>, #tpu.dimension_semantics<arbitrary>], iteration_bounds = array<i64: 1, 1>, scalar_prefetch = 0 : i64, scratch_operands = 2 : i64, tpu.core_type = #tpu.core_type<tc>, window_params = [{transform_indices = @transform_0, window_bounds = array<i64: 16, 128>}, {pipeline_mode = #tpu.pipeline_mode<synchronous>, transform_indices = @transform_1, window_bounds = array<i64: 1, 128>}, {pipeline_mode = #tpu.pipeline_mode<synchronous>, transform_indices = @transform_2, window_bounds = array<i64: 1, 128>}, {transform_indices = @transform_3, window_bounds = array<i64: 128, 512>}, {transform_indices = @transform_4, window_bounds = array<i64: 1, 512>}, {transform_indices = @transform_5, window_bounds = array<i64: 512, 128>}, {pipeline_mode = #tpu.pipeline_mode<synchronous>, transform_indices = @transform_6, window_bounds = array<i64: 1, 128>}, {transform_indices = @transform_7, window_bounds = array<i64: 16, 128>}]} {
    %c0_i32 = arith.constant 0 : i32
    %0 = arith.cmpi eq, %arg1, %c0_i32 : i32
    %1 = arith.extui %0 : i1 to i32
    %c0_i32_0 = arith.constant 0 : i32
    %2 = arith.cmpi ne, %1, %c0_i32_0 : i32
    scf.if %2 {
      %c0_18 = arith.constant 0 : index
      %c0_19 = arith.constant 0 : index
      %26 = vector.load %arg2[%c0_18, %c0_19] : memref<16x128xf32, #tpu.memory_space<vmem>>, vector<16x128xf32>
      %cst_20 = arith.constant dense<0.000000e+00> : vector<16xf32>
      %27 = vector.multi_reduction <add>, %26, %cst_20 [1] : vector<16x128xf32> to vector<16xf32>
      %28 = vector.shape_cast %27 : vector<16xf32> to vector<16x1xf32>
      %cst_21 = arith.constant 1.280000e+02 : f32
      %29 = vector.broadcast %cst_21 : f32 to vector<16x1xf32>
      %30 = arith.divf %28, %29 : vector<16x1xf32>
      %31 = vector.broadcast %30 : vector<16x1xf32> to vector<16x128xf32>
      %32 = arith.subf %26, %31 : vector<16x128xf32>
      %33 = arith.mulf %32, %32 : vector<16x128xf32>
      %cst_22 = arith.constant dense<0.000000e+00> : vector<16xf32>
      %34 = vector.multi_reduction <add>, %33, %cst_22 [1] : vector<16x128xf32> to vector<16xf32>
      %35 = vector.shape_cast %34 : vector<16xf32> to vector<16x1xf32>
      %cst_23 = arith.constant 1.280000e+02 : f32
      %36 = vector.broadcast %cst_23 : f32 to vector<16x1xf32>
      %37 = arith.divf %35, %36 : vector<16x1xf32>
      %cst_24 = arith.constant 9.99999974E-6 : f32
      %38 = vector.broadcast %cst_24 : f32 to vector<16x1xf32>
      %39 = arith.addf %37, %38 : vector<16x1xf32>
      %40 = math.rsqrt %39 : vector<16x1xf32>
      %41 = vector.broadcast %40 : vector<16x1xf32> to vector<16x128xf32>
      %42 = arith.mulf %32, %41 : vector<16x128xf32>
      %c0_25 = arith.constant 0 : index
      %c0_26 = arith.constant 0 : index
      %43 = vector.load %arg3[%c0_25, %c0_26] : memref<1x128xf32, #tpu.memory_space<vmem>>, vector<1x128xf32>
      %44 = vector.broadcast %43 : vector<1x128xf32> to vector<16x128xf32>
      %45 = arith.mulf %42, %44 : vector<16x128xf32>
      %c0_27 = arith.constant 0 : index
      %c0_28 = arith.constant 0 : index
      %46 = vector.load %arg4[%c0_27, %c0_28] : memref<1x128xf32, #tpu.memory_space<vmem>>, vector<1x128xf32>
      %47 = vector.broadcast %46 : vector<1x128xf32> to vector<16x128xf32>
      %48 = arith.addf %45, %47 : vector<16x128xf32>
      %49 = arith.truncf %48 : vector<16x128xf32> to vector<16x128xbf16>
      %c0_29 = arith.constant 0 : index
      %c0_30 = arith.constant 0 : index
      %50 = vector.load %arg10[%c0_29, %c0_30] : memref<16x128xbf16, #tpu.memory_space<vmem>>, vector<16x128xbf16>
      tpu.vector_store %arg10[%c0_29, %c0_30], %49 {strides = array<i32>} : memref<16x128xbf16, #tpu.memory_space<vmem>>, vector<16x128xbf16>,
      %cst_31 = arith.constant 0.000000e+00 : f32
      %51 = vector.broadcast %cst_31 : f32 to vector<16x128xf32>
      %c0_32 = arith.constant 0 : index
      %c0_33 = arith.constant 0 : index
      %52 = vector.load %arg11[%c0_32, %c0_33] : memref<16x128xf32, #tpu.memory_space<vmem>>, vector<16x128xf32>
      tpu.vector_store %arg11[%c0_32, %c0_33], %51 {strides = array<i32>} : memref<16x128xf32, #tpu.memory_space<vmem>>, vector<16x128xf32>,
    } else {
    }
    %c0 = arith.constant 0 : index
    %c0_1 = arith.constant 0 : index
    %3 = vector.load %arg10[%c0, %c0_1] : memref<16x128xbf16, #tpu.memory_space<vmem>>, vector<16x128xbf16>
    %c0_2 = arith.constant 0 : index
    %c0_3 = arith.constant 0 : index
    %4 = vector.load %arg5[%c0_2, %c0_3] : memref<128x512xbf16, #tpu.memory_space<vmem>>, vector<128x512xbf16>
    %cst = arith.constant dense<0.000000e+00> : vector<16x512xf32>
    %5 = tpu.matmul %3, %4, %cst {dimension_numbers = #tpu.dot_dimension_numbers<[1], [0], [0], [1], [0, 0, 1, 1], [], []>} : vector<16x128xbf16>, vector<128x512xbf16>, vector<16x512xf32> -> vector<16x512xf32>
    %c0_4 = arith.constant 0 : index
    %c0_5 = arith.constant 0 : index
    %6 = vector.load %arg6[%c0_4, %c0_5] : memref<1x512xf32, #tpu.memory_space<vmem>>, vector<1x512xf32>
    %7 = vector.broadcast %6 : vector<1x512xf32> to vector<16x512xf32>
    %8 = arith.addf %5, %7 : vector<16x512xf32>
    %cst_6 = arith.constant 5.000000e-01 : f32
    %9 = vector.broadcast %cst_6 : f32 to vector<16x512xf32>
    %10 = arith.mulf %9, %8 : vector<16x512xf32>
    %cst_7 = arith.constant 0.707106769 : f32
    %11 = vector.broadcast %cst_7 : f32 to vector<16x512xf32>
    %12 = arith.mulf %8, %11 : vector<16x512xf32>
    %13 = math.erf %12 : vector<16x512xf32>
    %cst_8 = arith.constant 1.000000e+00 : f32
    %14 = vector.broadcast %cst_8 : f32 to vector<16x512xf32>
    %15 = arith.addf %14, %13 : vector<16x512xf32>
    %16 = arith.mulf %10, %15 : vector<16x512xf32>
    %c0_9 = arith.constant 0 : index
    %c0_10 = arith.constant 0 : index
    %17 = vector.load %arg11[%c0_9, %c0_10] : memref<16x128xf32, #tpu.memory_space<vmem>>, vector<16x128xf32>
    %18 = arith.truncf %16 : vector<16x512xf32> to vector<16x512xbf16>
    %c0_11 = arith.constant 0 : index
    %c0_12 = arith.constant 0 : index
    %19 = vector.load %arg7[%c0_11, %c0_12] : memref<512x128xbf16, #tpu.memory_space<vmem>>, vector<512x128xbf16>
    %cst_13 = arith.constant dense<0.000000e+00> : vector<16x128xf32>
    %20 = tpu.matmul %18, %19, %cst_13 {dimension_numbers = #tpu.dot_dimension_numbers<[1], [0], [0], [1], [0, 0, 1, 1], [], []>} : vector<16x512xbf16>, vector<512x128xbf16>, vector<16x128xf32> -> vector<16x128xf32>
    %21 = arith.addf %17, %20 : vector<16x128xf32>
    %c0_14 = arith.constant 0 : index
    %c0_15 = arith.constant 0 : index
    %22 = vector.load %arg11[%c0_14, %c0_15] : memref<16x128xf32, #tpu.memory_space<vmem>>, vector<16x128xf32>
    tpu.vector_store %arg11[%c0_14, %c0_15], %21 {strides = array<i32>} : memref<16x128xf32, #tpu.memory_space<vmem>>, vector<16x128xf32>,
    %c0_i32_16 = arith.constant 0 : i32
    %23 = arith.cmpi eq, %arg1, %c0_i32_16 : i32
    %24 = arith.extui %23 : i1 to i32
    %c0_i32_17 = arith.constant 0 : i32
    %25 = arith.cmpi ne, %24, %c0_i32_17 : i32
    scf.if %25 {
      %c0_18 = arith.constant 0 : index
      %c0_19 = arith.constant 0 : index
      %26 = vector.load %arg2[%c0_18, %c0_19] : memref<16x128xf32, #tpu.memory_space<vmem>>, vector<16x128xf32>
      %c0_20 = arith.constant 0 : index
      %c0_21 = arith.constant 0 : index
      %27 = vector.load %arg11[%c0_20, %c0_21] : memref<16x128xf32, #tpu.memory_space<vmem>>, vector<16x128xf32>
      %28 = arith.addf %26, %27 : vector<16x128xf32>
      %c0_22 = arith.constant 0 : index
      %c0_23 = arith.constant 0 : index
      %29 = vector.load %arg8[%c0_22, %c0_23] : memref<1x128xf32, #tpu.memory_space<vmem>>, vector<1x128xf32>
      %30 = vector.broadcast %29 : vector<1x128xf32> to vector<16x128xf32>
      %31 = arith.addf %28, %30 : vector<16x128xf32>
      %c0_24 = arith.constant 0 : index
      %c0_25 = arith.constant 0 : index
      %32 = vector.load %arg9[%c0_24, %c0_25] : memref<16x128xf32, #tpu.memory_space<vmem>>, vector<16x128xf32>
      tpu.vector_store %arg9[%c0_24, %c0_25], %31 {strides = array<i32>} : memref<16x128xf32, #tpu.memory_space<vmem>>, vector<16x128xf32>,
    } else {
    }
    return
  }
  func.func @transform_0(%arg0: i32, %arg1: i32) -> (i32, i32) {
    %c0_i32 = arith.constant 0 : i32
    %c0_i32_0 = arith.constant 0 : i32
    return %arg0, %c0_i32 : i32, i32
  }
  func.func @transform_1(%arg0: i32, %arg1: i32) -> (i32, i32) {
    %c0_i32 = arith.constant 0 : i32
    %c0_i32_0 = arith.constant 0 : i32
    %c0_i32_1 = arith.constant 0 : i32
    return %c0_i32, %c0_i32_0 : i32, i32
  }
  func.func @transform_2(%arg0: i32, %arg1: i32) -> (i32, i32) {
    %c0_i32 = arith.constant 0 : i32
    %c0_i32_0 = arith.constant 0 : i32
    %c0_i32_1 = arith.constant 0 : i32
    return %c0_i32, %c0_i32_0 : i32, i32
  }
  func.func @transform_3(%arg0: i32, %arg1: i32) -> (i32, i32) {
    %c0_i32 = arith.constant 0 : i32
    %c0_i32_0 = arith.constant 0 : i32
    return %c0_i32, %arg1 : i32, i32
  }
  func.func @transform_4(%arg0: i32, %arg1: i32) -> (i32, i32) {
    %c0_i32 = arith.constant 0 : i32
    %c0_i32_0 = arith.constant 0 : i32
    return %c0_i32, %arg1 : i32, i32
  }
  func.func @transform_5(%arg0: i32, %arg1: i32) -> (i32, i32) {
    %c0_i32 = arith.constant 0 : i32
    %c0_i32_0 = arith.constant 0 : i32
    return %arg1, %c0_i32 : i32, i32
  }
  func.func @transform_6(%arg0: i32, %arg1: i32) -> (i32, i32) {
    %c0_i32 = arith.constant 0 : i32
    %c0_i32_0 = arith.constant 0 : i32
    %c0_i32_1 = arith.constant 0 : i32
    return %c0_i32, %c0_i32_0 : i32, i32
  }
  func.func @transform_7(%arg0: i32, %arg1: i32) -> (i32, i32) {
    %c0_i32 = arith.constant 0 : i32
    %c0_i32_0 = arith.constant 0 : i32
    return %arg0, %c0_i32 : i32, i32
  }
}

module attributes {stable_mosaic.version = 11 : i64} {
  func.func @_ln_ffn_residual_kernel(%arg0: i32, %arg1: i32, %arg2: memref<32x128xf32, #tpu.memory_space<vmem>>, %arg3: memref<1x128xf32, #tpu.memory_space<vmem>>, %arg4: memref<1x128xf32, #tpu.memory_space<vmem>>, %arg5: memref<128x512xbf16, #tpu.memory_space<vmem>>, %arg6: memref<1x512xf32, #tpu.memory_space<vmem>>, %arg7: memref<512x128xbf16, #tpu.memory_space<vmem>>, %arg8: memref<1x128xf32, #tpu.memory_space<vmem>>, %arg9: memref<32x128xf32, #tpu.memory_space<vmem>>, %arg10: memref<32x128xbf16, #tpu.memory_space<vmem>>, %arg11: memref<32x128xf32, #tpu.memory_space<vmem>>) attributes {dimension_semantics = [#tpu.dimension_semantics<parallel>, #tpu.dimension_semantics<arbitrary>], iteration_bounds = array<i64: 1, 1>, scalar_prefetch = 0 : i64, scratch_operands = 2 : i64, tpu.core_type = #tpu.core_type<tc>, window_params = [{transform_indices = @transform_0, window_bounds = array<i64: 32, 128>}, {pipeline_mode = #tpu.pipeline_mode<synchronous>, transform_indices = @transform_1, window_bounds = array<i64: 1, 128>}, {pipeline_mode = #tpu.pipeline_mode<synchronous>, transform_indices = @transform_2, window_bounds = array<i64: 1, 128>}, {transform_indices = @transform_3, window_bounds = array<i64: 128, 512>}, {transform_indices = @transform_4, window_bounds = array<i64: 1, 512>}, {transform_indices = @transform_5, window_bounds = array<i64: 512, 128>}, {pipeline_mode = #tpu.pipeline_mode<synchronous>, transform_indices = @transform_6, window_bounds = array<i64: 1, 128>}, {transform_indices = @transform_7, window_bounds = array<i64: 32, 128>}]} {
    %c0_i32 = arith.constant 0 : i32
    %0 = arith.cmpi eq, %arg1, %c0_i32 : i32
    %1 = arith.extui %0 : i1 to i32
    %c0_i32_0 = arith.constant 0 : i32
    %2 = arith.cmpi ne, %1, %c0_i32_0 : i32
    scf.if %2 {
      %c0_18 = arith.constant 0 : index
      %c0_19 = arith.constant 0 : index
      %26 = vector.load %arg2[%c0_18, %c0_19] : memref<32x128xf32, #tpu.memory_space<vmem>>, vector<32x128xf32>
      %cst_20 = arith.constant dense<0.000000e+00> : vector<32xf32>
      %27 = vector.multi_reduction <add>, %26, %cst_20 [1] : vector<32x128xf32> to vector<32xf32>
      %28 = vector.shape_cast %27 : vector<32xf32> to vector<32x1xf32>
      %cst_21 = arith.constant 1.280000e+02 : f32
      %29 = vector.broadcast %cst_21 : f32 to vector<32x1xf32>
      %30 = arith.divf %28, %29 : vector<32x1xf32>
      %31 = vector.broadcast %30 : vector<32x1xf32> to vector<32x128xf32>
      %32 = arith.subf %26, %31 : vector<32x128xf32>
      %33 = arith.mulf %32, %32 : vector<32x128xf32>
      %cst_22 = arith.constant dense<0.000000e+00> : vector<32xf32>
      %34 = vector.multi_reduction <add>, %33, %cst_22 [1] : vector<32x128xf32> to vector<32xf32>
      %35 = vector.shape_cast %34 : vector<32xf32> to vector<32x1xf32>
      %cst_23 = arith.constant 1.280000e+02 : f32
      %36 = vector.broadcast %cst_23 : f32 to vector<32x1xf32>
      %37 = arith.divf %35, %36 : vector<32x1xf32>
      %cst_24 = arith.constant 9.99999974E-6 : f32
      %38 = vector.broadcast %cst_24 : f32 to vector<32x1xf32>
      %39 = arith.addf %37, %38 : vector<32x1xf32>
      %40 = math.rsqrt %39 : vector<32x1xf32>
      %41 = vector.broadcast %40 : vector<32x1xf32> to vector<32x128xf32>
      %42 = arith.mulf %32, %41 : vector<32x128xf32>
      %c0_25 = arith.constant 0 : index
      %c0_26 = arith.constant 0 : index
      %43 = vector.load %arg3[%c0_25, %c0_26] : memref<1x128xf32, #tpu.memory_space<vmem>>, vector<1x128xf32>
      %44 = vector.broadcast %43 : vector<1x128xf32> to vector<32x128xf32>
      %45 = arith.mulf %42, %44 : vector<32x128xf32>
      %c0_27 = arith.constant 0 : index
      %c0_28 = arith.constant 0 : index
      %46 = vector.load %arg4[%c0_27, %c0_28] : memref<1x128xf32, #tpu.memory_space<vmem>>, vector<1x128xf32>
      %47 = vector.broadcast %46 : vector<1x128xf32> to vector<32x128xf32>
      %48 = arith.addf %45, %47 : vector<32x128xf32>
      %49 = arith.truncf %48 : vector<32x128xf32> to vector<32x128xbf16>
      %c0_29 = arith.constant 0 : index
      %c0_30 = arith.constant 0 : index
      %50 = vector.load %arg10[%c0_29, %c0_30] : memref<32x128xbf16, #tpu.memory_space<vmem>>, vector<32x128xbf16>
      tpu.vector_store %arg10[%c0_29, %c0_30], %49 {strides = array<i32>} : memref<32x128xbf16, #tpu.memory_space<vmem>>, vector<32x128xbf16>,
      %cst_31 = arith.constant 0.000000e+00 : f32
      %51 = vector.broadcast %cst_31 : f32 to vector<32x128xf32>
      %c0_32 = arith.constant 0 : index
      %c0_33 = arith.constant 0 : index
      %52 = vector.load %arg11[%c0_32, %c0_33] : memref<32x128xf32, #tpu.memory_space<vmem>>, vector<32x128xf32>
      tpu.vector_store %arg11[%c0_32, %c0_33], %51 {strides = array<i32>} : memref<32x128xf32, #tpu.memory_space<vmem>>, vector<32x128xf32>,
    } else {
    }
    %c0 = arith.constant 0 : index
    %c0_1 = arith.constant 0 : index
    %3 = vector.load %arg10[%c0, %c0_1] : memref<32x128xbf16, #tpu.memory_space<vmem>>, vector<32x128xbf16>
    %c0_2 = arith.constant 0 : index
    %c0_3 = arith.constant 0 : index
    %4 = vector.load %arg5[%c0_2, %c0_3] : memref<128x512xbf16, #tpu.memory_space<vmem>>, vector<128x512xbf16>
    %cst = arith.constant dense<0.000000e+00> : vector<32x512xf32>
    %5 = tpu.matmul %3, %4, %cst {dimension_numbers = #tpu.dot_dimension_numbers<[1], [0], [0], [1], [0, 0, 1, 1], [], []>} : vector<32x128xbf16>, vector<128x512xbf16>, vector<32x512xf32> -> vector<32x512xf32>
    %c0_4 = arith.constant 0 : index
    %c0_5 = arith.constant 0 : index
    %6 = vector.load %arg6[%c0_4, %c0_5] : memref<1x512xf32, #tpu.memory_space<vmem>>, vector<1x512xf32>
    %7 = vector.broadcast %6 : vector<1x512xf32> to vector<32x512xf32>
    %8 = arith.addf %5, %7 : vector<32x512xf32>
    %cst_6 = arith.constant 5.000000e-01 : f32
    %9 = vector.broadcast %cst_6 : f32 to vector<32x512xf32>
    %10 = arith.mulf %9, %8 : vector<32x512xf32>
    %cst_7 = arith.constant 0.707106769 : f32
    %11 = vector.broadcast %cst_7 : f32 to vector<32x512xf32>
    %12 = arith.mulf %8, %11 : vector<32x512xf32>
    %13 = math.erf %12 : vector<32x512xf32>
    %cst_8 = arith.constant 1.000000e+00 : f32
    %14 = vector.broadcast %cst_8 : f32 to vector<32x512xf32>
    %15 = arith.addf %14, %13 : vector<32x512xf32>
    %16 = arith.mulf %10, %15 : vector<32x512xf32>
    %c0_9 = arith.constant 0 : index
    %c0_10 = arith.constant 0 : index
    %17 = vector.load %arg11[%c0_9, %c0_10] : memref<32x128xf32, #tpu.memory_space<vmem>>, vector<32x128xf32>
    %18 = arith.truncf %16 : vector<32x512xf32> to vector<32x512xbf16>
    %c0_11 = arith.constant 0 : index
    %c0_12 = arith.constant 0 : index
    %19 = vector.load %arg7[%c0_11, %c0_12] : memref<512x128xbf16, #tpu.memory_space<vmem>>, vector<512x128xbf16>
    %cst_13 = arith.constant dense<0.000000e+00> : vector<32x128xf32>
    %20 = tpu.matmul %18, %19, %cst_13 {dimension_numbers = #tpu.dot_dimension_numbers<[1], [0], [0], [1], [0, 0, 1, 1], [], []>} : vector<32x512xbf16>, vector<512x128xbf16>, vector<32x128xf32> -> vector<32x128xf32>
    %21 = arith.addf %17, %20 : vector<32x128xf32>
    %c0_14 = arith.constant 0 : index
    %c0_15 = arith.constant 0 : index
    %22 = vector.load %arg11[%c0_14, %c0_15] : memref<32x128xf32, #tpu.memory_space<vmem>>, vector<32x128xf32>
    tpu.vector_store %arg11[%c0_14, %c0_15], %21 {strides = array<i32>} : memref<32x128xf32, #tpu.memory_space<vmem>>, vector<32x128xf32>,
    %c0_i32_16 = arith.constant 0 : i32
    %23 = arith.cmpi eq, %arg1, %c0_i32_16 : i32
    %24 = arith.extui %23 : i1 to i32
    %c0_i32_17 = arith.constant 0 : i32
    %25 = arith.cmpi ne, %24, %c0_i32_17 : i32
    scf.if %25 {
      %c0_18 = arith.constant 0 : index
      %c0_19 = arith.constant 0 : index
      %26 = vector.load %arg2[%c0_18, %c0_19] : memref<32x128xf32, #tpu.memory_space<vmem>>, vector<32x128xf32>
      %c0_20 = arith.constant 0 : index
      %c0_21 = arith.constant 0 : index
      %27 = vector.load %arg11[%c0_20, %c0_21] : memref<32x128xf32, #tpu.memory_space<vmem>>, vector<32x128xf32>
      %28 = arith.addf %26, %27 : vector<32x128xf32>
      %c0_22 = arith.constant 0 : index
      %c0_23 = arith.constant 0 : index
      %29 = vector.load %arg8[%c0_22, %c0_23] : memref<1x128xf32, #tpu.memory_space<vmem>>, vector<1x128xf32>
      %30 = vector.broadcast %29 : vector<1x128xf32> to vector<32x128xf32>
      %31 = arith.addf %28, %30 : vector<32x128xf32>
      %c0_24 = arith.constant 0 : index
      %c0_25 = arith.constant 0 : index
      %32 = vector.load %arg9[%c0_24, %c0_25] : memref<32x128xf32, #tpu.memory_space<vmem>>, vector<32x128xf32>
      tpu.vector_store %arg9[%c0_24, %c0_25], %31 {strides = array<i32>} : memref<32x128xf32, #tpu.memory_space<vmem>>, vector<32x128xf32>,
    } else {
    }
    return
  }
  func.func @transform_0(%arg0: i32, %arg1: i32) -> (i32, i32) {
    %c0_i32 = arith.constant 0 : i32
    %c0_i32_0 = arith.constant 0 : i32
    return %arg0, %c0_i32 : i32, i32
  }
  func.func @transform_1(%arg0: i32, %arg1: i32) -> (i32, i32) {
    %c0_i32 = arith.constant 0 : i32
    %c0_i32_0 = arith.constant 0 : i32
    %c0_i32_1 = arith.constant 0 : i32
    return %c0_i32, %c0_i32_0 : i32, i32
  }
  func.func @transform_2(%arg0: i32, %arg1: i32) -> (i32, i32) {
    %c0_i32 = arith.constant 0 : i32
    %c0_i32_0 = arith.constant 0 : i32
    %c0_i32_1 = arith.constant 0 : i32
    return %c0_i32, %c0_i32_0 : i32, i32
  }
  func.func @transform_3(%arg0: i32, %arg1: i32) -> (i32, i32) {
    %c0_i32 = arith.constant 0 : i32
    %c0_i32_0 = arith.constant 0 : i32
    return %c0_i32, %arg1 : i32, i32
  }
  func.func @transform_4(%arg0: i32, %arg1: i32) -> (i32, i32) {
    %c0_i32 = arith.constant 0 : i32
    %c0_i32_0 = arith.constant 0 : i32
    return %c0_i32, %arg1 : i32, i32
  }
  func.func @transform_5(%arg0: i32, %arg1: i32) -> (i32, i32) {
    %c0_i32 = arith.constant 0 : i32
    %c0_i32_0 = arith.constant 0 : i32
    return %arg1, %c0_i32 : i32, i32
  }
  func.func @transform_6(%arg0: i32, %arg1: i32) -> (i32, i32) {
    %c0_i32 = arith.constant 0 : i32
    %c0_i32_0 = arith.constant 0 : i32
    %c0_i32_1 = arith.constant 0 : i32
    return %c0_i32, %c0_i32_0 : i32, i32
  }
  func.func @transform_7(%arg0: i32, %arg1: i32) -> (i32, i32) {
    %c0_i32 = arith.constant 0 : i32
    %c0_i32_0 = arith.constant 0 : i32
    return %arg0, %c0_i32 : i32, i32
  }
}

</mosaic_0001>

<llo_original>
// kernel: cross_attention_block.8
$region0: #{cross_attention_block.8}
  #allocation0 [shape = 'u32[]', space=smem, size = 0x4, offset = 0x4, fixed_abs, tag = 'smem constant byte address 0x4 - core index']
  #allocation1 [shape = 'u32[144,128]{1,0:T(1,128)}', space=vmem, size = 0x12000, scoped, tag = 'internal scratch']
  %s0 = inlined_call_operand.vmem [shape: f32[32,128], index: 0, kind: input, shape index: {}]
  %s1 = inlined_call_operand.vmem [shape: f32[1,128], index: 1, kind: input, shape index: {}]
  %s2 = inlined_call_operand.vmem [shape: f32[1,128], index: 2, kind: input, shape index: {}]
  %s3 = inlined_call_operand.vmem [shape: bf16[128,128], index: 3, kind: input, shape index: {}]
  %s4 = inlined_call_operand.vmem [shape: f32[1,128], index: 4, kind: input, shape index: {}]
  %s5 = inlined_call_operand.vmem [shape: f32[32,128], index: 5, kind: output, shape index: {}]
  %s6 = sld [smem:[#allocation0]]
  $region30: #{cross_attention_block.8} parent=0
    _
  %s8 = ssub.s32 1, %s6
  %s9 = scalar_select 0, %s8, %s6
  // Predicated region
  $region2: #{cross_attention_block.8} parent=0 // pred_check
    _
  $region3: #{cross_attention_block.8} parent=0 // pred_check_branch
    %11 = sbr.rel (0) target = $region5
  $region4: #{cross_attention_block.8} parent=0 // pred_region
    _
  $region5: #{cross_attention_block.8} parent=0 // pred_fallthru
    _
  // Predicated region
  $region6: #{cross_attention_block.8} parent=0 // pred_check
    _
  $region7: #{cross_attention_block.8} parent=0 // pred_check_branch
    %13 = sbr.rel (0) target = $region9
  $region8: #{cross_attention_block.8} parent=0 // pred_region
    _
  $region9: #{cross_attention_block.8} parent=0 // pred_fallthru
    _
  // Predicated region
  $region10: #{cross_attention_block.8} parent=0 // pred_check
    _
  $region11: #{cross_attention_block.8} parent=0 // pred_check_branch
    %15 = sbr.rel (0) target = $region13
  $region12: #{cross_attention_block.8} parent=0 // pred_region
    _
  $region13: #{cross_attention_block.8} parent=0 // pred_fallthru
    _
  // Predicated region
  $region14: #{cross_attention_block.8} parent=0 // pred_check
    _
  $region15: #{cross_attention_block.8} parent=0 // pred_check_branch
    %17 = sbr.rel (0) target = $region17
  $region16: #{cross_attention_block.8} parent=0 // pred_region
    _
  $region17: #{cross_attention_block.8} parent=0 // pred_fallthru
    _
  // Predicated region
  $region18: #{cross_attention_block.8} parent=0 // pred_check
    _
  $region19: #{cross_attention_block.8} parent=0 // pred_check_branch
    %19 = sbr.rel (0) target = $region21
  $region20: #{cross_attention_block.8} parent=0 // pred_region
    _
  $region21: #{cross_attention_block.8} parent=0 // pred_fallthru
    _
  %v21 = vld [vmem:[%s0] sm:$0xff]
  %v22 = vld [vmem:[%s0 + $0x8] sm:$0xff]
  %v23 = vld [vmem:[%s0 + $0x10] sm:$0xff]
  %v24 = vld [vmem:[%s0 + $0x18] sm:$0xff]
  %25 = vadd.xlane.f32.xlu0 %v21
  %v26 = vpop.xlane.xlu0 %25
  %27 = vadd.xlane.f32.xlu0 %v22
  %v28 = vpop.xlane.xlu0 %27
  %29 = vadd.xlane.f32.xlu0 %v23
  %v30 = vpop.xlane.xlu0 %29
  %31 = vadd.xlane.f32.xlu0 %v24
  %v32 = vpop.xlane.xlu0 %31
  %v33 = vrcp.pop 128.0
  %v34 = vmul.f32 %v26, %v33
  %v35 = vmul.f32 %v28, %v33
  %v36 = vmul.f32 %v30, %v33
  %v37 = vmul.f32 %v32, %v33
  %v38 = vsub.f32 %v21, %v34
  %v39 = vsub.f32 %v22, %v35
  %v40 = vsub.f32 %v23, %v36
  %v41 = vsub.f32 %v24, %v37
  %v42 = vmul.f32 %v38, %v38
  %v43 = vmul.f32 %v39, %v39
  %v44 = vmul.f32 %v40, %v40
  %v45 = vmul.f32 %v41, %v41
  %46 = vadd.xlane.f32.xlu0 %v42
  %v47 = vpop.xlane.xlu0 %46
  %48 = vadd.xlane.f32.xlu0 %v43
  %v49 = vpop.xlane.xlu0 %48
  %50 = vadd.xlane.f32.xlu0 %v44
  %v51 = vpop.xlane.xlu0 %50
  %52 = vadd.xlane.f32.xlu0 %v45
  %v53 = vpop.xlane.xlu0 %52
  %v54 = vmul.f32 %v47, %v33
  %v55 = vmul.f32 %v49, %v33
  %v56 = vmul.f32 %v51, %v33
  %v57 = vmul.f32 %v53, %v33
  %v58 = vadd.f32 %v54, 1e-05
  %v59 = vadd.f32 %v55, 1e-05
  %v60 = vadd.f32 %v56, 1e-05
  %v61 = vadd.f32 %v57, 1e-05
  %v62 = vrsqrt.pop %v58
  %v63 = vrsqrt.pop %v59
  %v64 = vrsqrt.pop %v60
  %v65 = vrsqrt.pop %v61
  %v66 = vmul.f32 %v38, %v62
  %v67 = vmul.f32 %v39, %v63
  %v68 = vmul.f32 %v40, %v64
  %v69 = vmul.f32 %v41, %v65
  %v70 = vld [vmem:[%s1] sm:$0x1]
  %v72 = vlaneseq
  %v73 = vshrl.u32 %v72, 7
  %v74 = vsub.s32 0, %v73
  %v75 = vrot.slane %v70, %v74
  %v77 = vmul.f32 %v66, %v75
  %v78 = vmul.f32 %v67, %v75
  %v79 = vmul.f32 %v68, %v75
  %v80 = vmul.f32 %v69, %v75
  %v81 = vld [vmem:[%s2] sm:$0x1]
  %v83 = vlaneseq
  %v84 = vshrl.u32 %v83, 7
  %v85 = vsub.s32 0, %v84
  %v86 = vrot.slane %v81, %v85
  %v88 = vadd.f32 %v77, %v86
  %v89 = vadd.f32 %v78, %v86
  %v90 = vadd.f32 %v79, %v86
  %v91 = vadd.f32 %v80, %v86
  %v92 = vpack.c.bf16 %v89, %v88
  %v93 = vpack.c.bf16 %v91, %v90
  %v94 = vld [vmem:[%s3] sm:$0xf]
  %v95 = vld [vmem:[%s3 + $0x4] sm:$0xf]
  %v96 = vld [vmem:[%s3 + $0x8] sm:$0xf]
  %v97 = vld [vmem:[%s3 + $0xc] sm:$0xf]
  %v98 = vld [vmem:[%s3 + $0x10] sm:$0xf]
  %v99 = vld [vmem:[%s3 + $0x14] sm:$0xf]
  %v100 = vld [vmem:[%s3 + $0x18] sm:$0xf]
  %v101 = vld [vmem:[%s3 + $0x1c] sm:$0xf]
  %v102 = vld [vmem:[%s3 + $0x20] sm:$0xf]
  %v103 = vld [vmem:[%s3 + $0x24] sm:$0xf]
  %v104 = vld [vmem:[%s3 + $0x28] sm:$0xf]
  %v105 = vld [vmem:[%s3 + $0x2c] sm:$0xf]
  %v106 = vld [vmem:[%s3 + $0x30] sm:$0xf]
  %v107 = vld [vmem:[%s3 + $0x34] sm:$0xf]
  %v108 = vld [vmem:[%s3 + $0x38] sm:$0xf]
  %v109 = vld [vmem:[%s3 + $0x3c] sm:$0xf]
  %v110 = vld [vmem:[%s4] sm:$0x1]
  %v112 = vlaneseq
  %v113 = vshrl.u32 %v112, 7
  %v114 = vsub.s32 0, %v113
  %v115 = vrot.slane %v110, %v114
  %v133 = vunpack.c.l.b16 %v94
  %v134 = vunpack.c.l.b16 %v95
  %v135 = vunpack.c.l.b16 %v96
  %v136 = vunpack.c.l.b16 %v97
  %v137 = vunpack.c.l.b16 %v98
  %v138 = vunpack.c.l.b16 %v99
  %v139 = vunpack.c.l.b16 %v100
  %v140 = vunpack.c.l.b16 %v101
  %v141 = vunpack.c.l.b16 %v102
  %v142 = vunpack.c.l.b16 %v103
  %v143 = vunpack.c.l.b16 %v104
  %v144 = vunpack.c.l.b16 %v105
  %v145 = vunpack.c.l.b16 %v106
  %v146 = vunpack.c.l.b16 %v107
  %v147 = vunpack.c.l.b16 %v108
  %v148 = vunpack.c.l.b16 %v109
  %v149 = vpack.c.b16 %v134, %v133
  %v150 = vpack.c.b16 %v136, %v135
  %v151 = vpack.c.b16 %v138, %v137
  %v152 = vpack.c.b16 %v140, %v139
  %v153 = vpack.c.b16 %v142, %v141
  %v154 = vpack.c.b16 %v144, %v143
  %v155 = vpack.c.b16 %v146, %v145
  %v156 = vpack.c.b16 %v148, %v147
  %165 = vmatprep.subr.bf16.mxu0 0
  %166 = vmatpush1.bf16.msra.mxu0 %v156
  %167 = vmatprep.subr.bf16.mxu0 0
  %168 = vmatpush1.bf16.msra.mxu0 %v155
  %169 = vmatprep.subr.bf16.mxu0 0
  %170 = vmatpush1.bf16.msra.mxu0 %v154
  %171 = vmatprep.subr.bf16.mxu0 0
  %172 = vmatpush1.bf16.msra.mxu0 %v153
  %173 = vmatprep.subr.bf16.mxu0 0
  %174 = vmatpush1.bf16.msra.mxu0 %v152
  %175 = vmatprep.subr.bf16.mxu0 0
  %176 = vmatpush1.bf16.msra.mxu0 %v151
  %177 = vmatprep.subr.bf16.mxu0 0
  %178 = vmatpush1.bf16.msra.mxu0 %v150
  %179 = vmatprep.subr.bf16.mxu0 0
  %180 = vmatpush1.bf16.msra.mxu0 %v149
  %181 = vmatprep.subr.bf16.mxu0 0
  %182 = vmatpush2.bf16.msra.mxu0 0
  %183 = vmatprep.subr.bf16.mxu0 0
  %184 = vmatpush2.bf16.msra.mxu0 0
  %185 = vmatprep.subr.bf16.mxu0 0
  %186 = vmatpush2.bf16.msra.mxu0 0
  %187 = vmatprep.subr.bf16.mxu0 0
  %188 = vmatpush2.bf16.msra.mxu0 0
  %189 = vmatprep.subr.bf16.mxu0 0
  %190 = vmatpush2.bf16.msra.mxu0 0
  %191 = vmatprep.subr.bf16.mxu0 0
  %192 = vmatpush2.bf16.msra.mxu0 0
  %193 = vmatprep.subr.bf16.mxu0 0
  %194 = vmatpush2.bf16.msra.mxu0 0
  %195 = vmatprep.subr.bf16.mxu0 0
  %196 = vmatpush2.bf16.msra.mxu0 0
  %197 = vmatprep.mubr.bf16.mxu0 0
  %198 = vmatmul.mubr.bf16.gmra.mxu0 %v92
  %v199 = vpop.f32.mrf.mxu0
  %v200 = vadd.f32 %v115, %v199
  %v201 = vpop.f32.mrf.mxu0
  %v202 = vpop.f32.mrf.mxu0
  %v203 = vadd.f32 %v115, %v202
  %v204 = vpop.f32.mrf.mxu0
  %205 = vmatprep.mubr.bf16.mxu0 0
  %206 = vmatmul.mubr.bf16.gmra.mxu0 %v93
  %v207 = vpop.f32.mrf.mxu0
  %v208 = vadd.f32 %v115, %v207
  %v209 = vpop.f32.mrf.mxu0
  %v210 = vpop.f32.mrf.mxu0
  %v211 = vadd.f32 %v115, %v210
  %v212 = vpop.f32.mrf.mxu0
  %213 = vdwg.mxu0
  %214 = vst [vmem:[%s5] sm:$0xff] %v200
  %215 = vst [vmem:[%s5 + $0x8] sm:$0xff] %v203
  %216 = vst [vmem:[%s5 + $0x10] sm:$0xff] %v208
  %217 = vst [vmem:[%s5 + $0x18] sm:$0xff] %v211
  // Predicated region
  $region22: #{cross_attention_block.8} parent=0 // pred_check
    _
  $region23: #{cross_attention_block.8} parent=0 // pred_check_branch
    %219 = sbr.rel (0) target = $region25
  $region24: #{cross_attention_block.8} parent=0 // pred_region
    _
  $region25: #{cross_attention_block.8} parent=0 // pred_fallthru
    _
  // Predicated region
  $region26: #{cross_attention_block.8} parent=0 // pred_check
    _
  $region27: #{cross_attention_block.8} parent=0 // pred_check_branch
    %221 = sbr.rel (0) target = $region29
  $region28: #{cross_attention_block.8} parent=0 // pred_region
    _
  $region29: #{cross_attention_block.8} parent=0 // pred_fallthru
    _

// kernel: cross_attention_block.7
$region0: #{cross_attention_block.7}
  #allocation0 [shape = 'u32[]', space=smem, size = 0x4, offset = 0x4, fixed_abs, tag = 'smem constant byte address 0x4 - core index']
  #allocation1 [shape = 'u32[144,128]{1,0:T(1,128)}', space=vmem, size = 0x12000, scoped, tag = 'internal scratch']
  %s0 = inlined_call_operand.vmem [shape: f32[16,128], index: 0, kind: input, shape index: {}]
  %s1 = inlined_call_operand.vmem [shape: f32[1,128], index: 1, kind: input, shape index: {}]
  %s2 = inlined_call_operand.vmem [shape: f32[1,128], index: 2, kind: input, shape index: {}]
  %s3 = inlined_call_operand.vmem [shape: bf16[128,128], index: 3, kind: input, shape index: {}]
  %s4 = inlined_call_operand.vmem [shape: f32[1,128], index: 4, kind: input, shape index: {}]
  %s5 = inlined_call_operand.vmem [shape: f32[16,128], index: 5, kind: output, shape index: {}]
  %s6 = sld [smem:[#allocation0]]
  $region30: #{cross_attention_block.7} parent=0
    _
  %s8 = ssub.s32 1, %s6
  %s9 = scalar_select 0, %s8, %s6
  // Predicated region
  $region2: #{cross_attention_block.7} parent=0 // pred_check
    _
  $region3: #{cross_attention_block.7} parent=0 // pred_check_branch
    %11 = sbr.rel (0) target = $region5
  $region4: #{cross_attention_block.7} parent=0 // pred_region
    _
  $region5: #{cross_attention_block.7} parent=0 // pred_fallthru
    _
  // Predicated region
  $region6: #{cross_attention_block.7} parent=0 // pred_check
    _
  $region7: #{cross_attention_block.7} parent=0 // pred_check_branch
    %13 = sbr.rel (0) target = $region9
  $region8: #{cross_attention_block.7} parent=0 // pred_region
    _
  $region9: #{cross_attention_block.7} parent=0 // pred_fallthru
    _
  // Predicated region
  $region10: #{cross_attention_block.7} parent=0 // pred_check
    _
  $region11: #{cross_attention_block.7} parent=0 // pred_check_branch
    %15 = sbr.rel (0) target = $region13
  $region12: #{cross_attention_block.7} parent=0 // pred_region
    _
  $region13: #{cross_attention_block.7} parent=0 // pred_fallthru
    _
  // Predicated region
  $region14: #{cross_attention_block.7} parent=0 // pred_check
    _
  $region15: #{cross_attention_block.7} parent=0 // pred_check_branch
    %17 = sbr.rel (0) target = $region17
  $region16: #{cross_attention_block.7} parent=0 // pred_region
    _
  $region17: #{cross_attention_block.7} parent=0 // pred_fallthru
    _
  // Predicated region
  $region18: #{cross_attention_block.7} parent=0 // pred_check
    _
  $region19: #{cross_attention_block.7} parent=0 // pred_check_branch
    %19 = sbr.rel (0) target = $region21
  $region20: #{cross_attention_block.7} parent=0 // pred_region
    _
  $region21: #{cross_attention_block.7} parent=0 // pred_fallthru
    _
  %v21 = vld [vmem:[%s0] sm:$0xff]
  %v22 = vld [vmem:[%s0 + $0x8] sm:$0xff]
  %23 = vadd.xlane.f32.xlu0 %v21
  %v24 = vpop.xlane.xlu0 %23
  %25 = vadd.xlane.f32.xlu0 %v22
  %v26 = vpop.xlane.xlu0 %25
  %v27 = vrcp.pop 128.0
  %v28 = vmul.f32 %v24, %v27
  %v29 = vmul.f32 %v26, %v27
  %v30 = vsub.f32 %v21, %v28
  %v31 = vsub.f32 %v22, %v29
  %v32 = vmul.f32 %v30, %v30
  %v33 = vmul.f32 %v31, %v31
  %34 = vadd.xlane.f32.xlu0 %v32
  %v35 = vpop.xlane.xlu0 %34
  %36 = vadd.xlane.f32.xlu0 %v33
  %v37 = vpop.xlane.xlu0 %36
  %v38 = vmul.f32 %v35, %v27
  %v39 = vmul.f32 %v37, %v27
  %v40 = vadd.f32 %v38, 1e-05
  %v41 = vadd.f32 %v39, 1e-05
  %v42 = vrsqrt.pop %v40
  %v43 = vrsqrt.pop %v41
  %v44 = vmul.f32 %v30, %v42
  %v45 = vmul.f32 %v31, %v43
  %v46 = vld [vmem:[%s1] sm:$0x1]
  %v48 = vlaneseq
  %v49 = vshrl.u32 %v48, 7
  %v50 = vsub.s32 0, %v49
  %v51 = vrot.slane %v46, %v50
  %v53 = vmul.f32 %v44, %v51
  %v54 = vmul.f32 %v45, %v51
  %v55 = vld [vmem:[%s2] sm:$0x1]
  %v57 = vlaneseq
  %v58 = vshrl.u32 %v57, 7
  %v59 = vsub.s32 0, %v58
  %v60 = vrot.slane %v55, %v59
  %v62 = vadd.f32 %v53, %v60
  %v63 = vadd.f32 %v54, %v60
  %v64 = vpack.c.bf16 %v63, %v62
  %v65 = vld [vmem:[%s3] sm:$0xf]
  %v66 = vld [vmem:[%s3 + $0x4] sm:$0xf]
  %v67 = vld [vmem:[%s3 + $0x8] sm:$0xf]
  %v68 = vld [vmem:[%s3 + $0xc] sm:$0xf]
  %v69 = vld [vmem:[%s3 + $0x10] sm:$0xf]
  %v70 = vld [vmem:[%s3 + $0x14] sm:$0xf]
  %v71 = vld [vmem:[%s3 + $0x18] sm:$0xf]
  %v72 = vld [vmem:[%s3 + $0x1c] sm:$0xf]
  %v73 = vld [vmem:[%s3 + $0x20] sm:$0xf]
  %v74 = vld [vmem:[%s3 + $0x24] sm:$0xf]
  %v75 = vld [vmem:[%s3 + $0x28] sm:$0xf]
  %v76 = vld [vmem:[%s3 + $0x2c] sm:$0xf]
  %v77 = vld [vmem:[%s3 + $0x30] sm:$0xf]
  %v78 = vld [vmem:[%s3 + $0x34] sm:$0xf]
  %v79 = vld [vmem:[%s3 + $0x38] sm:$0xf]
  %v80 = vld [vmem:[%s3 + $0x3c] sm:$0xf]
  %v81 = vld [vmem:[%s4] sm:$0x1]
  %v83 = vlaneseq
  %v84 = vshrl.u32 %v83, 7
  %v85 = vsub.s32 0, %v84
  %v86 = vrot.slane %v81, %v85
  %v104 = vunpack.c.l.b16 %v65
  %v105 = vunpack.c.l.b16 %v66
  %v106 = vunpack.c.l.b16 %v67
  %v107 = vunpack.c.l.b16 %v68
  %v108 = vunpack.c.l.b16 %v69
  %v109 = vunpack.c.l.b16 %v70
  %v110 = vunpack.c.l.b16 %v71
  %v111 = vunpack.c.l.b16 %v72
  %v112 = vunpack.c.l.b16 %v73
  %v113 = vunpack.c.l.b16 %v74
  %v114 = vunpack.c.l.b16 %v75
  %v115 = vunpack.c.l.b16 %v76
  %v116 = vunpack.c.l.b16 %v77
  %v117 = vunpack.c.l.b16 %v78
  %v118 = vunpack.c.l.b16 %v79
  %v119 = vunpack.c.l.b16 %v80
  %v120 = vpack.c.b16 %v105, %v104
  %v121 = vpack.c.b16 %v107, %v106
  %v122 = vpack.c.b16 %v109, %v108
  %v123 = vpack.c.b16 %v111, %v110
  %v124 = vpack.c.b16 %v113, %v112
  %v125 = vpack.c.b16 %v115, %v114
  %v126 = vpack.c.b16 %v117, %v116
  %v127 = vpack.c.b16 %v119, %v118
  %136 = vmatprep.subr.bf16.mxu0 0
  %137 = vmatpush1.bf16.msra.mxu0 %v127
  %138 = vmatprep.subr.bf16.mxu0 0
  %139 = vmatpush1.bf16.msra.mxu0 %v126
  %140 = vmatprep.subr.bf16.mxu0 0
  %141 = vmatpush1.bf16.msra.mxu0 %v125
  %142 = vmatprep.subr.bf16.mxu0 0
  %143 = vmatpush1.bf16.msra.mxu0 %v124
  %144 = vmatprep.subr.bf16.mxu0 0
  %145 = vmatpush1.bf16.msra.mxu0 %v123
  %146 = vmatprep.subr.bf16.mxu0 0
  %147 = vmatpush1.bf16.msra.mxu0 %v122
  %148 = vmatprep.subr.bf16.mxu0 0
  %149 = vmatpush1.bf16.msra.mxu0 %v121
  %150 = vmatprep.subr.bf16.mxu0 0
  %151 = vmatpush1.bf16.msra.mxu0 %v120
  %152 = vmatprep.subr.bf16.mxu0 0
  %153 = vmatpush2.bf16.msra.mxu0 0
  %154 = vmatprep.subr.bf16.mxu0 0
  %155 = vmatpush2.bf16.msra.mxu0 0
  %156 = vmatprep.subr.bf16.mxu0 0
  %157 = vmatpush2.bf16.msra.mxu0 0
  %158 = vmatprep.subr.bf16.mxu0 0
  %159 = vmatpush2.bf16.msra.mxu0 0
  %160 = vmatprep.subr.bf16.mxu0 0
  %161 = vmatpush2.bf16.msra.mxu0 0
  %162 = vmatprep.subr.bf16.mxu0 0
  %163 = vmatpush2.bf16.msra.mxu0 0
  %164 = vmatprep.subr.bf16.mxu0 0
  %165 = vmatpush2.bf16.msra.mxu0 0
  %166 = vmatprep.subr.bf16.mxu0 0
  %167 = vmatpush2.bf16.msra.mxu0 0
  %168 = vmatprep.mubr.bf16.mxu0 0
  %169 = vmatmul.mubr.bf16.gmra.mxu0 %v64
  %v170 = vpop.f32.mrf.mxu0
  %v171 = vadd.f32 %v86, %v170
  %v172 = vpop.f32.mrf.mxu0
  %v173 = vpop.f32.mrf.mxu0
  %v174 = vadd.f32 %v86, %v173
  %v175 = vpop.f32.mrf.mxu0
  %176 = vdwg.mxu0
  %177 = vst [vmem:[%s5] sm:$0xff] %v171
  %178 = vst [vmem:[%s5 + $0x8] sm:$0xff] %v174
  // Predicated region
  $region22: #{cross_attention_block.7} parent=0 // pred_check
    _
  $region23: #{cross_attention_block.7} parent=0 // pred_check_branch
    %180 = sbr.rel (0) target = $region25
  $region24: #{cross_attention_block.7} parent=0 // pred_region
    _
  $region25: #{cross_attention_block.7} parent=0 // pred_fallthru
    _
  // Predicated region
  $region26: #{cross_attention_block.7} parent=0 // pred_check
    _
  $region27: #{cross_attention_block.7} parent=0 // pred_check_branch
    %182 = sbr.rel (0) target = $region29
  $region28: #{cross_attention_block.7} parent=0 // pred_region
    _
  $region29: #{cross_attention_block.7} parent=0 // pred_fallthru
    _

// kernel: cross_attention_block.10
$region0: #{cross_attention_block.10}
  #allocation0 [shape = 'u32[]', space=smem, size = 0x4, offset = 0x4, fixed_abs, tag = 'smem constant byte address 0x4 - core index']
  #allocation1 [shape = 'u32[144,128]{1,0:T(1,128)}', space=vmem, size = 0x12000, scoped, tag = 'internal scratch']
  %s0 = inlined_call_operand.vmem [shape: f32[16,8,16], index: 0, kind: input, shape index: {}]
  %s1 = inlined_call_operand.vmem [shape: f32[16,16,16], index: 1, kind: input, shape index: {}]
  %s2 = inlined_call_operand.vmem [shape: f32[16,16,16], index: 2, kind: input, shape index: {}]
  %s3 = inlined_call_operand.vmem [shape: f32[16,8,16], index: 3, kind: input, shape index: {}]
  %s4 = inlined_call_operand.vmem [shape: f32[16,8,16], index: 4, kind: output, shape index: {}]
  %s5 = sld [smem:[#allocation0]]
  $region49: #{cross_attention_block.10} parent=0
    _
  %s7 = ssub.s32 1, %s5
  %s8 = scalar_select 0, %s7, %s5
  loop: start=0, step=1, limit=18
  $region2: #{cross_attention_block.10} parent=0 // loop_pre_header
    _
  $region3: #{cross_attention_block.10} parent=0 // loop_header
    %s10 = sphi 0, %s14
    %p11 = scmp.ge.s32.totalorder %s10, 18
    %s20 = sphi 0, %s22
    %s23 = sphi 0, %s20
    %s24 = sphi 0, %s23
    %s40 = sphi 0, %s24
    %s46 = sphi 0, %s48
    %s49 = sphi 0, %s46
    %s50 = sphi 0, %s49
    %s66 = sphi 0, %s50
    %s72 = sphi 0, %s74
    %s75 = sphi 0, %s72
    %s76 = sphi 0, %s75
    %s92 = sphi 0, %s76
    %s98 = sphi 0, %s100
    %s101 = sphi 0, %s98
    %s102 = sphi 0, %s101
    %s118 = sphi 0, %s102
    %s124 = sphi 0, %s126
    %s127 = sphi 0, %s124
    %s128 = sphi 0, %s127
    %s144 = sphi 0, %s128
  $region4: #{cross_attention_block.10} parent=0 // loop_header_branch
    %13 = sbr.rel (%p11) target = $region8
  $region5: #{cross_attention_block.10} parent=0 // loop_body
    %s15 = ssub.s32 %s10, 1
    %s16 = ssub.s32 %s10, 2
    %s17 = sadd.s32 %s10, 1
    %s18 = ssub.s32 %s10, %s17
    %p19 = scmp.eq.s32.totalorder %s18, 0
    %s21 = sadd.s32 %s20, 1
    %s22 = scalar_select %p19, %s20, %s21
    %p25 = pneg %p19
    %p26 = scmp.eq.s32.totalorder %s10, 15
    %p27 = por %p25, %p26
    %p28 = scmp.ne.s32.totalorder %s20, %s23
    %p29 = scmp.eq.s32.totalorder %s10, 0
    %p30 = por %p28, %p29
    %p31 = scmp.ne.s32.totalorder %s20, %s23
    %p32 = scmp.eq.s32.totalorder %s15, 15
    %p33 = por %p31, %p32
    %p34 = scmp.ne.s32.totalorder %s23, %s24
    %p35 = scmp.eq.s32.totalorder %s15, 0
    %p36 = por %p34, %p35
    %p37 = scmp.ne.s32.totalorder %s23, %s24
    %p38 = scmp.eq.s32.totalorder %s16, 15
    %p39 = por %p37, %p38
    %p41 = scmp.ne.s32.totalorder %s24, %s40
    %p42 = scmp.eq.s32.totalorder %s16, 0
    %p43 = por %p41, %p42
    %s44 = ssub.s32 %s10, %s17
    %p45 = scmp.eq.s32.totalorder %s44, 0
    %s47 = sadd.s32 %s46, 1
    %s48 = scalar_select %p45, %s46, %s47
    %p51 = pneg %p45
    %p52 = scmp.eq.s32.totalorder %s10, 15
    %p53 = por %p51, %p52
    %p54 = scmp.ne.s32.totalorder %s46, %s49
    %p55 = scmp.eq.s32.totalorder %s10, 0
    %p56 = por %p54, %p55
    %p57 = scmp.ne.s32.totalorder %s46, %s49
    %p58 = scmp.eq.s32.totalorder %s15, 15
    %p59 = por %p57, %p58
    %p60 = scmp.ne.s32.totalorder %s49, %s50
    %p61 = scmp.eq.s32.totalorder %s15, 0
    %p62 = por %p60, %p61
    %p63 = scmp.ne.s32.totalorder %s49, %s50
    %p64 = scmp.eq.s32.totalorder %s16, 15
    %p65 = por %p63, %p64
    %p67 = scmp.ne.s32.totalorder %s50, %s66
    %p68 = scmp.eq.s32.totalorder %s16, 0
    %p69 = por %p67, %p68
    %s70 = ssub.s32 %s10, %s17
    %p71 = scmp.eq.s32.totalorder %s70, 0
    %s73 = sadd.s32 %s72, 1
    %s74 = scalar_select %p71, %s72, %s73
    %p77 = pneg %p71
    %p78 = scmp.eq.s32.totalorder %s10, 15
    %p79 = por %p77, %p78
    %p80 = scmp.ne.s32.totalorder %s72, %s75
    %p81 = scmp.eq.s32.totalorder %s10, 0
    %p82 = por %p80, %p81
    %p83 = scmp.ne.s32.totalorder %s72, %s75
    %p84 = scmp.eq.s32.totalorder %s15, 15
    %p85 = por %p83, %p84
    %p86 = scmp.ne.s32.totalorder %s75, %s76
    %p87 = scmp.eq.s32.totalorder %s15, 0
    %p88 = por %p86, %p87
    %p89 = scmp.ne.s32.totalorder %s75, %s76
    %p90 = scmp.eq.s32.totalorder %s16, 15
    %p91 = por %p89, %p90
    %p93 = scmp.ne.s32.totalorder %s76, %s92
    %p94 = scmp.eq.s32.totalorder %s16, 0
    %p95 = por %p93, %p94
    %s96 = ssub.s32 %s10, %s17
    %p97 = scmp.eq.s32.totalorder %s96, 0
    %s99 = sadd.s32 %s98, 1
    %s100 = scalar_select %p97, %s98, %s99
    %p103 = pneg %p97
    %p104 = scmp.eq.s32.totalorder %s10, 15
    %p105 = por %p103, %p104
    %p106 = scmp.ne.s32.totalorder %s98, %s101
    %p107 = scmp.eq.s32.totalorder %s10, 0
    %p108 = por %p106, %p107
    %p109 = scmp.ne.s32.totalorder %s98, %s101
    %p110 = scmp.eq.s32.totalorder %s15, 15
    %p111 = por %p109, %p110
    %p112 = scmp.ne.s32.totalorder %s101, %s102
    %p113 = scmp.eq.s32.totalorder %s15, 0
    %p114 = por %p112, %p113
    %p115 = scmp.ne.s32.totalorder %s101, %s102
    %p116 = scmp.eq.s32.totalorder %s16, 15
    %p117 = por %p115, %p116
    %p119 = scmp.ne.s32.totalorder %s102, %s118
    %p120 = scmp.eq.s32.totalorder %s16, 0
    %p121 = por %p119, %p120
    %s122 = ssub.s32 %s10, %s17
    %p123 = scmp.eq.s32.totalorder %s122, 0
    %s125 = sadd.s32 %s124, 1
    %s126 = scalar_select %p123, %s124, %s125
    %p129 = pneg %p123
    %p130 = scmp.eq.s32.totalorder %s10, 15
    %p131 = por %p129, %p130
    %p132 = scmp.ne.s32.totalorder %s124, %s127
    %p133 = scmp.eq.s32.totalorder %s10, 0
    %p134 = por %p132, %p133
    %p135 = scmp.ne.s32.totalorder %s124, %s127
    %p136 = scmp.eq.s32.totalorder %s15, 15
    %p137 = por %p135, %p136
    %p138 = scmp.ne.s32.totalorder %s127, %s128
    %p139 = scmp.eq.s32.totalorder %s15, 0
    %p140 = por %p138, %p139
    %p141 = scmp.ne.s32.totalorder %s127, %s128
    %p142 = scmp.eq.s32.totalorder %s16, 15
    %p143 = por %p141, %p142
    %p145 = scmp.ne.s32.totalorder %s128, %s144
    %p146 = scmp.eq.s32.totalorder %s16, 0
    %p147 = por %p145, %p146
    %p148 = scmp.le.s32.totalorder 1, %s10
    %p149 = scmp.lt.s32.totalorder %s10, 17
    %p150 = pnand %p148, %p149
    %p151 = pneg %p150
    // Predicated region
    $region9: #{cross_attention_block.10} parent=5 // pred_check
      _
    $region10: #{cross_attention_block.10} parent=5 // pred_check_branch
      %153 = sbr.rel (%p150) target = $region12
    $region11: #{cross_attention_block.10} parent=5 // pred_region
      %s154 = ssub.s32 %s10, 1
    $region12: #{cross_attention_block.10} parent=5 // pred_fallthru
      _
    %p155 = scmp.lt.s32.totalorder %s10, 16
    // Predicated region
    $region13: #{cross_attention_block.10} parent=5 // pred_check
      %p156 = pneg %p155
    $region14: #{cross_attention_block.10} parent=5 // pred_check_branch
      %158 = sbr.rel (%p156) target = $region16
    $region15: #{cross_attention_block.10} parent=5 // pred_region
      // Predicated region
      $region17: #{cross_attention_block.10} parent=15 // pred_check
        %p159 = pneg %p30
      $region18: #{cross_attention_block.10} parent=15 // pred_check_branch
        %161 = sbr.rel (%p159) target = $region20
      $region19: #{cross_attention_block.10} parent=15 // pred_region
        %p162 = scmp.lt.s32.totalorder %s10, 15
        %s163 = scalar_select %p162, %s10, 15
        %s164 = smul.addr %s163, 8
        %s165 = scalar_lea.vmem %s0, %s164
      $region20: #{cross_attention_block.10} parent=15 // pred_fallthru
        _
      // Predicated region
      $region21: #{cross_attention_block.10} parent=15 // pred_check
        %p166 = pneg %p56
      $region22: #{cross_attention_block.10} parent=15 // pred_check_branch
        %168 = sbr.rel (%p166) target = $region24
      $region23: #{cross_attention_block.10} parent=15 // pred_region
        %p169 = scmp.lt.s32.totalorder %s10, 15
        %s170 = scalar_select %p169, %s10, 15
        %s171 = smul.addr %s170, 2
        %s172 = smul.addr %s171, 8
        %s173 = scalar_lea.vmem %s1, %s172
      $region24: #{cross_attention_block.10} parent=15 // pred_fallthru
        _
      // Predicated region
      $region25: #{cross_attention_block.10} parent=15 // pred_check
        %p174 = pneg %p82
      $region26: #{cross_attention_block.10} parent=15 // pred_check_branch
        %176 = sbr.rel (%p174) target = $region28
      $region27: #{cross_attention_block.10} parent=15 // pred_region
        %p177 = scmp.lt.s32.totalorder %s10, 15
        %s178 = scalar_select %p177, %s10, 15
        %s179 = smul.addr %s178, 2
        %s180 = smul.addr %s179, 8
        %s181 = scalar_lea.vmem %s2, %s180
      $region28: #{cross_attention_block.10} parent=15 // pred_fallthru
        _
      // Predicated region
      $region29: #{cross_attention_block.10} parent=15 // pred_check
        %p182 = pneg %p108
      $region30: #{cross_attention_block.10} parent=15 // pred_check_branch
        %184 = sbr.rel (%p182) target = $region32
      $region31: #{cross_attention_block.10} parent=15 // pred_region
        %p185 = scmp.lt.s32.totalorder %s10, 15
        %s186 = scalar_select %p185, %s10, 15
        %s187 = smul.addr %s186, 8
        %s188 = scalar_lea.vmem %s3, %s187
      $region32: #{cross_attention_block.10} parent=15 // pred_fallthru
        _
    $region16: #{cross_attention_block.10} parent=5 // pred_fallthru
      _
    %p189 = scmp.le.s32.totalorder 1, %s10
    %p190 = scmp.lt.s32.totalorder %s10, 17
    %p191 = pnand %p189, %p190
    %p192 = pneg %p191
    // Predicated region
    $region33: #{cross_attention_block.10} parent=5 // pred_check
      _
    $region34: #{cross_attention_block.10} parent=5 // pred_check_branch
      %194 = sbr.rel (%p191) target = $region36
    $region35: #{cross_attention_block.10} parent=5 // pred_region
      %s195 = ssub.s32 %s10, 1
      %p196 = scmp.lt.s32.totalorder %s15, 15
      %s197 = scalar_select %p196, %s15, 15
      %s198 = smul.addr %s197, 8
      %s199 = scalar_lea.vmem %s0, %s198
      %p200 = pneg %p36
      %p201 = pneg %p33
      %p202 = scmp.lt.s32.totalorder %s15, 15
      %s203 = scalar_select %p202, %s15, 15
      %s204 = smul.addr %s203, 2
      %s205 = smul.addr %s204, 8
      %s206 = scalar_lea.vmem %s1, %s205
      %p207 = pneg %p62
      %p208 = pneg %p59
      %p209 = scmp.lt.s32.totalorder %s15, 15
      %s210 = scalar_select %p209, %s15, 15
      %s211 = smul.addr %s210, 2
      %s212 = smul.addr %s211, 8
      %s213 = scalar_lea.vmem %s2, %s212
      %p214 = pneg %p88
      %p215 = pneg %p85
      %p216 = scmp.lt.s32.totalorder %s15, 15
      %s217 = scalar_select %p216, %s15, 15
      %s218 = smul.addr %s217, 8
      %s219 = scalar_lea.vmem %s3, %s218
      %p220 = pneg %p114
      %p221 = pneg %p111
      %p222 = pneg %p140
      %p223 = pneg %p137
      %p224 = scmp.lt.s32.totalorder %s15, 15
      %s225 = scalar_select %p224, %s15, 15
      %s226 = smul.addr %s225, 8
      %s227 = scalar_lea.vmem %s4, %s226
      %p228 = scmp.lt.s32.totalorder %s15, 15
      %s229 = scalar_select %p228, %s15, 15
      %s230 = smul.addr %s229, 8
      %s231 = scalar_lea.vmem %s0, %s230
      %p232 = scmp.lt.s32.totalorder %s15, 15
      %s233 = scalar_select %p232, %s15, 15
      %s234 = smul.addr %s233, 2
      %s235 = smul.addr %s234, 8
      %s236 = scalar_lea.vmem %s1, %s235
      %p237 = scmp.lt.s32.totalorder %s15, 15
      %s238 = scalar_select %p237, %s15, 15
      %s239 = smul.addr %s238, 2
      %s240 = smul.addr %s239, 8
      %s241 = scalar_lea.vmem %s2, %s240
      %p242 = scmp.lt.s32.totalorder %s15, 15
      %s243 = scalar_select %p242, %s15, 15
      %s244 = smul.addr %s243, 8
      %s245 = scalar_lea.vmem %s3, %s244
      %p246 = scmp.lt.s32.totalorder %s15, 15
      %s247 = scalar_select %p246, %s15, 15
      %s248 = smul.addr %s247, 8
      %s249 = scalar_lea.vmem %s4, %s248
      %v250 = vld [vmem:[%s231] sm:$0xff]
      %v251 = vld [vmem:[%s236] sm:$0xff]
      %v252 = vld [vmem:[%s236 + $0x8] sm:$0xff]
      %v253 = vld [vmem:[%s241] sm:$0xff]
      %v254 = vld [vmem:[%s241 + $0x8] sm:$0xff]
      %vm255 = vcmask 130048
      %v257 = vsel %vm255, %v250, 0
      %v260 = vsel %vm255, %v251, 0
      %v263 = vsel %vm255, %v252, 0
      %265 = vmatprep.subr.mxu0 0.0
      %266 = vmatpush1.xpose.msra.mxu0 0.0
      %267 = vmatprep.subr.mxu0 0.0
      %268 = vmatpush1.xpose.msra.mxu0 0.0
      %269 = vmatprep.subr.mxu0 0.0
      %270 = vmatpush1.xpose.msra.mxu0 0.0
      %271 = vmatprep.subr.mxu0 0.0
      %272 = vmatpush1.xpose.msra.mxu0 0.0
      %273 = vmatprep.subr.mxu0 0.0
      %274 = vmatpush1.xpose.msra.mxu0 0.0
      %275 = vmatprep.subr.mxu0 0.0
      %276 = vmatpush1.xpose.msra.mxu0 0.0
      %277 = vmatprep.subr.mxu0 0.0
      %278 = vmatpush1.xpose.msra.mxu0 0.0
      %279 = vmatprep.subr.mxu0 0.0
      %280 = vmatpush1.xpose.msra.mxu0 0.0
      %281 = vmatprep.subr.mxu0 0.0
      %282 = vmatpush1.xpose.msra.mxu0 0.0
      %283 = vmatprep.subr.mxu0 0.0
      %284 = vmatpush1.xpose.msra.mxu0 0.0
      %285 = vmatprep.subr.mxu0 0.0
      %286 = vmatpush1.xpose.msra.mxu0 0.0
      %287 = vmatprep.subr.mxu0 0.0
      %288 = vmatpush1.xpose.msra.mxu0 0.0
      %289 = vmatprep.subr.mxu0 0.0
      %290 = vmatpush1.xpose.msra.mxu0 0.0
      %291 = vmatprep.subr.mxu0 0.0
      %292 = vmatpush1.xpose.msra.mxu0 0.0
      %293 = vmatprep.subr.mxu0 0.0
      %294 = vmatpush1.xpose.msra.mxu0 %v263
      %295 = vmatprep.subr.mxu0 0.0
      %296 = vmatpush1.xpose.msra.mxu0 %v260
      %297 = vmatprep.subr.mxu0 0.0
      %298 = vmatpush2.xpose.msra.mxu0 0.0
      %299 = vmatprep.subr.mxu0 0.0
      %300 = vmatpush2.xpose.msra.mxu0 0.0
      %301 = vmatprep.subr.mxu0 0.0
      %302 = vmatpush2.xpose.msra.mxu0 0.0
      %303 = vmatprep.subr.mxu0 0.0
      %304 = vmatpush2.xpose.msra.mxu0 0.0
      %305 = vmatprep.subr.mxu0 0.0
      %306 = vmatpush2.xpose.msra.mxu0 0.0
      %307 = vmatprep.subr.mxu0 0.0
      %308 = vmatpush2.xpose.msra.mxu0 0.0
      %309 = vmatprep.subr.mxu0 0.0
      %310 = vmatpush2.xpose.msra.mxu0 0.0
      %311 = vmatprep.subr.mxu0 0.0
      %312 = vmatpush2.xpose.msra.mxu0 0.0
      %313 = vmatprep.subr.mxu0 0.0
      %314 = vmatpush2.xpose.msra.mxu0 0.0
      %315 = vmatprep.subr.mxu0 0.0
      %316 = vmatpush2.xpose.msra.mxu0 0.0
      %317 = vmatprep.subr.mxu0 0.0
      %318 = vmatpush2.xpose.msra.mxu0 0.0
      %319 = vmatprep.subr.mxu0 0.0
      %320 = vmatpush2.xpose.msra.mxu0 0.0
      %321 = vmatprep.subr.mxu0 0.0
      %322 = vmatpush2.xpose.msra.mxu0 0.0
      %323 = vmatprep.subr.mxu0 0.0
      %324 = vmatpush2.xpose.msra.mxu0 0.0
      %325 = vmatprep.subr.mxu0 0.0
      %326 = vmatpush2.xpose.msra.mxu0 0.0
      %327 = vmatprep.subr.mxu0 0.0
      %328 = vmatpush2.xpose.msra.mxu0 0.0
      %329 = vmatprep.mubr.f32.mxu0 0.0
      %330 = vmatmul.mubr.f32.gmra.mxu0 %v257
      %v331 = vpop.f32.mrf.mxu0
      %v332 = vadd.f32 0.0, %v331
      %v333 = vpop.f32.mrf.mxu0
      %334 = vdwg.mxu0
      %v335 = vmul.f32 %v332, 0.25
      %v336 = vld [vmem:[%s245] sm:$0xff]
      %v337 = vadd.f32 %v335, %v336
      %v338 = vsel %vm255, %v337, -inf
      %339 = vmax.xlane.f32.xlu0 %v338
      %v340 = vpop.xlane.xlu0 %339
      %v341 = vsub.f32 %v337, %v340
      %v342 = vmul.f32 %v341, 1.442695
      %v343 = vpow.pop %v342
      %v344 = vsel %vm255, %v343, 0.0
      %345 = vadd.xlane.f32.xlu0 %v344
      %v346 = vpop.xlane.xlu0 %345
      %v347 = vrcp.pop %v346
      %v348 = vmul.f32 %v343, %v347
      %v350 = vsel %vm255, %v348, 0
      %352 = vmatprep.subr.mxu0 0.0
      %353 = vmatpush1.msra.mxu0 0.0
      %354 = vmatprep.subr.mxu0 0.0
      %355 = vmatpush1.msra.mxu0 0.0
      %356 = vmatprep.subr.mxu0 0.0
      %357 = vmatpush1.msra.mxu0 0.0
      %358 = vmatprep.subr.mxu0 0.0
      %359 = vmatpush1.msra.mxu0 0.0
      %360 = vmatprep.subr.mxu0 0.0
      %361 = vmatpush1.msra.mxu0 0.0
      %362 = vmatprep.subr.mxu0 0.0
      %363 = vmatpush1.msra.mxu0 0.0
      %364 = vmatprep.subr.mxu0 0.0
      %365 = vmatpush1.msra.mxu0 0.0
      %366 = vmatprep.subr.mxu0 0.0
      %367 = vmatpush1.msra.mxu0 0.0
      %368 = vmatprep.subr.mxu0 0.0
      %369 = vmatpush1.msra.mxu0 0.0
      %370 = vmatprep.subr.mxu0 0.0
      %371 = vmatpush1.msra.mxu0 0.0
      %372 = vmatprep.subr.mxu0 0.0
      %373 = vmatpush1.msra.mxu0 0.0
      %374 = vmatprep.subr.mxu0 0.0
      %375 = vmatpush1.msra.mxu0 0.0
      %376 = vmatprep.subr.mxu0 0.0
      %377 = vmatpush1.msra.mxu0 0.0
      %378 = vmatprep.subr.mxu0 0.0
      %379 = vmatpush1.msra.mxu0 0.0
      %380 = vmatprep.subr.mxu0 0.0
      %381 = vmatpush1.msra.mxu0 %v254
      %382 = vmatprep.subr.mxu0 0.0
      %383 = vmatpush1.msra.mxu0 %v253
      %384 = vmatprep.subr.mxu0 0.0
      %385 = vmatpush2.msra.mxu0 0.0
      %386 = vmatprep.subr.mxu0 0.0
      %387 = vmatpush2.msra.mxu0 0.0
      %388 = vmatprep.subr.mxu0 0.0
      %389 = vmatpush2.msra.mxu0 0.0
      %390 = vmatprep.subr.mxu0 0.0
      %391 = vmatpush2.msra.mxu0 0.0
      %392 = vmatprep.subr.mxu0 0.0
      %393 = vmatpush2.msra.mxu0 0.0
      %394 = vmatprep.subr.mxu0 0.0
      %395 = vmatpush2.msra.mxu0 0.0
      %396 = vmatprep.subr.mxu0 0.0
      %397 = vmatpush2.msra.mxu0 0.0
      %398 = vmatprep.subr.mxu0 0.0
      %399 = vmatpush2.msra.mxu0 0.0
      %400 = vmatprep.subr.mxu0 0.0
      %401 = vmatpush2.msra.mxu0 0.0
      %402 = vmatprep.subr.mxu0 0.0
      %403 = vmatpush2.msra.mxu0 0.0
      %404 = vmatprep.subr.mxu0 0.0
      %405 = vmatpush2.msra.mxu0 0.0
      %406 = vmatprep.subr.mxu0 0.0
      %407 = vmatpush2.msra.mxu0 0.0
      %408 = vmatprep.subr.mxu0 0.0
      %409 = vmatpush2.msra.mxu0 0.0
      %410 = vmatprep.subr.mxu0 0.0
      %411 = vmatpush2.msra.mxu0 0.0
      %412 = vmatprep.subr.mxu0 0.0
      %413 = vmatpush2.msra.mxu0 0.0
      %414 = vmatprep.subr.mxu0 0.0
      %415 = vmatpush2.msra.mxu0 0.0
      %416 = vmatprep.mubr.f32.mxu0 0.0
      %417 = vmatmul.mubr.f32.gmra.mxu0 %v350
      %v418 = vpop.f32.mrf.mxu0
      %v419 = vadd.f32 0.0, %v418
      %v420 = vpop.f32.mrf.mxu0
      %421 = vdwg.mxu0
      %422 = vst.msk [vmem:[%s249] sm:$0xff] %vm255, %v419
      %p423 = scmp.lt.s32.totalorder %s15, 15
      %s424 = scalar_select %p423, %s15, 15
      %s425 = smul.addr %s424, 8
      %s426 = scalar_lea.vmem %s4, %s425
      // Predicated region
      $region37: #{cross_attention_block.10} parent=35 // pred_check
        %p427 = pneg %p137
      $region38: #{cross_attention_block.10} parent=35 // pred_check_branch
        %429 = sbr.rel (%p427) target = $region40
      $region39: #{cross_attention_block.10} parent=35 // pred_region
        _
      $region40: #{cross_attention_block.10} parent=35 // pred_fallthru
        _
    $region36: #{cross_attention_block.10} parent=5 // pred_fallthru
      _
    %p430 = scmp.le.s32.totalorder 2, %s10
    // Predicated region
    $region41: #{cross_attention_block.10} parent=5 // pred_check
      %p431 = pneg %p430
    $region42: #{cross_attention_block.10} parent=5 // pred_check_branch
      %433 = sbr.rel (%p431) target = $region44
    $region43: #{cross_attention_block.10} parent=5 // pred_region
      %s434 = ssub.s32 %s10, 2
      // Predicated region
      $region45: #{cross_attention_block.10} parent=43 // pred_check
        %p435 = pneg %p143
      $region46: #{cross_attention_block.10} parent=43 // pred_check_branch
        %437 = sbr.rel (%p435) target = $region48
      $region47: #{cross_attention_block.10} parent=43 // pred_region
        %p438 = scmp.lt.s32.totalorder %s16, 15
        %s439 = scalar_select %p438, %s16, 15
        %s440 = smul.addr %s439, 8
        %s441 = scalar_lea.vmem %s4, %s440
      $region48: #{cross_attention_block.10} parent=43 // pred_fallthru
        _
    $region44: #{cross_attention_block.10} parent=5 // pred_fallthru
      _
  $region6: #{cross_attention_block.10} parent=0 // loop_footer
    %s14 = sadd.s32 1, %s10
  $region7: #{cross_attention_block.10} parent=0 // loop_footer_branch
    %9 = sbr.rel target = $region3
  $region8: #{cross_attention_block.10} parent=0 // loop_exit
    _

// kernel: cross_attention_block.11
$region0: #{cross_attention_block.11}
  #allocation0 [shape = 'u32[]', space=smem, size = 0x4, offset = 0x4, fixed_abs, tag = 'smem constant byte address 0x4 - core index']
  #allocation1 [shape = 'u32[144,128]{1,0:T(1,128)}', space=vmem, size = 0x12000, scoped, tag = 'internal scratch']
  %s0 = inlined_call_operand.vmem [shape: f32[16,128], index: 0, kind: input, shape index: {}]
  %s1 = inlined_call_operand.vmem [shape: bf16[128,128], index: 1, kind: input, shape index: {}]
  %s2 = inlined_call_operand.vmem [shape: f32[1,128], index: 2, kind: input, shape index: {}]
  %s3 = inlined_call_operand.vmem [shape: f32[16,128], index: 3, kind: input, shape index: {}]
  %s4 = inlined_call_operand.vmem [shape: f32[16,128], index: 4, kind: output, shape index: {}]
  %s5 = sld [smem:[#allocation0]]
  $region26: #{cross_attention_block.11} parent=0
    _
  %s7 = ssub.s32 1, %s5
  %s8 = scalar_select 0, %s7, %s5
  // Predicated region
  $region2: #{cross_attention_block.11} parent=0 // pred_check
    _
  $region3: #{cross_attention_block.11} parent=0 // pred_check_branch
    %10 = sbr.rel (0) target = $region5
  $region4: #{cross_attention_block.11} parent=0 // pred_region
    _
  $region5: #{cross_attention_block.11} parent=0 // pred_fallthru
    _
  // Predicated region
  $region6: #{cross_attention_block.11} parent=0 // pred_check
    _
  $region7: #{cross_attention_block.11} parent=0 // pred_check_branch
    %12 = sbr.rel (0) target = $region9
  $region8: #{cross_attention_block.11} parent=0 // pred_region
    _
  $region9: #{cross_attention_block.11} parent=0 // pred_fallthru
    _
  // Predicated region
  $region10: #{cross_attention_block.11} parent=0 // pred_check
    _
  $region11: #{cross_attention_block.11} parent=0 // pred_check_branch
    %14 = sbr.rel (0) target = $region13
  $region12: #{cross_attention_block.11} parent=0 // pred_region
    _
  $region13: #{cross_attention_block.11} parent=0 // pred_fallthru
    _
  // Predicated region
  $region14: #{cross_attention_block.11} parent=0 // pred_check
    _
  $region15: #{cross_attention_block.11} parent=0 // pred_check_branch
    %16 = sbr.rel (0) target = $region17
  $region16: #{cross_attention_block.11} parent=0 // pred_region
    _
  $region17: #{cross_attention_block.11} parent=0 // pred_fallthru
    _
  %v18 = vld [vmem:[%s0] sm:$0xff]
  %v19 = vld [vmem:[%s0 + $0x8] sm:$0xff]
  %v20 = vpack.c.bf16 %v19, %v18
  %v21 = vld [vmem:[%s1] sm:$0xf]
  %v22 = vld [vmem:[%s1 + $0x4] sm:$0xf]
  %v23 = vld [vmem:[%s1 + $0x8] sm:$0xf]
  %v24 = vld [vmem:[%s1 + $0xc] sm:$0xf]
  %v25 = vld [vmem:[%s1 + $0x10] sm:$0xf]
  %v26 = vld [vmem:[%s1 + $0x14] sm:$0xf]
  %v27 = vld [vmem:[%s1 + $0x18] sm:$0xf]
  %v28 = vld [vmem:[%s1 + $0x1c] sm:$0xf]
  %v29 = vld [vmem:[%s1 + $0x20] sm:$0xf]
  %v30 = vld [vmem:[%s1 + $0x24] sm:$0xf]
  %v31 = vld [vmem:[%s1 + $0x28] sm:$0xf]
  %v32 = vld [vmem:[%s1 + $0x2c] sm:$0xf]
  %v33 = vld [vmem:[%s1 + $0x30] sm:$0xf]
  %v34 = vld [vmem:[%s1 + $0x34] sm:$0xf]
  %v35 = vld [vmem:[%s1 + $0x38] sm:$0xf]
  %v36 = vld [vmem:[%s1 + $0x3c] sm:$0xf]
  %v53 = vunpack.c.l.b16 %v21
  %v54 = vunpack.c.l.b16 %v22
  %v55 = vunpack.c.l.b16 %v23
  %v56 = vunpack.c.l.b16 %v24
  %v57 = vunpack.c.l.b16 %v25
  %v58 = vunpack.c.l.b16 %v26
  %v59 = vunpack.c.l.b16 %v27
  %v60 = vunpack.c.l.b16 %v28
  %v61 = vunpack.c.l.b16 %v29
  %v62 = vunpack.c.l.b16 %v30
  %v63 = vunpack.c.l.b16 %v31
  %v64 = vunpack.c.l.b16 %v32
  %v65 = vunpack.c.l.b16 %v33
  %v66 = vunpack.c.l.b16 %v34
  %v67 = vunpack.c.l.b16 %v35
  %v68 = vunpack.c.l.b16 %v36
  %v69 = vpack.c.b16 %v54, %v53
  %v70 = vpack.c.b16 %v56, %v55
  %v71 = vpack.c.b16 %v58, %v57
  %v72 = vpack.c.b16 %v60, %v59
  %v73 = vpack.c.b16 %v62, %v61
  %v74 = vpack.c.b16 %v64, %v63
  %v75 = vpack.c.b16 %v66, %v65
  %v76 = vpack.c.b16 %v68, %v67
  %85 = vmatprep.subr.bf16.mxu0 0
  %86 = vmatpush1.bf16.msra.mxu0 %v76
  %87 = vmatprep.subr.bf16.mxu0 0
  %88 = vmatpush1.bf16.msra.mxu0 %v75
  %89 = vmatprep.subr.bf16.mxu0 0
  %90 = vmatpush1.bf16.msra.mxu0 %v74
  %91 = vmatprep.subr.bf16.mxu0 0
  %92 = vmatpush1.bf16.msra.mxu0 %v73
  %93 = vmatprep.subr.bf16.mxu0 0
  %94 = vmatpush1.bf16.msra.mxu0 %v72
  %95 = vmatprep.subr.bf16.mxu0 0
  %96 = vmatpush1.bf16.msra.mxu0 %v71
  %97 = vmatprep.subr.bf16.mxu0 0
  %98 = vmatpush1.bf16.msra.mxu0 %v70
  %99 = vmatprep.subr.bf16.mxu0 0
  %100 = vmatpush1.bf16.msra.mxu0 %v69
  %101 = vmatprep.subr.bf16.mxu0 0
  %102 = vmatpush2.bf16.msra.mxu0 0
  %103 = vmatprep.subr.bf16.mxu0 0
  %104 = vmatpush2.bf16.msra.mxu0 0
  %105 = vmatprep.subr.bf16.mxu0 0
  %106 = vmatpush2.bf16.msra.mxu0 0
  %107 = vmatprep.subr.bf16.mxu0 0
  %108 = vmatpush2.bf16.msra.mxu0 0
  %109 = vmatprep.subr.bf16.mxu0 0
  %110 = vmatpush2.bf16.msra.mxu0 0
  %111 = vmatprep.subr.bf16.mxu0 0
  %112 = vmatpush2.bf16.msra.mxu0 0
  %113 = vmatprep.subr.bf16.mxu0 0
  %114 = vmatpush2.bf16.msra.mxu0 0
  %115 = vmatprep.subr.bf16.mxu0 0
  %116 = vmatpush2.bf16.msra.mxu0 0
  %117 = vmatprep.mubr.bf16.mxu0 0
  %118 = vmatmul.mubr.bf16.gmra.mxu0 %v20
  %v119 = vpop.f32.mrf.mxu0
  %v120 = vadd.f32 0.0, %v119
  %v121 = vpop.f32.mrf.mxu0
  %v122 = vpop.f32.mrf.mxu0
  %v123 = vadd.f32 0.0, %v122
  %v124 = vpop.f32.mrf.mxu0
  %125 = vdwg.mxu0
  %v126 = vld [vmem:[%s3] sm:$0xff]
  %v127 = vld [vmem:[%s3 + $0x8] sm:$0xff]
  %v128 = vadd.f32 %v126, %v120
  %v129 = vadd.f32 %v127, %v123
  %v130 = vld [vmem:[%s2] sm:$0x1]
  %v132 = vlaneseq
  %v133 = vshrl.u32 %v132, 7
  %v134 = vsub.s32 0, %v133
  %v135 = vrot.slane %v130, %v134
  %v137 = vadd.f32 %v128, %v135
  %v138 = vadd.f32 %v129, %v135
  %139 = vst [vmem:[%s4] sm:$0xff] %v137
  %140 = vst [vmem:[%s4 + $0x8] sm:$0xff] %v138
  // Predicated region
  $region18: #{cross_attention_block.11} parent=0 // pred_check
    _
  $region19: #{cross_attention_block.11} parent=0 // pred_check_branch
    %142 = sbr.rel (0) target = $region21
  $region20: #{cross_attention_block.11} parent=0 // pred_region
    _
  $region21: #{cross_attention_block.11} parent=0 // pred_fallthru
    _
  // Predicated region
  $region22: #{cross_attention_block.11} parent=0 // pred_check
    _
  $region23: #{cross_attention_block.11} parent=0 // pred_check_branch
    %144 = sbr.rel (0) target = $region25
  $region24: #{cross_attention_block.11} parent=0 // pred_region
    _
  $region25: #{cross_attention_block.11} parent=0 // pred_fallthru
    _

// kernel: cross_attention_block.12
$region0: #{cross_attention_block.12}
  #allocation0 [shape = 'u32[]', space=smem, size = 0x4, offset = 0x4, fixed_abs, tag = 'smem constant byte address 0x4 - core index']
  #allocation1 [shape = 'u32[144,128]{1,0:T(1,128)}', space=vmem, size = 0x12000, scoped, tag = 'internal scratch']
  #allocation2 [shape = 'bf16[16,128]{1,0:T(8,128)(2,1)}', space=vmem, size = 0x1000, scoped, tag = 'scratch operand']
  #allocation3 [shape = 'f32[16,128]{1,0:T(8,128)}', space=vmem, size = 0x2000, scoped, tag = 'scratch operand']
  %s0 = inlined_call_operand.vmem [shape: f32[16,128], index: 0, kind: input, shape index: {}]
  %s1 = inlined_call_operand.vmem [shape: f32[1,128], index: 1, kind: input, shape index: {}]
  %s2 = inlined_call_operand.vmem [shape: f32[1,128], index: 2, kind: input, shape index: {}]
  %s3 = inlined_call_operand.vmem [shape: bf16[128,512], index: 3, kind: input, shape index: {}]
  %s4 = inlined_call_operand.vmem [shape: f32[1,512], index: 4, kind: input, shape index: {}]
  %s5 = inlined_call_operand.vmem [shape: bf16[512,128], index: 5, kind: input, shape index: {}]
  %s6 = inlined_call_operand.vmem [shape: f32[1,128], index: 6, kind: input, shape index: {}]
  %s7 = inlined_call_operand.hbm [shape: f32[16,128], index: 7, kind: output, shape index: {}]
  %s8 = sld [smem:[#allocation0]]
  $region46: #{cross_attention_block.12} parent=0
    _
  %s10 = ssub.s32 1, %s8
  %s11 = scalar_select 0, %s10, %s8
  $region1: #{cross_attention_block.12} parent=0
    #allocation4 [shape = 'u8[8192]{0}', space=vmem, size = 0x2000, scoped, tag = 'output window, operand 0, single buffered']
    #allocation5 [shape = 's32[1]{0}', space=sflag, size = 0x4, scoped, tag = 'scoped memory for cross_attention_block.12']
    %12 = vsyncpa [#allocation5], 0
    // Predicated region
    $region2: #{cross_attention_block.12} parent=1 // pred_check
      _
    $region3: #{cross_attention_block.12} parent=1 // pred_check_branch
      %14 = sbr.rel (0) target = $region5
    $region4: #{cross_attention_block.12} parent=1 // pred_region
      _
    $region5: #{cross_attention_block.12} parent=1 // pred_fallthru
      _
    // Predicated region
    $region6: #{cross_attention_block.12} parent=1 // pred_check
      _
    $region7: #{cross_attention_block.12} parent=1 // pred_check_branch
      %16 = sbr.rel (0) target = $region9
    $region8: #{cross_attention_block.12} parent=1 // pred_region
      _
    $region9: #{cross_attention_block.12} parent=1 // pred_fallthru
      _
    // Predicated region
    $region10: #{cross_attention_block.12} parent=1 // pred_check
      _
    $region11: #{cross_attention_block.12} parent=1 // pred_check_branch
      %18 = sbr.rel (0) target = $region13
    $region12: #{cross_attention_block.12} parent=1 // pred_region
      _
    $region13: #{cross_attention_block.12} parent=1 // pred_fallthru
      _
    // Predicated region
    $region14: #{cross_attention_block.12} parent=1 // pred_check
      _
    $region15: #{cross_attention_block.12} parent=1 // pred_check_branch
      %20 = sbr.rel (0) target = $region17
    $region16: #{cross_attention_block.12} parent=1 // pred_region
      _
    $region17: #{cross_attention_block.12} parent=1 // pred_fallthru
      _
    // Predicated region
    $region18: #{cross_attention_block.12} parent=1 // pred_check
      _
    $region19: #{cross_attention_block.12} parent=1 // pred_check_branch
      %22 = sbr.rel (0) target = $region21
    $region20: #{cross_attention_block.12} parent=1 // pred_region
      _
    $region21: #{cross_attention_block.12} parent=1 // pred_fallthru
      _
    // Predicated region
    $region22: #{cross_attention_block.12} parent=1 // pred_check
      _
    $region23: #{cross_attention_block.12} parent=1 // pred_check_branch
      %24 = sbr.rel (0) target = $region25
    $region24: #{cross_attention_block.12} parent=1 // pred_region
      _
    $region25: #{cross_attention_block.12} parent=1 // pred_fallthru
      _
    // Predicated region
    $region26: #{cross_attention_block.12} parent=1 // pred_check
      _
    $region27: #{cross_attention_block.12} parent=1 // pred_check_branch
      %26 = sbr.rel (0) target = $region29
    $region28: #{cross_attention_block.12} parent=1 // pred_region
      _
    $region29: #{cross_attention_block.12} parent=1 // pred_fallthru
      _
    %p28 = scmp.eq.s32.totalorder 0, 0
    // Predicated region
    $region30: #{cross_attention_block.12} parent=1 // pred_check
      %p29 = pneg %p28
    $region31: #{cross_attention_block.12} parent=1 // pred_check_branch
      %31 = sbr.rel (%p29) target = $region33
    $region32: #{cross_attention_block.12} parent=1 // pred_region
      %v32 = vld [vmem:[%s0] sm:$0xff]
      %v33 = vld [vmem:[%s0 + $0x8] sm:$0xff]
      %34 = vadd.xlane.f32.xlu0 %v32
      %v35 = vpop.xlane.xlu0 %34
      %36 = vadd.xlane.f32.xlu0 %v33
      %v37 = vpop.xlane.xlu0 %36
      %v38 = vrcp.pop 128.0
      %v39 = vmul.f32 %v35, %v38
      %v40 = vmul.f32 %v37, %v38
      %v41 = vsub.f32 %v32, %v39
      %v42 = vsub.f32 %v33, %v40
      %v43 = vmul.f32 %v41, %v41
      %v44 = vmul.f32 %v42, %v42
      %45 = vadd.xlane.f32.xlu0 %v43
      %v46 = vpop.xlane.xlu0 %45
      %47 = vadd.xlane.f32.xlu0 %v44
      %v48 = vpop.xlane.xlu0 %47
      %v49 = vmul.f32 %v46, %v38
      %v50 = vmul.f32 %v48, %v38
      %v51 = vadd.f32 %v49, 1e-05
      %v52 = vadd.f32 %v50, 1e-05
      %v53 = vrsqrt.pop %v51
      %v54 = vrsqrt.pop %v52
      %v55 = vmul.f32 %v41, %v53
      %v56 = vmul.f32 %v42, %v54
      %v57 = vld [vmem:[%s1] sm:$0x1]
      %v59 = vlaneseq
      %v60 = vshrl.u32 %v59, 7
      %v61 = vsub.s32 0, %v60
      %v62 = vrot.slane %v57, %v61
      %v64 = vmul.f32 %v55, %v62
      %v65 = vmul.f32 %v56, %v62
      %v66 = vld [vmem:[%s2] sm:$0x1]
      %v68 = vlaneseq
      %v69 = vshrl.u32 %v68, 7
      %v70 = vsub.s32 0, %v69
      %v71 = vrot.slane %v66, %v70
      %v73 = vadd.f32 %v64, %v71
      %v74 = vadd.f32 %v65, %v71
      %v75 = vpack.c.bf16 %v74, %v73
      %v77 = vunpack.c.l.b16 %v75
      %v78 = vunpack.c.h.b16 %v75
      %v79 = vpack.c.b16 %v77, %v77
      %v80 = vpack.c.b16 %v78, %v78
      %83 = vst [vmem:[#allocation2] sm:$0xf] %v79
      %84 = vst [vmem:[#allocation2 + $0x4] sm:$0xf] %v80
      %85 = vst [vmem:[#allocation3] sm:$0xff] 0.0
      %86 = vst [vmem:[#allocation3 + $0x8] sm:$0xff] 0.0
    $region33: #{cross_attention_block.12} parent=1 // pred_fallthru
      _
    %v87 = vld [vmem:[#allocation2] sm:$0xf]
    %v88 = vld [vmem:[#allocation2 + $0x4] sm:$0xf]
    %v89 = vld [vmem:[%s3] sm:$0xff]
    %v90 = vld [vmem:[%s3 + $0x8] sm:$0xff]
    %v91 = vld [vmem:[%s3 + $0x10] sm:$0xff]
    %v92 = vld [vmem:[%s3 + $0x18] sm:$0xff]
    %v93 = vld [vmem:[%s3 + $0x20] sm:$0xff]
    %v94 = vld [vmem:[%s3 + $0x28] sm:$0xff]
    %v95 = vld [vmem:[%s3 + $0x30] sm:$0xff]
    %v96 = vld [vmem:[%s3 + $0x38] sm:$0xff]
    %v97 = vld [vmem:[%s3 + $0x40] sm:$0xff]
    %v98 = vld [vmem:[%s3 + $0x48] sm:$0xff]
    %v99 = vld [vmem:[%s3 + $0x50] sm:$0xff]
    %v100 = vld [vmem:[%s3 + $0x58] sm:$0xff]
    %v101 = vld [vmem:[%s3 + $0x60] sm:$0xff]
    %v102 = vld [vmem:[%s3 + $0x68] sm:$0xff]
    %v103 = vld [vmem:[%s3 + $0x70] sm:$0xff]
    %v104 = vld [vmem:[%s3 + $0x78] sm:$0xff]
    %v105 = vld [vmem:[%s3 + $0x80] sm:$0xff]
    %v106 = vld [vmem:[%s3 + $0x88] sm:$0xff]
    %v107 = vld [vmem:[%s3 + $0x90] sm:$0xff]
    %v108 = vld [vmem:[%s3 + $0x98] sm:$0xff]
    %v109 = vld [vmem:[%s3 + $0xa0] sm:$0xff]
    %v110 = vld [vmem:[%s3 + $0xa8] sm:$0xff]
    %v111 = vld [vmem:[%s3 + $0xb0] sm:$0xff]
    %v112 = vld [vmem:[%s3 + $0xb8] sm:$0xff]
    %v113 = vld [vmem:[%s3 + $0xc0] sm:$0xff]
    %v114 = vld [vmem:[%s3 + $0xc8] sm:$0xff]
    %v115 = vld [vmem:[%s3 + $0xd0] sm:$0xff]
    %v116 = vld [vmem:[%s3 + $0xd8] sm:$0xff]
    %v117 = vld [vmem:[%s3 + $0xe0] sm:$0xff]
    %v118 = vld [vmem:[%s3 + $0xe8] sm:$0xff]
    %v119 = vld [vmem:[%s3 + $0xf0] sm:$0xff]
    %v120 = vld [vmem:[%s3 + $0xf8] sm:$0xff]
    %v121 = vld [vmem:[%s4] sm:$0xf]
    %v123 = vlaneseq
    %v124 = vshrl.u32 %v123, 7
    %v125 = vsub.s32 0, %v124
    %v126 = vrot.slane %v121, %v125
    %v127 = vlaneseq
    %v128 = vshrl.u32 %v127, 7
    %v129 = vsub.s32 1, %v128
    %v130 = vrot.slane %v121, %v129
    %v131 = vlaneseq
    %v132 = vshrl.u32 %v131, 7
    %v133 = vsub.s32 2, %v132
    %v134 = vrot.slane %v121, %v133
    %v135 = vlaneseq
    %v136 = vshrl.u32 %v135, 7
    %v137 = vsub.s32 3, %v136
    %v138 = vrot.slane %v121, %v137
    %v145 = vunpack.c.l.b16 %v87
    %v146 = vunpack.c.l.b16 %v88
    %v147 = vpack.c.b16 %v146, %v145
    %v181 = vunpack.c.l.b16 %v89
    %v182 = vunpack.c.h.b16 %v89
    %v183 = vunpack.c.l.b16 %v90
    %v184 = vunpack.c.h.b16 %v90
    %v185 = vunpack.c.l.b16 %v91
    %v186 = vunpack.c.h.b16 %v91
    %v187 = vunpack.c.l.b16 %v92
    %v188 = vunpack.c.h.b16 %v92
    %v189 = vunpack.c.l.b16 %v93
    %v190 = vunpack.c.h.b16 %v93
    %v191 = vunpack.c.l.b16 %v94
    %v192 = vunpack.c.h.b16 %v94
    %v193 = vunpack.c.l.b16 %v95
    %v194 = vunpack.c.h.b16 %v95
    %v195 = vunpack.c.l.b16 %v96
    %v196 = vunpack.c.h.b16 %v96
    %v197 = vunpack.c.l.b16 %v97
    %v198 = vunpack.c.h.b16 %v97
    %v199 = vunpack.c.l.b16 %v98
    %v200 = vunpack.c.h.b16 %v98
    %v201 = vunpack.c.l.b16 %v99
    %v202 = vunpack.c.h.b16 %v99
    %v203 = vunpack.c.l.b16 %v100
    %v204 = vunpack.c.h.b16 %v100
    %v205 = vunpack.c.l.b16 %v101
    %v206 = vunpack.c.h.b16 %v101
    %v207 = vunpack.c.l.b16 %v102
    %v208 = vunpack.c.h.b16 %v102
    %v209 = vunpack.c.l.b16 %v103
    %v210 = vunpack.c.h.b16 %v103
    %v211 = vunpack.c.l.b16 %v104
    %v212 = vunpack.c.h.b16 %v104
    %v213 = vunpack.c.l.b16 %v105
    %v214 = vunpack.c.h.b16 %v105
    %v215 = vunpack.c.l.b16 %v106
    %v216 = vunpack.c.h.b16 %v106
    %v217 = vunpack.c.l.b16 %v107
    %v218 = vunpack.c.h.b16 %v107
    %v219 = vunpack.c.l.b16 %v108
    %v220 = vunpack.c.h.b16 %v108
    %v221 = vunpack.c.l.b16 %v109
    %v222 = vunpack.c.h.b16 %v109
    %v223 = vunpack.c.l.b16 %v110
    %v224 = vunpack.c.h.b16 %v110
    %v225 = vunpack.c.l.b16 %v111
    %v226 = vunpack.c.h.b16 %v111
    %v227 = vunpack.c.l.b16 %v112
    %v228 = vunpack.c.h.b16 %v112
    %v229 = vunpack.c.l.b16 %v113
    %v230 = vunpack.c.h.b16 %v113
    %v231 = vunpack.c.l.b16 %v114
    %v232 = vunpack.c.h.b16 %v114
    %v233 = vunpack.c.l.b16 %v115
    %v234 = vunpack.c.h.b16 %v115
    %v235 = vunpack.c.l.b16 %v116
    %v236 = vunpack.c.h.b16 %v116
    %v237 = vunpack.c.l.b16 %v117
    %v238 = vunpack.c.h.b16 %v117
    %v239 = vunpack.c.l.b16 %v118
    %v240 = vunpack.c.h.b16 %v118
    %v241 = vunpack.c.l.b16 %v119
    %v242 = vunpack.c.h.b16 %v119
    %v243 = vunpack.c.l.b16 %v120
    %v244 = vunpack.c.h.b16 %v120
    %v245 = vpack.c.b16 %v185, %v181
    %v246 = vpack.c.b16 %v186, %v182
    %v247 = vpack.c.b16 %v187, %v183
    %v248 = vpack.c.b16 %v188, %v184
    %v249 = vpack.c.b16 %v193, %v189
    %v250 = vpack.c.b16 %v194, %v190
    %v251 = vpack.c.b16 %v195, %v191
    %v252 = vpack.c.b16 %v196, %v192
    %v253 = vpack.c.b16 %v201, %v197
    %v254 = vpack.c.b16 %v202, %v198
    %v255 = vpack.c.b16 %v203, %v199
    %v256 = vpack.c.b16 %v204, %v200
    %v257 = vpack.c.b16 %v209, %v205
    %v258 = vpack.c.b16 %v210, %v206
    %v259 = vpack.c.b16 %v211, %v207
    %v260 = vpack.c.b16 %v212, %v208
    %v261 = vpack.c.b16 %v217, %v213
    %v262 = vpack.c.b16 %v218, %v214
    %v263 = vpack.c.b16 %v219, %v215
    %v264 = vpack.c.b16 %v220, %v216
    %v265 = vpack.c.b16 %v225, %v221
    %v266 = vpack.c.b16 %v226, %v222
    %v267 = vpack.c.b16 %v227, %v223
    %v268 = vpack.c.b16 %v228, %v224
    %v269 = vpack.c.b16 %v233, %v229
    %v270 = vpack.c.b16 %v234, %v230
    %v271 = vpack.c.b16 %v235, %v231
    %v272 = vpack.c.b16 %v236, %v232
    %v273 = vpack.c.b16 %v241, %v237
    %v274 = vpack.c.b16 %v242, %v238
    %v275 = vpack.c.b16 %v243, %v239
    %v276 = vpack.c.b16 %v244, %v240
    %309 = vmatprep.subr.bf16.mxu0 %v274
    %310 = vmatpush1.bf16.msra.mxu0 %v273
    %311 = vmatprep.subr.bf16.mxu0 %v270
    %312 = vmatpush1.bf16.msra.mxu0 %v269
    %313 = vmatprep.subr.bf16.mxu0 %v266
    %314 = vmatpush1.bf16.msra.mxu0 %v265
    %315 = vmatprep.subr.bf16.mxu0 %v262
    %316 = vmatpush1.bf16.msra.mxu0 %v261
    %317 = vmatprep.subr.bf16.mxu0 %v258
    %318 = vmatpush1.bf16.msra.mxu0 %v257
    %319 = vmatprep.subr.bf16.mxu0 %v254
    %320 = vmatpush1.bf16.msra.mxu0 %v253
    %321 = vmatprep.subr.bf16.mxu0 %v250
    %322 = vmatpush1.bf16.msra.mxu0 %v249
    %323 = vmatprep.subr.bf16.mxu0 %v246
    %324 = vmatpush1.bf16.msra.mxu0 %v245
    %325 = vmatprep.subr.bf16.mxu0 0
    %326 = vmatpush2.bf16.msra.mxu0 0
    %327 = vmatprep.subr.bf16.mxu0 0
    %328 = vmatpush2.bf16.msra.mxu0 0
    %329 = vmatprep.subr.bf16.mxu0 0
    %330 = vmatpush2.bf16.msra.mxu0 0
    %331 = vmatprep.subr.bf16.mxu0 0
    %332 = vmatpush2.bf16.msra.mxu0 0
    %333 = vmatprep.subr.bf16.mxu0 0
    %334 = vmatpush2.bf16.msra.mxu0 0
    %335 = vmatprep.subr.bf16.mxu0 0
    %336 = vmatpush2.bf16.msra.mxu0 0
    %337 = vmatprep.subr.bf16.mxu0 0
    %338 = vmatpush2.bf16.msra.mxu0 0
    %339 = vmatprep.subr.bf16.mxu0 0
    %340 = vmatpush2.bf16.msra.mxu0 0
    %341 = vmatprep.mubr.bf16.mxu0 0
    %342 = vmatmul.mubr.bf16.gmra.mxu0 %v147
    %v343 = vpop.f32.mrf.mxu0
    %v344 = vadd.f32 %v126, %v343
    %v345 = vpop.f32.mrf.mxu0
    %v346 = vadd.f32 %v130, %v345
    %v347 = vpop.f32.mrf.mxu0
    %v348 = vadd.f32 %v126, %v347
    %v349 = vpop.f32.mrf.mxu0
    %v350 = vadd.f32 %v130, %v349
    %351 = vdwg.mxu0
    %352 = vmatprep.subr.bf16.mxu0 %v276
    %353 = vmatpush1.bf16.msra.mxu0 %v275
    %354 = vmatprep.subr.bf16.mxu0 %v272
    %355 = vmatpush1.bf16.msra.mxu0 %v271
    %356 = vmatprep.subr.bf16.mxu0 %v268
    %357 = vmatpush1.bf16.msra.mxu0 %v267
    %358 = vmatprep.subr.bf16.mxu0 %v264
    %359 = vmatpush1.bf16.msra.mxu0 %v263
    %360 = vmatprep.subr.bf16.mxu0 %v260
    %361 = vmatpush1.bf16.msra.mxu0 %v259
    %362 = vmatprep.subr.bf16.mxu0 %v256
    %363 = vmatpush1.bf16.msra.mxu0 %v255
    %364 = vmatprep.subr.bf16.mxu0 %v252
    %365 = vmatpush1.bf16.msra.mxu0 %v251
    %366 = vmatprep.subr.bf16.mxu0 %v248
    %367 = vmatpush1.bf16.msra.mxu0 %v247
    %368 = vmatprep.subr.bf16.mxu0 0
    %369 = vmatpush2.bf16.msra.mxu0 0
    %370 = vmatprep.subr.bf16.mxu0 0
    %371 = vmatpush2.bf16.msra.mxu0 0
    %372 = vmatprep.subr.bf16.mxu0 0
    %373 = vmatpush2.bf16.msra.mxu0 0
    %374 = vmatprep.subr.bf16.mxu0 0
    %375 = vmatpush2.bf16.msra.mxu0 0
    %376 = vmatprep.subr.bf16.mxu0 0
    %377 = vmatpush2.bf16.msra.mxu0 0
    %378 = vmatprep.subr.bf16.mxu0 0
    %379 = vmatpush2.bf16.msra.mxu0 0
    %380 = vmatprep.subr.bf16.mxu0 0
    %381 = vmatpush2.bf16.msra.mxu0 0
    %382 = vmatprep.subr.bf16.mxu0 0
    %383 = vmatpush2.bf16.msra.mxu0 0
    %384 = vmatprep.mubr.bf16.mxu0 0
    %385 = vmatmul.mubr.bf16.gmra.mxu0 %v147
    %v386 = vpop.f32.mrf.mxu0
    %v387 = vadd.f32 %v134, %v386
    %v388 = vpop.f32.mrf.mxu0
    %v389 = vadd.f32 %v138, %v388
    %v390 = vpop.f32.mrf.mxu0
    %v391 = vadd.f32 %v134, %v390
    %v392 = vpop.f32.mrf.mxu0
    %v393 = vadd.f32 %v138, %v392
    %394 = vdwg.mxu0
    %v395 = vmul.f32 %v344, 0.5
    %v396 = vmul.f32 %v346, 0.5
    %v397 = vmul.f32 %v387, 0.5
    %v398 = vmul.f32 %v389, 0.5
    %v399 = vmul.f32 %v348, 0.5
    %v400 = vmul.f32 %v350, 0.5
    %v401 = vmul.f32 %v391, 0.5
    %v402 = vmul.f32 %v393, 0.5
    %v403 = vmul.f32 %v344, 0.70710677
    %v404 = vmul.f32 %v346, 0.70710677
    %v405 = vmul.f32 %v387, 0.70710677
    %v406 = vmul.f32 %v389, 0.70710677
    %v407 = vmul.f32 %v348, 0.70710677
    %v408 = vmul.f32 %v350, 0.70710677
    %v409 = vmul.f32 %v391, 0.70710677
    %v410 = vmul.f32 %v393, 0.70710677
    %v411 = verf.f32.pop %v403
    %v412 = verf.f32.pop %v404
    %v413 = verf.f32.pop %v405
    %v414 = verf.f32.pop %v406
    %v415 = verf.f32.pop %v407
    %v416 = verf.f32.pop %v408
    %v417 = verf.f32.pop %v409
    %v418 = verf.f32.pop %v410
    %v419 = vadd.f32 %v411, 1.0
    %v420 = vadd.f32 %v412, 1.0
    %v421 = vadd.f32 %v413, 1.0
    %v422 = vadd.f32 %v414, 1.0
    %v423 = vadd.f32 %v415, 1.0
    %v424 = vadd.f32 %v416, 1.0
    %v425 = vadd.f32 %v417, 1.0
    %v426 = vadd.f32 %v418, 1.0
    %v427 = vmul.f32 %v395, %v419
    %v428 = vmul.f32 %v396, %v420
    %v429 = vmul.f32 %v397, %v421
    %v430 = vmul.f32 %v398, %v422
    %v431 = vmul.f32 %v399, %v423
    %v432 = vmul.f32 %v400, %v424
    %v433 = vmul.f32 %v401, %v425
    %v434 = vmul.f32 %v402, %v426
    %v435 = vld [vmem:[#allocation3] sm:$0xff]
    %v436 = vld [vmem:[#allocation3 + $0x8] sm:$0xff]
    %v437 = vpack.c.bf16 %v431, %v427
    %v438 = vpack.c.bf16 %v432, %v428
    %v439 = vpack.c.bf16 %v433, %v429
    %v440 = vpack.c.bf16 %v434, %v430
    %v441 = vld [vmem:[%s5] sm:$0xf]
    %v442 = vld [vmem:[%s5 + $0x4] sm:$0xf]
    %v443 = vld [vmem:[%s5 + $0x8] sm:$0xf]
    %v444 = vld [vmem:[%s5 + $0xc] sm:$0xf]
    %v445 = vld [vmem:[%s5 + $0x10] sm:$0xf]
    %v446 = vld [vmem:[%s5 + $0x14] sm:$0xf]
    %v447 = vld [vmem:[%s5 + $0x18] sm:$0xf]
    %v448 = vld [vmem:[%s5 + $0x1c] sm:$0xf]
    %v449 = vld [vmem:[%s5 + $0x20] sm:$0xf]
    %v450 = vld [vmem:[%s5 + $0x24] sm:$0xf]
    %v451 = vld [vmem:[%s5 + $0x28] sm:$0xf]
    %v452 = vld [vmem:[%s5 + $0x2c] sm:$0xf]
    %v453 = vld [vmem:[%s5 + $0x30] sm:$0xf]
    %v454 = vld [vmem:[%s5 + $0x34] sm:$0xf]
    %v455 = vld [vmem:[%s5 + $0x38] sm:$0xf]
    %v456 = vld [vmem:[%s5 + $0x3c] sm:$0xf]
    %v457 = vld [vmem:[%s5 + $0x40] sm:$0xf]
    %v458 = vld [vmem:[%s5 + $0x44] sm:$0xf]
    %v459 = vld [vmem:[%s5 + $0x48] sm:$0xf]
    %v460 = vld [vmem:[%s5 + $0x4c] sm:$0xf]
    %v461 = vld [vmem:[%s5 + $0x50] sm:$0xf]
    %v462 = vld [vmem:[%s5 + $0x54] sm:$0xf]
    %v463 = vld [vmem:[%s5 + $0x58] sm:$0xf]
    %v464 = vld [vmem:[%s5 + $0x5c] sm:$0xf]
    %v465 = vld [vmem:[%s5 + $0x60] sm:$0xf]
    %v466 = vld [vmem:[%s5 + $0x64] sm:$0xf]
    %v467 = vld [vmem:[%s5 + $0x68] sm:$0xf]
    %v468 = vld [vmem:[%s5 + $0x6c] sm:$0xf]
    %v469 = vld [vmem:[%s5 + $0x70] sm:$0xf]
    %v470 = vld [vmem:[%s5 + $0x74] sm:$0xf]
    %v471 = vld [vmem:[%s5 + $0x78] sm:$0xf]
    %v472 = vld [vmem:[%s5 + $0x7c] sm:$0xf]
    %v473 = vld [vmem:[%s5 + $0x80] sm:$0xf]
    %v474 = vld [vmem:[%s5 + $0x84] sm:$0xf]
    %v475 = vld [vmem:[%s5 + $0x88] sm:$0xf]
    %v476 = vld [vmem:[%s5 + $0x8c] sm:$0xf]
    %v477 = vld [vmem:[%s5 + $0x90] sm:$0xf]
    %v478 = vld [vmem:[%s5 + $0x94] sm:$0xf]
    %v479 = vld [vmem:[%s5 + $0x98] sm:$0xf]
    %v480 = vld [vmem:[%s5 + $0x9c] sm:$0xf]
    %v481 = vld [vmem:[%s5 + $0xa0] sm:$0xf]
    %v482 = vld [vmem:[%s5 + $0xa4] sm:$0xf]
    %v483 = vld [vmem:[%s5 + $0xa8] sm:$0xf]
    %v484 = vld [vmem:[%s5 + $0xac] sm:$0xf]
    %v485 = vld [vmem:[%s5 + $0xb0] sm:$0xf]
    %v486 = vld [vmem:[%s5 + $0xb4] sm:$0xf]
    %v487 = vld [vmem:[%s5 + $0xb8] sm:$0xf]
    %v488 = vld [vmem:[%s5 + $0xbc] sm:$0xf]
    %v489 = vld [vmem:[%s5 + $0xc0] sm:$0xf]
    %v490 = vld [vmem:[%s5 + $0xc4] sm:$0xf]
    %v491 = vld [vmem:[%s5 + $0xc8] sm:$0xf]
    %v492 = vld [vmem:[%s5 + $0xcc] sm:$0xf]
    %v493 = vld [vmem:[%s5 + $0xd0] sm:$0xf]
    %v494 = vld [vmem:[%s5 + $0xd4] sm:$0xf]
    %v495 = vld [vmem:[%s5 + $0xd8] sm:$0xf]
    %v496 = vld [vmem:[%s5 + $0xdc] sm:$0xf]
    %v497 = vld [vmem:[%s5 + $0xe0] sm:$0xf]
    %v498 = vld [vmem:[%s5 + $0xe4] sm:$0xf]
    %v499 = vld [vmem:[%s5 + $0xe8] sm:$0xf]
    %v500 = vld [vmem:[%s5 + $0xec] sm:$0xf]
    %v501 = vld [vmem:[%s5 + $0xf0] sm:$0xf]
    %v502 = vld [vmem:[%s5 + $0xf4] sm:$0xf]
    %v503 = vld [vmem:[%s5 + $0xf8] sm:$0xf]
    %v504 = vld [vmem:[%s5 + $0xfc] sm:$0xf]
    %v569 = vunpack.c.l.b16 %v441
    %v570 = vunpack.c.l.b16 %v442
    %v571 = vunpack.c.l.b16 %v443
    %v572 = vunpack.c.l.b16 %v444
    %v573 = vunpack.c.l.b16 %v445
    %v574 = vunpack.c.l.b16 %v446
    %v575 = vunpack.c.l.b16 %v447
    %v576 = vunpack.c.l.b16 %v448
    %v577 = vunpack.c.l.b16 %v449
    %v578 = vunpack.c.l.b16 %v450
    %v579 = vunpack.c.l.b16 %v451
    %v580 = vunpack.c.l.b16 %v452
    %v581 = vunpack.c.l.b16 %v453
    %v582 = vunpack.c.l.b16 %v454
    %v583 = vunpack.c.l.b16 %v455
    %v584 = vunpack.c.l.b16 %v456
    %v585 = vunpack.c.l.b16 %v457
    %v586 = vunpack.c.l.b16 %v458
    %v587 = vunpack.c.l.b16 %v459
    %v588 = vunpack.c.l.b16 %v460
    %v589 = vunpack.c.l.b16 %v461
    %v590 = vunpack.c.l.b16 %v462
    %v591 = vunpack.c.l.b16 %v463
    %v592 = vunpack.c.l.b16 %v464
    %v593 = vunpack.c.l.b16 %v465
    %v594 = vunpack.c.l.b16 %v466
    %v595 = vunpack.c.l.b16 %v467
    %v596 = vunpack.c.l.b16 %v468
    %v597 = vunpack.c.l.b16 %v469
    %v598 = vunpack.c.l.b16 %v470
    %v599 = vunpack.c.l.b16 %v471
    %v600 = vunpack.c.l.b16 %v472
    %v601 = vunpack.c.l.b16 %v473
    %v602 = vunpack.c.l.b16 %v474
    %v603 = vunpack.c.l.b16 %v475
    %v604 = vunpack.c.l.b16 %v476
    %v605 = vunpack.c.l.b16 %v477
    %v606 = vunpack.c.l.b16 %v478
    %v607 = vunpack.c.l.b16 %v479
    %v608 = vunpack.c.l.b16 %v480
    %v609 = vunpack.c.l.b16 %v481
    %v610 = vunpack.c.l.b16 %v482
    %v611 = vunpack.c.l.b16 %v483
    %v612 = vunpack.c.l.b16 %v484
    %v613 = vunpack.c.l.b16 %v485
    %v614 = vunpack.c.l.b16 %v486
    %v615 = vunpack.c.l.b16 %v487
    %v616 = vunpack.c.l.b16 %v488
    %v617 = vunpack.c.l.b16 %v489
    %v618 = vunpack.c.l.b16 %v490
    %v619 = vunpack.c.l.b16 %v491
    %v620 = vunpack.c.l.b16 %v492
    %v621 = vunpack.c.l.b16 %v493
    %v622 = vunpack.c.l.b16 %v494
    %v623 = vunpack.c.l.b16 %v495
    %v624 = vunpack.c.l.b16 %v496
    %v625 = vunpack.c.l.b16 %v497
    %v626 = vunpack.c.l.b16 %v498
    %v627 = vunpack.c.l.b16 %v499
    %v628 = vunpack.c.l.b16 %v500
    %v629 = vunpack.c.l.b16 %v501
    %v630 = vunpack.c.l.b16 %v502
    %v631 = vunpack.c.l.b16 %v503
    %v632 = vunpack.c.l.b16 %v504
    %v633 = vpack.c.b16 %v570, %v569
    %v634 = vpack.c.b16 %v572, %v571
    %v635 = vpack.c.b16 %v574, %v573
    %v636 = vpack.c.b16 %v576, %v575
    %v637 = vpack.c.b16 %v578, %v577
    %v638 = vpack.c.b16 %v580, %v579
    %v639 = vpack.c.b16 %v582, %v581
    %v640 = vpack.c.b16 %v584, %v583
    %v641 = vpack.c.b16 %v586, %v585
    %v642 = vpack.c.b16 %v588, %v587
    %v643 = vpack.c.b16 %v590, %v589
    %v644 = vpack.c.b16 %v592, %v591
    %v645 = vpack.c.b16 %v594, %v593
    %v646 = vpack.c.b16 %v596, %v595
    %v647 = vpack.c.b16 %v598, %v597
    %v648 = vpack.c.b16 %v600, %v599
    %v649 = vpack.c.b16 %v602, %v601
    %v650 = vpack.c.b16 %v604, %v603
    %v651 = vpack.c.b16 %v606, %v605
    %v652 = vpack.c.b16 %v608, %v607
    %v653 = vpack.c.b16 %v610, %v609
    %v654 = vpack.c.b16 %v612, %v611
    %v655 = vpack.c.b16 %v614, %v613
    %v656 = vpack.c.b16 %v616, %v615
    %v657 = vpack.c.b16 %v618, %v617
    %v658 = vpack.c.b16 %v620, %v619
    %v659 = vpack.c.b16 %v622, %v621
    %v660 = vpack.c.b16 %v624, %v623
    %v661 = vpack.c.b16 %v626, %v625
    %v662 = vpack.c.b16 %v628, %v627
    %v663 = vpack.c.b16 %v630, %v629
    %v664 = vpack.c.b16 %v632, %v631
    %697 = vmatprep.subr.bf16.mxu0 0
    %698 = vmatpush1.bf16.msra.mxu0 %v640
    %699 = vmatprep.subr.bf16.mxu0 0
    %700 = vmatpush1.bf16.msra.mxu0 %v639
    %701 = vmatprep.subr.bf16.mxu0 0
    %702 = vmatpush1.bf16.msra.mxu0 %v638
    %703 = vmatprep.subr.bf16.mxu0 0
    %704 = vmatpush1.bf16.msra.mxu0 %v637
    %705 = vmatprep.subr.bf16.mxu0 0
    %706 = vmatpush1.bf16.msra.mxu0 %v636
    %707 = vmatprep.subr.bf16.mxu0 0
    %708 = vmatpush1.bf16.msra.mxu0 %v635
    %709 = vmatprep.subr.bf16.mxu0 0
    %710 = vmatpush1.bf16.msra.mxu0 %v634
    %711 = vmatprep.subr.bf16.mxu0 0
    %712 = vmatpush1.bf16.msra.mxu0 %v633
    %713 = vmatprep.subr.bf16.mxu0 0
    %714 = vmatpush2.bf16.msra.mxu0 %v648
    %715 = vmatprep.subr.bf16.mxu0 0
    %716 = vmatpush2.bf16.msra.mxu0 %v647
    %717 = vmatprep.subr.bf16.mxu0 0
    %718 = vmatpush2.bf16.msra.mxu0 %v646
    %719 = vmatprep.subr.bf16.mxu0 0
    %720 = vmatpush2.bf16.msra.mxu0 %v645
    %721 = vmatprep.subr.bf16.mxu0 0
    %722 = vmatpush2.bf16.msra.mxu0 %v644
    %723 = vmatprep.subr.bf16.mxu0 0
    %724 = vmatpush2.bf16.msra.mxu0 %v643
    %725 = vmatprep.subr.bf16.mxu0 0
    %726 = vmatpush2.bf16.msra.mxu0 %v642
    %727 = vmatprep.subr.bf16.mxu0 0
    %728 = vmatpush2.bf16.msra.mxu0 %v641
    %729 = vmatprep.mubr.bf16.mxu0 %v438
    %730 = vmatmul.mubr.bf16.gmra.mxu0 %v437
    %v731 = vpop.f32.mrf.mxu0
    %v732 = vadd.f32 0.0, %v731
    %v733 = vpop.f32.mrf.mxu0
    %v734 = vpop.f32.mrf.mxu0
    %v735 = vadd.f32 0.0, %v734
    %v736 = vpop.f32.mrf.mxu0
    %737 = vdwg.mxu0
    %738 = vmatprep.subr.bf16.mxu0 0
    %739 = vmatpush1.bf16.msra.mxu0 %v656
    %740 = vmatprep.subr.bf16.mxu0 0
    %741 = vmatpush1.bf16.msra.mxu0 %v655
    %742 = vmatprep.subr.bf16.mxu0 0
    %743 = vmatpush1.bf16.msra.mxu0 %v654
    %744 = vmatprep.subr.bf16.mxu0 0
    %745 = vmatpush1.bf16.msra.mxu0 %v653
    %746 = vmatprep.subr.bf16.mxu0 0
    %747 = vmatpush1.bf16.msra.mxu0 %v652
    %748 = vmatprep.subr.bf16.mxu0 0
    %749 = vmatpush1.bf16.msra.mxu0 %v651
    %750 = vmatprep.subr.bf16.mxu0 0
    %751 = vmatpush1.bf16.msra.mxu0 %v650
    %752 = vmatprep.subr.bf16.mxu0 0
    %753 = vmatpush1.bf16.msra.mxu0 %v649
    %754 = vmatprep.subr.bf16.mxu0 0
    %755 = vmatpush2.bf16.msra.mxu0 %v664
    %756 = vmatprep.subr.bf16.mxu0 0
    %757 = vmatpush2.bf16.msra.mxu0 %v663
    %758 = vmatprep.subr.bf16.mxu0 0
    %759 = vmatpush2.bf16.msra.mxu0 %v662
    %760 = vmatprep.subr.bf16.mxu0 0
    %761 = vmatpush2.bf16.msra.mxu0 %v661
    %762 = vmatprep.subr.bf16.mxu0 0
    %763 = vmatpush2.bf16.msra.mxu0 %v660
    %764 = vmatprep.subr.bf16.mxu0 0
    %765 = vmatpush2.bf16.msra.mxu0 %v659
    %766 = vmatprep.subr.bf16.mxu0 0
    %767 = vmatpush2.bf16.msra.mxu0 %v658
    %768 = vmatprep.subr.bf16.mxu0 0
    %769 = vmatpush2.bf16.msra.mxu0 %v657
    %770 = vmatprep.mubr.bf16.mxu0 %v440
    %771 = vmatmul.mubr.bf16.gmra.mxu0 %v439
    %v772 = vpop.f32.mrf.mxu0
    %v773 = vadd.f32 %v732, %v772
    %v774 = vpop.f32.mrf.mxu0
    %v775 = vpop.f32.mrf.mxu0
    %v776 = vadd.f32 %v735, %v775
    %v777 = vpop.f32.mrf.mxu0
    %778 = vdwg.mxu0
    %v779 = vadd.f32 %v435, %v773
    %v780 = vadd.f32 %v436, %v776
    %781 = vst [vmem:[#allocation3] sm:$0xff] %v779
    %782 = vst [vmem:[#allocation3 + $0x8] sm:$0xff] %v780
    // Predicated region
    $region34: #{cross_attention_block.12} parent=1 // pred_check
      %p783 = pneg %p28
    $region35: #{cross_attention_block.12} parent=1 // pred_check_branch
      %785 = sbr.rel (%p783) target = $region37
    $region36: #{cross_attention_block.12} parent=1 // pred_region
      %v786 = vld [vmem:[%s0] sm:$0xff]
      %v787 = vld [vmem:[%s0 + $0x8] sm:$0xff]
      %v788 = vld [vmem:[#allocation3] sm:$0xff]
      %v789 = vld [vmem:[#allocation3 + $0x8] sm:$0xff]
      %v790 = vadd.f32 %v786, %v788
      %v791 = vadd.f32 %v787, %v789
      %v792 = vld [vmem:[%s6] sm:$0x1]
      %v794 = vlaneseq
      %v795 = vshrl.u32 %v794, 7
      %v796 = vsub.s32 0, %v795
      %v797 = vrot.slane %v792, %v796
      %v799 = vadd.f32 %v790, %v797
      %v800 = vadd.f32 %v791, %v797
      %801 = vst [vmem:[#allocation4] sm:$0xff] %v799
      %802 = vst [vmem:[#allocation4 + $0x8] sm:$0xff] %v800
    $region37: #{cross_attention_block.12} parent=1 // pred_fallthru
      _
    // Predicated region
    $region38: #{cross_attention_block.12} parent=1 // pred_check
      _
    $region39: #{cross_attention_block.12} parent=1 // pred_check_branch
      %804 = sbr.rel (0) target = $region41
    $region40: #{cross_attention_block.12} parent=1 // pred_region
      %s806 = ssub.s32 256, 256
      %807 = vsyncadd [#allocation5], %s806
      %s808 = sshll.u32 [#allocation4], 4
      %s809 = int_to_ptr.vmem [resolvable:$true] %s808
      %814 = dma.vmem_to_hbm [thread:$0]  %s809, 256, %s7, [#allocation5], 128, 128, 8
    $region41: #{cross_attention_block.12} parent=1 // pred_fallthru
      _
    // Predicated region
    $region42: #{cross_attention_block.12} parent=1 // pred_check
      _
    $region43: #{cross_attention_block.12} parent=1 // pred_check_branch
      %816 = sbr.rel (0) target = $region45
    $region44: #{cross_attention_block.12} parent=1 // pred_region
      %817 = dma.done [#allocation5], 256
    $region45: #{cross_attention_block.12} parent=1 // pred_fallthru
      _
    %818 = vsyncpa [#allocation5], 1

// kernel: cross_attention_block.13
$region0: #{cross_attention_block.13}
  #allocation0 [shape = 'u32[]', space=smem, size = 0x4, offset = 0x4, fixed_abs, tag = 'smem constant byte address 0x4 - core index']
  #allocation1 [shape = 'u32[144,128]{1,0:T(1,128)}', space=vmem, size = 0x12000, scoped, tag = 'internal scratch']
  #allocation2 [shape = 'bf16[32,128]{1,0:T(8,128)(2,1)}', space=vmem, size = 0x2000, scoped, tag = 'scratch operand']
  #allocation3 [shape = 'f32[32,128]{1,0:T(8,128)}', space=vmem, size = 0x4000, scoped, tag = 'scratch operand']
  %s0 = inlined_call_operand.vmem [shape: f32[32,128], index: 0, kind: input, shape index: {}]
  %s1 = inlined_call_operand.vmem [shape: f32[1,128], index: 1, kind: input, shape index: {}]
  %s2 = inlined_call_operand.vmem [shape: f32[1,128], index: 2, kind: input, shape index: {}]
  %s3 = inlined_call_operand.vmem [shape: bf16[128,512], index: 3, kind: input, shape index: {}]
  %s4 = inlined_call_operand.vmem [shape: f32[1,512], index: 4, kind: input, shape index: {}]
  %s5 = inlined_call_operand.vmem [shape: bf16[512,128], index: 5, kind: input, shape index: {}]
  %s6 = inlined_call_operand.vmem [shape: f32[1,128], index: 6, kind: input, shape index: {}]
  %s7 = inlined_call_operand.hbm [shape: f32[32,128], index: 7, kind: output, shape index: {}]
  %s8 = sld [smem:[#allocation0]]
  $region46: #{cross_attention_block.13} parent=0
    _
  %s10 = ssub.s32 1, %s8
  %s11 = scalar_select 0, %s10, %s8
  $region1: #{cross_attention_block.13} parent=0
    #allocation4 [shape = 'u8[16384]{0}', space=vmem, size = 0x4000, scoped, tag = 'output window, operand 0, single buffered']
    #allocation5 [shape = 's32[1]{0}', space=sflag, size = 0x4, scoped, tag = 'scoped memory for cross_attention_block.13']
    %12 = vsyncpa [#allocation5], 0
    // Predicated region
    $region2: #{cross_attention_block.13} parent=1 // pred_check
      _
    $region3: #{cross_attention_block.13} parent=1 // pred_check_branch
      %14 = sbr.rel (0) target = $region5
    $region4: #{cross_attention_block.13} parent=1 // pred_region
      _
    $region5: #{cross_attention_block.13} parent=1 // pred_fallthru
      _
    // Predicated region
    $region6: #{cross_attention_block.13} parent=1 // pred_check
      _
    $region7: #{cross_attention_block.13} parent=1 // pred_check_branch
      %16 = sbr.rel (0) target = $region9
    $region8: #{cross_attention_block.13} parent=1 // pred_region
      _
    $region9: #{cross_attention_block.13} parent=1 // pred_fallthru
      _
    // Predicated region
    $region10: #{cross_attention_block.13} parent=1 // pred_check
      _
    $region11: #{cross_attention_block.13} parent=1 // pred_check_branch
      %18 = sbr.rel (0) target = $region13
    $region12: #{cross_attention_block.13} parent=1 // pred_region
      _
    $region13: #{cross_attention_block.13} parent=1 // pred_fallthru
      _
    // Predicated region
    $region14: #{cross_attention_block.13} parent=1 // pred_check
      _
    $region15: #{cross_attention_block.13} parent=1 // pred_check_branch
      %20 = sbr.rel (0) target = $region17
    $region16: #{cross_attention_block.13} parent=1 // pred_region
      _
    $region17: #{cross_attention_block.13} parent=1 // pred_fallthru
      _
    // Predicated region
    $region18: #{cross_attention_block.13} parent=1 // pred_check
      _
    $region19: #{cross_attention_block.13} parent=1 // pred_check_branch
      %22 = sbr.rel (0) target = $region21
    $region20: #{cross_attention_block.13} parent=1 // pred_region
      _
    $region21: #{cross_attention_block.13} parent=1 // pred_fallthru
      _
    // Predicated region
    $region22: #{cross_attention_block.13} parent=1 // pred_check
      _
    $region23: #{cross_attention_block.13} parent=1 // pred_check_branch
      %24 = sbr.rel (0) target = $region25
    $region24: #{cross_attention_block.13} parent=1 // pred_region
      _
    $region25: #{cross_attention_block.13} parent=1 // pred_fallthru
      _
    // Predicated region
    $region26: #{cross_attention_block.13} parent=1 // pred_check
      _
    $region27: #{cross_attention_block.13} parent=1 // pred_check_branch
      %26 = sbr.rel (0) target = $region29
    $region28: #{cross_attention_block.13} parent=1 // pred_region
      _
    $region29: #{cross_attention_block.13} parent=1 // pred_fallthru
      _
    %p28 = scmp.eq.s32.totalorder 0, 0
    // Predicated region
    $region30: #{cross_attention_block.13} parent=1 // pred_check
      %p29 = pneg %p28
    $region31: #{cross_attention_block.13} parent=1 // pred_check_branch
      %31 = sbr.rel (%p29) target = $region33
    $region32: #{cross_attention_block.13} parent=1 // pred_region
      %v32 = vld [vmem:[%s0] sm:$0xff]
      %v33 = vld [vmem:[%s0 + $0x8] sm:$0xff]
      %v34 = vld [vmem:[%s0 + $0x10] sm:$0xff]
      %v35 = vld [vmem:[%s0 + $0x18] sm:$0xff]
      %36 = vadd.xlane.f32.xlu0 %v32
      %v37 = vpop.xlane.xlu0 %36
      %38 = vadd.xlane.f32.xlu0 %v33
      %v39 = vpop.xlane.xlu0 %38
      %40 = vadd.xlane.f32.xlu0 %v34
      %v41 = vpop.xlane.xlu0 %40
      %42 = vadd.xlane.f32.xlu0 %v35
      %v43 = vpop.xlane.xlu0 %42
      %v44 = vrcp.pop 128.0
      %v45 = vmul.f32 %v37, %v44
      %v46 = vmul.f32 %v39, %v44
      %v47 = vmul.f32 %v41, %v44
      %v48 = vmul.f32 %v43, %v44
      %v49 = vsub.f32 %v32, %v45
      %v50 = vsub.f32 %v33, %v46
      %v51 = vsub.f32 %v34, %v47
      %v52 = vsub.f32 %v35, %v48
      %v53 = vmul.f32 %v49, %v49
      %v54 = vmul.f32 %v50, %v50
      %v55 = vmul.f32 %v51, %v51
      %v56 = vmul.f32 %v52, %v52
      %57 = vadd.xlane.f32.xlu0 %v53
      %v58 = vpop.xlane.xlu0 %57
      %59 = vadd.xlane.f32.xlu0 %v54
      %v60 = vpop.xlane.xlu0 %59
      %61 = vadd.xlane.f32.xlu0 %v55
      %v62 = vpop.xlane.xlu0 %61
      %63 = vadd.xlane.f32.xlu0 %v56
      %v64 = vpop.xlane.xlu0 %63
      %v65 = vmul.f32 %v58, %v44
      %v66 = vmul.f32 %v60, %v44
      %v67 = vmul.f32 %v62, %v44
      %v68 = vmul.f32 %v64, %v44
      %v69 = vadd.f32 %v65, 1e-05
      %v70 = vadd.f32 %v66, 1e-05
      %v71 = vadd.f32 %v67, 1e-05
      %v72 = vadd.f32 %v68, 1e-05
      %v73 = vrsqrt.pop %v69
      %v74 = vrsqrt.pop %v70
      %v75 = vrsqrt.pop %v71
      %v76 = vrsqrt.pop %v72
      %v77 = vmul.f32 %v49, %v73
      %v78 = vmul.f32 %v50, %v74
      %v79 = vmul.f32 %v51, %v75
      %v80 = vmul.f32 %v52, %v76
      %v81 = vld [vmem:[%s1] sm:$0x1]
      %v83 = vlaneseq
      %v84 = vshrl.u32 %v83, 7
      %v85 = vsub.s32 0, %v84
      %v86 = vrot.slane %v81, %v85
      %v88 = vmul.f32 %v77, %v86
      %v89 = vmul.f32 %v78, %v86
      %v90 = vmul.f32 %v79, %v86
      %v91 = vmul.f32 %v80, %v86
      %v92 = vld [vmem:[%s2] sm:$0x1]
      %v94 = vlaneseq
      %v95 = vshrl.u32 %v94, 7
      %v96 = vsub.s32 0, %v95
      %v97 = vrot.slane %v92, %v96
      %v99 = vadd.f32 %v88, %v97
      %v100 = vadd.f32 %v89, %v97
      %v101 = vadd.f32 %v90, %v97
      %v102 = vadd.f32 %v91, %v97
      %v103 = vpack.c.bf16 %v100, %v99
      %v104 = vpack.c.bf16 %v102, %v101
      %v107 = vunpack.c.l.b16 %v103
      %v108 = vunpack.c.h.b16 %v103
      %v109 = vunpack.c.l.b16 %v104
      %v110 = vunpack.c.h.b16 %v104
      %v111 = vpack.c.b16 %v107, %v107
      %v112 = vpack.c.b16 %v108, %v108
      %v113 = vpack.c.b16 %v109, %v109
      %v114 = vpack.c.b16 %v110, %v110
      %119 = vst [vmem:[#allocation2] sm:$0xf] %v111
      %120 = vst [vmem:[#allocation2 + $0x4] sm:$0xf] %v112
      %121 = vst [vmem:[#allocation2 + $0x8] sm:$0xf] %v113
      %122 = vst [vmem:[#allocation2 + $0xc] sm:$0xf] %v114
      %123 = vst [vmem:[#allocation3] sm:$0xff] 0.0
      %124 = vst [vmem:[#allocation3 + $0x8] sm:$0xff] 0.0
      %125 = vst [vmem:[#allocation3 + $0x10] sm:$0xff] 0.0
      %126 = vst [vmem:[#allocation3 + $0x18] sm:$0xff] 0.0
    $region33: #{cross_attention_block.13} parent=1 // pred_fallthru
      _
    %v127 = vld [vmem:[#allocation2] sm:$0xf]
    %v128 = vld [vmem:[#allocation2 + $0x4] sm:$0xf]
    %v129 = vld [vmem:[#allocation2 + $0x8] sm:$0xf]
    %v130 = vld [vmem:[#allocation2 + $0xc] sm:$0xf]
    %v131 = vld [vmem:[%s3] sm:$0xff]
    %v132 = vld [vmem:[%s3 + $0x8] sm:$0xff]
    %v133 = vld [vmem:[%s3 + $0x10] sm:$0xff]
    %v134 = vld [vmem:[%s3 + $0x18] sm:$0xff]
    %v135 = vld [vmem:[%s3 + $0x20] sm:$0xff]
    %v136 = vld [vmem:[%s3 + $0x28] sm:$0xff]
    %v137 = vld [vmem:[%s3 + $0x30] sm:$0xff]
    %v138 = vld [vmem:[%s3 + $0x38] sm:$0xff]
    %v139 = vld [vmem:[%s3 + $0x40] sm:$0xff]
    %v140 = vld [vmem:[%s3 + $0x48] sm:$0xff]
    %v141 = vld [vmem:[%s3 + $0x50] sm:$0xff]
    %v142 = vld [vmem:[%s3 + $0x58] sm:$0xff]
    %v143 = vld [vmem:[%s3 + $0x60] sm:$0xff]
    %v144 = vld [vmem:[%s3 + $0x68] sm:$0xff]
    %v145 = vld [vmem:[%s3 + $0x70] sm:$0xff]
    %v146 = vld [vmem:[%s3 + $0x78] sm:$0xff]
    %v147 = vld [vmem:[%s3 + $0x80] sm:$0xff]
    %v148 = vld [vmem:[%s3 + $0x88] sm:$0xff]
    %v149 = vld [vmem:[%s3 + $0x90] sm:$0xff]
    %v150 = vld [vmem:[%s3 + $0x98] sm:$0xff]
    %v151 = vld [vmem:[%s3 + $0xa0] sm:$0xff]
    %v152 = vld [vmem:[%s3 + $0xa8] sm:$0xff]
    %v153 = vld [vmem:[%s3 + $0xb0] sm:$0xff]
    %v154 = vld [vmem:[%s3 + $0xb8] sm:$0xff]
    %v155 = vld [vmem:[%s3 + $0xc0] sm:$0xff]
    %v156 = vld [vmem:[%s3 + $0xc8] sm:$0xff]
    %v157 = vld [vmem:[%s3 + $0xd0] sm:$0xff]
    %v158 = vld [vmem:[%s3 + $0xd8] sm:$0xff]
    %v159 = vld [vmem:[%s3 + $0xe0] sm:$0xff]
    %v160 = vld [vmem:[%s3 + $0xe8] sm:$0xff]
    %v161 = vld [vmem:[%s3 + $0xf0] sm:$0xff]
    %v162 = vld [vmem:[%s3 + $0xf8] sm:$0xff]
    %v163 = vld [vmem:[%s4] sm:$0xf]
    %v165 = vlaneseq
    %v166 = vshrl.u32 %v165, 7
    %v167 = vsub.s32 0, %v166
    %v168 = vrot.slane %v163, %v167
    %v169 = vlaneseq
    %v170 = vshrl.u32 %v169, 7
    %v171 = vsub.s32 1, %v170
    %v172 = vrot.slane %v163, %v171
    %v173 = vlaneseq
    %v174 = vshrl.u32 %v173, 7
    %v175 = vsub.s32 2, %v174
    %v176 = vrot.slane %v163, %v175
    %v177 = vlaneseq
    %v178 = vshrl.u32 %v177, 7
    %v179 = vsub.s32 3, %v178
    %v180 = vrot.slane %v163, %v179
    %v189 = vunpack.c.l.b16 %v127
    %v190 = vunpack.c.l.b16 %v128
    %v191 = vunpack.c.l.b16 %v129
    %v192 = vunpack.c.l.b16 %v130
    %v193 = vpack.c.b16 %v190, %v189
    %v194 = vpack.c.b16 %v192, %v191
    %v229 = vunpack.c.l.b16 %v131
    %v230 = vunpack.c.h.b16 %v131
    %v231 = vunpack.c.l.b16 %v132
    %v232 = vunpack.c.h.b16 %v132
    %v233 = vunpack.c.l.b16 %v133
    %v234 = vunpack.c.h.b16 %v133
    %v235 = vunpack.c.l.b16 %v134
    %v236 = vunpack.c.h.b16 %v134
    %v237 = vunpack.c.l.b16 %v135
    %v238 = vunpack.c.h.b16 %v135
    %v239 = vunpack.c.l.b16 %v136
    %v240 = vunpack.c.h.b16 %v136
    %v241 = vunpack.c.l.b16 %v137
    %v242 = vunpack.c.h.b16 %v137
    %v243 = vunpack.c.l.b16 %v138
    %v244 = vunpack.c.h.b16 %v138
    %v245 = vunpack.c.l.b16 %v139
    %v246 = vunpack.c.h.b16 %v139
    %v247 = vunpack.c.l.b16 %v140
    %v248 = vunpack.c.h.b16 %v140
    %v249 = vunpack.c.l.b16 %v141
    %v250 = vunpack.c.h.b16 %v141
    %v251 = vunpack.c.l.b16 %v142
    %v252 = vunpack.c.h.b16 %v142
    %v253 = vunpack.c.l.b16 %v143
    %v254 = vunpack.c.h.b16 %v143
    %v255 = vunpack.c.l.b16 %v144
    %v256 = vunpack.c.h.b16 %v144
    %v257 = vunpack.c.l.b16 %v145
    %v258 = vunpack.c.h.b16 %v145
    %v259 = vunpack.c.l.b16 %v146
    %v260 = vunpack.c.h.b16 %v146
    %v261 = vunpack.c.l.b16 %v147
    %v262 = vunpack.c.h.b16 %v147
    %v263 = vunpack.c.l.b16 %v148
    %v264 = vunpack.c.h.b16 %v148
    %v265 = vunpack.c.l.b16 %v149
    %v266 = vunpack.c.h.b16 %v149
    %v267 = vunpack.c.l.b16 %v150
    %v268 = vunpack.c.h.b16 %v150
    %v269 = vunpack.c.l.b16 %v151
    %v270 = vunpack.c.h.b16 %v151
    %v271 = vunpack.c.l.b16 %v152
    %v272 = vunpack.c.h.b16 %v152
    %v273 = vunpack.c.l.b16 %v153
    %v274 = vunpack.c.h.b16 %v153
    %v275 = vunpack.c.l.b16 %v154
    %v276 = vunpack.c.h.b16 %v154
    %v277 = vunpack.c.l.b16 %v155
    %v278 = vunpack.c.h.b16 %v155
    %v279 = vunpack.c.l.b16 %v156
    %v280 = vunpack.c.h.b16 %v156
    %v281 = vunpack.c.l.b16 %v157
    %v282 = vunpack.c.h.b16 %v157
    %v283 = vunpack.c.l.b16 %v158
    %v284 = vunpack.c.h.b16 %v158
    %v285 = vunpack.c.l.b16 %v159
    %v286 = vunpack.c.h.b16 %v159
    %v287 = vunpack.c.l.b16 %v160
    %v288 = vunpack.c.h.b16 %v160
    %v289 = vunpack.c.l.b16 %v161
    %v290 = vunpack.c.h.b16 %v161
    %v291 = vunpack.c.l.b16 %v162
    %v292 = vunpack.c.h.b16 %v162
    %v293 = vpack.c.b16 %v233, %v229
    %v294 = vpack.c.b16 %v234, %v230
    %v295 = vpack.c.b16 %v235, %v231
    %v296 = vpack.c.b16 %v236, %v232
    %v297 = vpack.c.b16 %v241, %v237
    %v298 = vpack.c.b16 %v242, %v238
    %v299 = vpack.c.b16 %v243, %v239
    %v300 = vpack.c.b16 %v244, %v240
    %v301 = vpack.c.b16 %v249, %v245
    %v302 = vpack.c.b16 %v250, %v246
    %v303 = vpack.c.b16 %v251, %v247
    %v304 = vpack.c.b16 %v252, %v248
    %v305 = vpack.c.b16 %v257, %v253
    %v306 = vpack.c.b16 %v258, %v254
    %v307 = vpack.c.b16 %v259, %v255
    %v308 = vpack.c.b16 %v260, %v256
    %v309 = vpack.c.b16 %v265, %v261
    %v310 = vpack.c.b16 %v266, %v262
    %v311 = vpack.c.b16 %v267, %v263
    %v312 = vpack.c.b16 %v268, %v264
    %v313 = vpack.c.b16 %v273, %v269
    %v314 = vpack.c.b16 %v274, %v270
    %v315 = vpack.c.b16 %v275, %v271
    %v316 = vpack.c.b16 %v276, %v272
    %v317 = vpack.c.b16 %v281, %v277
    %v318 = vpack.c.b16 %v282, %v278
    %v319 = vpack.c.b16 %v283, %v279
    %v320 = vpack.c.b16 %v284, %v280
    %v321 = vpack.c.b16 %v289, %v285
    %v322 = vpack.c.b16 %v290, %v286
    %v323 = vpack.c.b16 %v291, %v287
    %v324 = vpack.c.b16 %v292, %v288
    %357 = vmatprep.subr.bf16.mxu0 %v322
    %358 = vmatpush1.bf16.msra.mxu0 %v321
    %359 = vmatprep.subr.bf16.mxu0 %v318
    %360 = vmatpush1.bf16.msra.mxu0 %v317
    %361 = vmatprep.subr.bf16.mxu0 %v314
    %362 = vmatpush1.bf16.msra.mxu0 %v313
    %363 = vmatprep.subr.bf16.mxu0 %v310
    %364 = vmatpush1.bf16.msra.mxu0 %v309
    %365 = vmatprep.subr.bf16.mxu0 %v306
    %366 = vmatpush1.bf16.msra.mxu0 %v305
    %367 = vmatprep.subr.bf16.mxu0 %v302
    %368 = vmatpush1.bf16.msra.mxu0 %v301
    %369 = vmatprep.subr.bf16.mxu0 %v298
    %370 = vmatpush1.bf16.msra.mxu0 %v297
    %371 = vmatprep.subr.bf16.mxu0 %v294
    %372 = vmatpush1.bf16.msra.mxu0 %v293
    %373 = vmatprep.subr.bf16.mxu0 0
    %374 = vmatpush2.bf16.msra.mxu0 0
    %375 = vmatprep.subr.bf16.mxu0 0
    %376 = vmatpush2.bf16.msra.mxu0 0
    %377 = vmatprep.subr.bf16.mxu0 0
    %378 = vmatpush2.bf16.msra.mxu0 0
    %379 = vmatprep.subr.bf16.mxu0 0
    %380 = vmatpush2.bf16.msra.mxu0 0
    %381 = vmatprep.subr.bf16.mxu0 0
    %382 = vmatpush2.bf16.msra.mxu0 0
    %383 = vmatprep.subr.bf16.mxu0 0
    %384 = vmatpush2.bf16.msra.mxu0 0
    %385 = vmatprep.subr.bf16.mxu0 0
    %386 = vmatpush2.bf16.msra.mxu0 0
    %387 = vmatprep.subr.bf16.mxu0 0
    %388 = vmatpush2.bf16.msra.mxu0 0
    %389 = vmatprep.mubr.bf16.mxu0 0
    %390 = vmatmul.mubr.bf16.gmra.mxu0 %v193
    %v391 = vpop.f32.mrf.mxu0
    %v392 = vadd.f32 %v168, %v391
    %v393 = vpop.f32.mrf.mxu0
    %v394 = vadd.f32 %v172, %v393
    %v395 = vpop.f32.mrf.mxu0
    %v396 = vadd.f32 %v168, %v395
    %v397 = vpop.f32.mrf.mxu0
    %v398 = vadd.f32 %v172, %v397
    %399 = vmatprep.mubr.bf16.mxu0 0
    %400 = vmatmul.mubr.bf16.gmra.mxu0 %v194
    %v401 = vpop.f32.mrf.mxu0
    %v402 = vadd.f32 %v168, %v401
    %v403 = vpop.f32.mrf.mxu0
    %v404 = vadd.f32 %v172, %v403
    %v405 = vpop.f32.mrf.mxu0
    %v406 = vadd.f32 %v168, %v405
    %v407 = vpop.f32.mrf.mxu0
    %v408 = vadd.f32 %v172, %v407
    %409 = vdwg.mxu0
    %410 = vmatprep.subr.bf16.mxu0 %v324
    %411 = vmatpush1.bf16.msra.mxu0 %v323
    %412 = vmatprep.subr.bf16.mxu0 %v320
    %413 = vmatpush1.bf16.msra.mxu0 %v319
    %414 = vmatprep.subr.bf16.mxu0 %v316
    %415 = vmatpush1.bf16.msra.mxu0 %v315
    %416 = vmatprep.subr.bf16.mxu0 %v312
    %417 = vmatpush1.bf16.msra.mxu0 %v311
    %418 = vmatprep.subr.bf16.mxu0 %v308
    %419 = vmatpush1.bf16.msra.mxu0 %v307
    %420 = vmatprep.subr.bf16.mxu0 %v304
    %421 = vmatpush1.bf16.msra.mxu0 %v303
    %422 = vmatprep.subr.bf16.mxu0 %v300
    %423 = vmatpush1.bf16.msra.mxu0 %v299
    %424 = vmatprep.subr.bf16.mxu0 %v296
    %425 = vmatpush1.bf16.msra.mxu0 %v295
    %426 = vmatprep.subr.bf16.mxu0 0
    %427 = vmatpush2.bf16.msra.mxu0 0
    %428 = vmatprep.subr.bf16.mxu0 0
    %429 = vmatpush2.bf16.msra.mxu0 0
    %430 = vmatprep.subr.bf16.mxu0 0
    %431 = vmatpush2.bf16.msra.mxu0 0
    %432 = vmatprep.subr.bf16.mxu0 0
    %433 = vmatpush2.bf16.msra.mxu0 0
    %434 = vmatprep.subr.bf16.mxu0 0
    %435 = vmatpush2.bf16.msra.mxu0 0
    %436 = vmatprep.subr.bf16.mxu0 0
    %437 = vmatpush2.bf16.msra.mxu0 0
    %438 = vmatprep.subr.bf16.mxu0 0
    %439 = vmatpush2.bf16.msra.mxu0 0
    %440 = vmatprep.subr.bf16.mxu0 0
    %441 = vmatpush2.bf16.msra.mxu0 0
    %442 = vmatprep.mubr.bf16.mxu0 0
    %443 = vmatmul.mubr.bf16.gmra.mxu0 %v193
    %v444 = vpop.f32.mrf.mxu0
    %v445 = vadd.f32 %v176, %v444
    %v446 = vpop.f32.mrf.mxu0
    %v447 = vadd.f32 %v180, %v446
    %v448 = vpop.f32.mrf.mxu0
    %v449 = vadd.f32 %v176, %v448
    %v450 = vpop.f32.mrf.mxu0
    %v451 = vadd.f32 %v180, %v450
    %452 = vmatprep.mubr.bf16.mxu0 0
    %453 = vmatmul.mubr.bf16.gmra.mxu0 %v194
    %v454 = vpop.f32.mrf.mxu0
    %v455 = vadd.f32 %v176, %v454
    %v456 = vpop.f32.mrf.mxu0
    %v457 = vadd.f32 %v180, %v456
    %v458 = vpop.f32.mrf.mxu0
    %v459 = vadd.f32 %v176, %v458
    %v460 = vpop.f32.mrf.mxu0
    %v461 = vadd.f32 %v180, %v460
    %462 = vdwg.mxu0
    %v463 = vmul.f32 %v392, 0.5
    %v464 = vmul.f32 %v394, 0.5
    %v465 = vmul.f32 %v445, 0.5
    %v466 = vmul.f32 %v447, 0.5
    %v467 = vmul.f32 %v396, 0.5
    %v468 = vmul.f32 %v398, 0.5
    %v469 = vmul.f32 %v449, 0.5
    %v470 = vmul.f32 %v451, 0.5
    %v471 = vmul.f32 %v402, 0.5
    %v472 = vmul.f32 %v404, 0.5
    %v473 = vmul.f32 %v455, 0.5
    %v474 = vmul.f32 %v457, 0.5
    %v475 = vmul.f32 %v406, 0.5
    %v476 = vmul.f32 %v408, 0.5
    %v477 = vmul.f32 %v459, 0.5
    %v478 = vmul.f32 %v461, 0.5
    %v479 = vmul.f32 %v392, 0.70710677
    %v480 = vmul.f32 %v394, 0.70710677
    %v481 = vmul.f32 %v445, 0.70710677
    %v482 = vmul.f32 %v447, 0.70710677
    %v483 = vmul.f32 %v396, 0.70710677
    %v484 = vmul.f32 %v398, 0.70710677
    %v485 = vmul.f32 %v449, 0.70710677
    %v486 = vmul.f32 %v451, 0.70710677
    %v487 = vmul.f32 %v402, 0.70710677
    %v488 = vmul.f32 %v404, 0.70710677
    %v489 = vmul.f32 %v455, 0.70710677
    %v490 = vmul.f32 %v457, 0.70710677
    %v491 = vmul.f32 %v406, 0.70710677
    %v492 = vmul.f32 %v408, 0.70710677
    %v493 = vmul.f32 %v459, 0.70710677
    %v494 = vmul.f32 %v461, 0.70710677
    %v495 = verf.f32.pop %v479
    %v496 = verf.f32.pop %v480
    %v497 = verf.f32.pop %v481
    %v498 = verf.f32.pop %v482
    %v499 = verf.f32.pop %v483
    %v500 = verf.f32.pop %v484
    %v501 = verf.f32.pop %v485
    %v502 = verf.f32.pop %v486
    %v503 = verf.f32.pop %v487
    %v504 = verf.f32.pop %v488
    %v505 = verf.f32.pop %v489
    %v506 = verf.f32.pop %v490
    %v507 = verf.f32.pop %v491
    %v508 = verf.f32.pop %v492
    %v509 = verf.f32.pop %v493
    %v510 = verf.f32.pop %v494
    %v511 = vadd.f32 %v495, 1.0
    %v512 = vadd.f32 %v496, 1.0
    %v513 = vadd.f32 %v497, 1.0
    %v514 = vadd.f32 %v498, 1.0
    %v515 = vadd.f32 %v499, 1.0
    %v516 = vadd.f32 %v500, 1.0
    %v517 = vadd.f32 %v501, 1.0
    %v518 = vadd.f32 %v502, 1.0
    %v519 = vadd.f32 %v503, 1.0
    %v520 = vadd.f32 %v504, 1.0
    %v521 = vadd.f32 %v505, 1.0
    %v522 = vadd.f32 %v506, 1.0
    %v523 = vadd.f32 %v507, 1.0
    %v524 = vadd.f32 %v508, 1.0
    %v525 = vadd.f32 %v509, 1.0
    %v526 = vadd.f32 %v510, 1.0
    %v527 = vmul.f32 %v463, %v511
    %v528 = vmul.f32 %v464, %v512
    %v529 = vmul.f32 %v465, %v513
    %v530 = vmul.f32 %v466, %v514
    %v531 = vmul.f32 %v467, %v515
    %v532 = vmul.f32 %v468, %v516
    %v533 = vmul.f32 %v469, %v517
    %v534 = vmul.f32 %v470, %v518
    %v535 = vmul.f32 %v471, %v519
    %v536 = vmul.f32 %v472, %v520
    %v537 = vmul.f32 %v473, %v521
    %v538 = vmul.f32 %v474, %v522
    %v539 = vmul.f32 %v475, %v523
    %v540 = vmul.f32 %v476, %v524
    %v541 = vmul.f32 %v477, %v525
    %v542 = vmul.f32 %v478, %v526
    %v543 = vld [vmem:[#allocation3] sm:$0xff]
    %v544 = vld [vmem:[#allocation3 + $0x8] sm:$0xff]
    %v545 = vld [vmem:[#allocation3 + $0x10] sm:$0xff]
    %v546 = vld [vmem:[#allocation3 + $0x18] sm:$0xff]
    %v547 = vpack.c.bf16 %v531, %v527
    %v548 = vpack.c.bf16 %v532, %v528
    %v549 = vpack.c.bf16 %v533, %v529
    %v550 = vpack.c.bf16 %v534, %v530
    %v551 = vpack.c.bf16 %v539, %v535
    %v552 = vpack.c.bf16 %v540, %v536
    %v553 = vpack.c.bf16 %v541, %v537
    %v554 = vpack.c.bf16 %v542, %v538
    %v555 = vld [vmem:[%s5] sm:$0xf]
    %v556 = vld [vmem:[%s5 + $0x4] sm:$0xf]
    %v557 = vld [vmem:[%s5 + $0x8] sm:$0xf]
    %v558 = vld [vmem:[%s5 + $0xc] sm:$0xf]
    %v559 = vld [vmem:[%s5 + $0x10] sm:$0xf]
    %v560 = vld [vmem:[%s5 + $0x14] sm:$0xf]
    %v561 = vld [vmem:[%s5 + $0x18] sm:$0xf]
    %v562 = vld [vmem:[%s5 + $0x1c] sm:$0xf]
    %v563 = vld [vmem:[%s5 + $0x20] sm:$0xf]
    %v564 = vld [vmem:[%s5 + $0x24] sm:$0xf]
    %v565 = vld [vmem:[%s5 + $0x28] sm:$0xf]
    %v566 = vld [vmem:[%s5 + $0x2c] sm:$0xf]
    %v567 = vld [vmem:[%s5 + $0x30] sm:$0xf]
    %v568 = vld [vmem:[%s5 + $0x34] sm:$0xf]
    %v569 = vld [vmem:[%s5 + $0x38] sm:$0xf]
    %v570 = vld [vmem:[%s5 + $0x3c] sm:$0xf]
    %v571 = vld [vmem:[%s5 + $0x40] sm:$0xf]
    %v572 = vld [vmem:[%s5 + $0x44] sm:$0xf]
    %v573 = vld [vmem:[%s5 + $0x48] sm:$0xf]
    %v574 = vld [vmem:[%s5 + $0x4c] sm:$0xf]
    %v575 = vld [vmem:[%s5 + $0x50] sm:$0xf]
    %v576 = vld [vmem:[%s5 + $0x54] sm:$0xf]
    %v577 = vld [vmem:[%s5 + $0x58] sm:$0xf]
    %v578 = vld [vmem:[%s5 + $0x5c] sm:$0xf]
    %v579 = vld [vmem:[%s5 + $0x60] sm:$0xf]
    %v580 = vld [vmem:[%s5 + $0x64] sm:$0xf]
    %v581 = vld [vmem:[%s5 + $0x68] sm:$0xf]
    %v582 = vld [vmem:[%s5 + $0x6c] sm:$0xf]
    %v583 = vld [vmem:[%s5 + $0x70] sm:$0xf]
    %v584 = vld [vmem:[%s5 + $0x74] sm:$0xf]
    %v585 = vld [vmem:[%s5 + $0x78] sm:$0xf]
    %v586 = vld [vmem:[%s5 + $0x7c] sm:$0xf]
    %v587 = vld [vmem:[%s5 + $0x80] sm:$0xf]
    %v588 = vld [vmem:[%s5 + $0x84] sm:$0xf]
    %v589 = vld [vmem:[%s5 + $0x88] sm:$0xf]
    %v590 = vld [vmem:[%s5 + $0x8c] sm:$0xf]
    %v591 = vld [vmem:[%s5 + $0x90] sm:$0xf]
    %v592 = vld [vmem:[%s5 + $0x94] sm:$0xf]
    %v593 = vld [vmem:[%s5 + $0x98] sm:$0xf]
    %v594 = vld [vmem:[%s5 + $0x9c] sm:$0xf]
    %v595 = vld [vmem:[%s5 + $0xa0] sm:$0xf]
    %v596 = vld [vmem:[%s5 + $0xa4] sm:$0xf]
    %v597 = vld [vmem:[%s5 + $0xa8] sm:$0xf]
    %v598 = vld [vmem:[%s5 + $0xac] sm:$0xf]
    %v599 = vld [vmem:[%s5 + $0xb0] sm:$0xf]
    %v600 = vld [vmem:[%s5 + $0xb4] sm:$0xf]
    %v601 = vld [vmem:[%s5 + $0xb8] sm:$0xf]
    %v602 = vld [vmem:[%s5 + $0xbc] sm:$0xf]
    %v603 = vld [vmem:[%s5 + $0xc0] sm:$0xf]
    %v604 = vld [vmem:[%s5 + $0xc4] sm:$0xf]
    %v605 = vld [vmem:[%s5 + $0xc8] sm:$0xf]
    %v606 = vld [vmem:[%s5 + $0xcc] sm:$0xf]
    %v607 = vld [vmem:[%s5 + $0xd0] sm:$0xf]
    %v608 = vld [vmem:[%s5 + $0xd4] sm:$0xf]
    %v609 = vld [vmem:[%s5 + $0xd8] sm:$0xf]
    %v610 = vld [vmem:[%s5 + $0xdc] sm:$0xf]
    %v611 = vld [vmem:[%s5 + $0xe0] sm:$0xf]
    %v612 = vld [vmem:[%s5 + $0xe4] sm:$0xf]
    %v613 = vld [vmem:[%s5 + $0xe8] sm:$0xf]
    %v614 = vld [vmem:[%s5 + $0xec] sm:$0xf]
    %v615 = vld [vmem:[%s5 + $0xf0] sm:$0xf]
    %v616 = vld [vmem:[%s5 + $0xf4] sm:$0xf]
    %v617 = vld [vmem:[%s5 + $0xf8] sm:$0xf]
    %v618 = vld [vmem:[%s5 + $0xfc] sm:$0xf]
    %v683 = vunpack.c.l.b16 %v555
    %v684 = vunpack.c.l.b16 %v556
    %v685 = vunpack.c.l.b16 %v557
    %v686 = vunpack.c.l.b16 %v558
    %v687 = vunpack.c.l.b16 %v559
    %v688 = vunpack.c.l.b16 %v560
    %v689 = vunpack.c.l.b16 %v561
    %v690 = vunpack.c.l.b16 %v562
    %v691 = vunpack.c.l.b16 %v563
    %v692 = vunpack.c.l.b16 %v564
    %v693 = vunpack.c.l.b16 %v565
    %v694 = vunpack.c.l.b16 %v566
    %v695 = vunpack.c.l.b16 %v567
    %v696 = vunpack.c.l.b16 %v568
    %v697 = vunpack.c.l.b16 %v569
    %v698 = vunpack.c.l.b16 %v570
    %v699 = vunpack.c.l.b16 %v571
    %v700 = vunpack.c.l.b16 %v572
    %v701 = vunpack.c.l.b16 %v573
    %v702 = vunpack.c.l.b16 %v574
    %v703 = vunpack.c.l.b16 %v575
    %v704 = vunpack.c.l.b16 %v576
    %v705 = vunpack.c.l.b16 %v577
    %v706 = vunpack.c.l.b16 %v578
    %v707 = vunpack.c.l.b16 %v579
    %v708 = vunpack.c.l.b16 %v580
    %v709 = vunpack.c.l.b16 %v581
    %v710 = vunpack.c.l.b16 %v582
    %v711 = vunpack.c.l.b16 %v583
    %v712 = vunpack.c.l.b16 %v584
    %v713 = vunpack.c.l.b16 %v585
    %v714 = vunpack.c.l.b16 %v586
    %v715 = vunpack.c.l.b16 %v587
    %v716 = vunpack.c.l.b16 %v588
    %v717 = vunpack.c.l.b16 %v589
    %v718 = vunpack.c.l.b16 %v590
    %v719 = vunpack.c.l.b16 %v591
    %v720 = vunpack.c.l.b16 %v592
    %v721 = vunpack.c.l.b16 %v593
    %v722 = vunpack.c.l.b16 %v594
    %v723 = vunpack.c.l.b16 %v595
    %v724 = vunpack.c.l.b16 %v596
    %v725 = vunpack.c.l.b16 %v597
    %v726 = vunpack.c.l.b16 %v598
    %v727 = vunpack.c.l.b16 %v599
    %v728 = vunpack.c.l.b16 %v600
    %v729 = vunpack.c.l.b16 %v601
    %v730 = vunpack.c.l.b16 %v602
    %v731 = vunpack.c.l.b16 %v603
    %v732 = vunpack.c.l.b16 %v604
    %v733 = vunpack.c.l.b16 %v605
    %v734 = vunpack.c.l.b16 %v606
    %v735 = vunpack.c.l.b16 %v607
    %v736 = vunpack.c.l.b16 %v608
    %v737 = vunpack.c.l.b16 %v609
    %v738 = vunpack.c.l.b16 %v610
    %v739 = vunpack.c.l.b16 %v611
    %v740 = vunpack.c.l.b16 %v612
    %v741 = vunpack.c.l.b16 %v613
    %v742 = vunpack.c.l.b16 %v614
    %v743 = vunpack.c.l.b16 %v615
    %v744 = vunpack.c.l.b16 %v616
    %v745 = vunpack.c.l.b16 %v617
    %v746 = vunpack.c.l.b16 %v618
    %v747 = vpack.c.b16 %v684, %v683
    %v748 = vpack.c.b16 %v686, %v685
    %v749 = vpack.c.b16 %v688, %v687
    %v750 = vpack.c.b16 %v690, %v689
    %v751 = vpack.c.b16 %v692, %v691
    %v752 = vpack.c.b16 %v694, %v693
    %v753 = vpack.c.b16 %v696, %v695
    %v754 = vpack.c.b16 %v698, %v697
    %v755 = vpack.c.b16 %v700, %v699
    %v756 = vpack.c.b16 %v702, %v701
    %v757 = vpack.c.b16 %v704, %v703
    %v758 = vpack.c.b16 %v706, %v705
    %v759 = vpack.c.b16 %v708, %v707
    %v760 = vpack.c.b16 %v710, %v709
    %v761 = vpack.c.b16 %v712, %v711
    %v762 = vpack.c.b16 %v714, %v713
    %v763 = vpack.c.b16 %v716, %v715
    %v764 = vpack.c.b16 %v718, %v717
    %v765 = vpack.c.b16 %v720, %v719
    %v766 = vpack.c.b16 %v722, %v721
    %v767 = vpack.c.b16 %v724, %v723
    %v768 = vpack.c.b16 %v726, %v725
    %v769 = vpack.c.b16 %v728, %v727
    %v770 = vpack.c.b16 %v730, %v729
    %v771 = vpack.c.b16 %v732, %v731
    %v772 = vpack.c.b16 %v734, %v733
    %v773 = vpack.c.b16 %v736, %v735
    %v774 = vpack.c.b16 %v738, %v737
    %v775 = vpack.c.b16 %v740, %v739
    %v776 = vpack.c.b16 %v742, %v741
    %v777 = vpack.c.b16 %v744, %v743
    %v778 = vpack.c.b16 %v746, %v745
    %811 = vmatprep.subr.bf16.mxu0 0
    %812 = vmatpush1.bf16.msra.mxu0 %v754
    %813 = vmatprep.subr.bf16.mxu0 0
    %814 = vmatpush1.bf16.msra.mxu0 %v753
    %815 = vmatprep.subr.bf16.mxu0 0
    %816 = vmatpush1.bf16.msra.mxu0 %v752
    %817 = vmatprep.subr.bf16.mxu0 0
    %818 = vmatpush1.bf16.msra.mxu0 %v751
    %819 = vmatprep.subr.bf16.mxu0 0
    %820 = vmatpush1.bf16.msra.mxu0 %v750
    %821 = vmatprep.subr.bf16.mxu0 0
    %822 = vmatpush1.bf16.msra.mxu0 %v749
    %823 = vmatprep.subr.bf16.mxu0 0
    %824 = vmatpush1.bf16.msra.mxu0 %v748
    %825 = vmatprep.subr.bf16.mxu0 0
    %826 = vmatpush1.bf16.msra.mxu0 %v747
    %827 = vmatprep.subr.bf16.mxu0 0
    %828 = vmatpush2.bf16.msra.mxu0 %v762
    %829 = vmatprep.subr.bf16.mxu0 0
    %830 = vmatpush2.bf16.msra.mxu0 %v761
    %831 = vmatprep.subr.bf16.mxu0 0
    %832 = vmatpush2.bf16.msra.mxu0 %v760
    %833 = vmatprep.subr.bf16.mxu0 0
    %834 = vmatpush2.bf16.msra.mxu0 %v759
    %835 = vmatprep.subr.bf16.mxu0 0
    %836 = vmatpush2.bf16.msra.mxu0 %v758
    %837 = vmatprep.subr.bf16.mxu0 0
    %838 = vmatpush2.bf16.msra.mxu0 %v757
    %839 = vmatprep.subr.bf16.mxu0 0
    %840 = vmatpush2.bf16.msra.mxu0 %v756
    %841 = vmatprep.subr.bf16.mxu0 0
    %842 = vmatpush2.bf16.msra.mxu0 %v755
    %843 = vmatprep.mubr.bf16.mxu0 %v548
    %844 = vmatmul.mubr.bf16.gmra.mxu0 %v547
    %v845 = vpop.f32.mrf.mxu0
    %v846 = vadd.f32 0.0, %v845
    %v847 = vpop.f32.mrf.mxu0
    %v848 = vpop.f32.mrf.mxu0
    %v849 = vadd.f32 0.0, %v848
    %v850 = vpop.f32.mrf.mxu0
    %851 = vmatprep.mubr.bf16.mxu0 %v552
    %852 = vmatmul.mubr.bf16.gmra.mxu0 %v551
    %v853 = vpop.f32.mrf.mxu0
    %v854 = vadd.f32 0.0, %v853
    %v855 = vpop.f32.mrf.mxu0
    %v856 = vpop.f32.mrf.mxu0
    %v857 = vadd.f32 0.0, %v856
    %v858 = vpop.f32.mrf.mxu0
    %859 = vdwg.mxu0
    %860 = vmatprep.subr.bf16.mxu0 0
    %861 = vmatpush1.bf16.msra.mxu0 %v770
    %862 = vmatprep.subr.bf16.mxu0 0
    %863 = vmatpush1.bf16.msra.mxu0 %v769
    %864 = vmatprep.subr.bf16.mxu0 0
    %865 = vmatpush1.bf16.msra.mxu0 %v768
    %866 = vmatprep.subr.bf16.mxu0 0
    %867 = vmatpush1.bf16.msra.mxu0 %v767
    %868 = vmatprep.subr.bf16.mxu0 0
    %869 = vmatpush1.bf16.msra.mxu0 %v766
    %870 = vmatprep.subr.bf16.mxu0 0
    %871 = vmatpush1.bf16.msra.mxu0 %v765
    %872 = vmatprep.subr.bf16.mxu0 0
    %873 = vmatpush1.bf16.msra.mxu0 %v764
    %874 = vmatprep.subr.bf16.mxu0 0
    %875 = vmatpush1.bf16.msra.mxu0 %v763
    %876 = vmatprep.subr.bf16.mxu0 0
    %877 = vmatpush2.bf16.msra.mxu0 %v778
    %878 = vmatprep.subr.bf16.mxu0 0
    %879 = vmatpush2.bf16.msra.mxu0 %v777
    %880 = vmatprep.subr.bf16.mxu0 0
    %881 = vmatpush2.bf16.msra.mxu0 %v776
    %882 = vmatprep.subr.bf16.mxu0 0
    %883 = vmatpush2.bf16.msra.mxu0 %v775
    %884 = vmatprep.subr.bf16.mxu0 0
    %885 = vmatpush2.bf16.msra.mxu0 %v774
    %886 = vmatprep.subr.bf16.mxu0 0
    %887 = vmatpush2.bf16.msra.mxu0 %v773
    %888 = vmatprep.subr.bf16.mxu0 0
    %889 = vmatpush2.bf16.msra.mxu0 %v772
    %890 = vmatprep.subr.bf16.mxu0 0
    %891 = vmatpush2.bf16.msra.mxu0 %v771
    %892 = vmatprep.mubr.bf16.mxu0 %v550
    %893 = vmatmul.mubr.bf16.gmra.mxu0 %v549
    %v894 = vpop.f32.mrf.mxu0
    %v895 = vadd.f32 %v846, %v894
    %v896 = vpop.f32.mrf.mxu0
    %v897 = vpop.f32.mrf.mxu0
    %v898 = vadd.f32 %v849, %v897
    %v899 = vpop.f32.mrf.mxu0
    %900 = vmatprep.mubr.bf16.mxu0 %v554
    %901 = vmatmul.mubr.bf16.gmra.mxu0 %v553
    %v902 = vpop.f32.mrf.mxu0
    %v903 = vadd.f32 %v854, %v902
    %v904 = vpop.f32.mrf.mxu0
    %v905 = vpop.f32.mrf.mxu0
    %v906 = vadd.f32 %v857, %v905
    %v907 = vpop.f32.mrf.mxu0
    %908 = vdwg.mxu0
    %v909 = vadd.f32 %v543, %v895
    %v910 = vadd.f32 %v544, %v898
    %v911 = vadd.f32 %v545, %v903
    %v912 = vadd.f32 %v546, %v906
    %913 = vst [vmem:[#allocation3] sm:$0xff] %v909
    %914 = vst [vmem:[#allocation3 + $0x8] sm:$0xff] %v910
    %915 = vst [vmem:[#allocation3 + $0x10] sm:$0xff] %v911
    %916 = vst [vmem:[#allocation3 + $0x18] sm:$0xff] %v912
    // Predicated region
    $region34: #{cross_attention_block.13} parent=1 // pred_check
      %p917 = pneg %p28
    $region35: #{cross_attention_block.13} parent=1 // pred_check_branch
      %919 = sbr.rel (%p917) target = $region37
    $region36: #{cross_attention_block.13} parent=1 // pred_region
      %v920 = vld [vmem:[%s0] sm:$0xff]
      %v921 = vld [vmem:[%s0 + $0x8] sm:$0xff]
      %v922 = vld [vmem:[%s0 + $0x10] sm:$0xff]
      %v923 = vld [vmem:[%s0 + $0x18] sm:$0xff]
      %v924 = vld [vmem:[#allocation3] sm:$0xff]
      %v925 = vld [vmem:[#allocation3 + $0x8] sm:$0xff]
      %v926 = vld [vmem:[#allocation3 + $0x10] sm:$0xff]
      %v927 = vld [vmem:[#allocation3 + $0x18] sm:$0xff]
      %v928 = vadd.f32 %v920, %v924
      %v929 = vadd.f32 %v921, %v925
      %v930 = vadd.f32 %v922, %v926
      %v931 = vadd.f32 %v923, %v927
      %v932 = vld [vmem:[%s6] sm:$0x1]
      %v934 = vlaneseq
      %v935 = vshrl.u32 %v934, 7
      %v936 = vsub.s32 0, %v935
      %v937 = vrot.slane %v932, %v936
      %v939 = vadd.f32 %v928, %v937
      %v940 = vadd.f32 %v929, %v937
      %v941 = vadd.f32 %v930, %v937
      %v942 = vadd.f32 %v931, %v937
      %943 = vst [vmem:[#allocation4] sm:$0xff] %v939
      %944 = vst [vmem:[#allocation4 + $0x8] sm:$0xff] %v940
      %945 = vst [vmem:[#allocation4 + $0x10] sm:$0xff] %v941
      %946 = vst [vmem:[#allocation4 + $0x18] sm:$0xff] %v942
    $region37: #{cross_attention_block.13} parent=1 // pred_fallthru
      _
    // Predicated region
    $region38: #{cross_attention_block.13} parent=1 // pred_check
      _
    $region39: #{cross_attention_block.13} parent=1 // pred_check_branch
      %948 = sbr.rel (0) target = $region41
    $region40: #{cross_attention_block.13} parent=1 // pred_region
      %s950 = ssub.s32 512, 512
      %951 = vsyncadd [#allocation5], %s950
      %s952 = sshll.u32 [#allocation4], 4
      %s953 = int_to_ptr.vmem [resolvable:$true] %s952
      %958 = dma.vmem_to_hbm [thread:$0]  %s953, 512, %s7, [#allocation5], 128, 128, 8
    $region41: #{cross_attention_block.13} parent=1 // pred_fallthru
      _
    // Predicated region
    $region42: #{cross_attention_block.13} parent=1 // pred_check
      _
    $region43: #{cross_attention_block.13} parent=1 // pred_check_branch
      %960 = sbr.rel (0) target = $region45
    $region44: #{cross_attention_block.13} parent=1 // pred_region
      %961 = dma.done [#allocation5], 512
    $region45: #{cross_attention_block.13} parent=1 // pred_fallthru
      _
    %962 = vsyncpa [#allocation5], 1

</llo_original>
